<compile_context>
chip_gen: v7x
topology: tpu7x:2x2x1
jax: 0.10.0
libtpu: 0.0.40
codegen_flags: <defaults>
</compile_context>

<pallas_src>
import functools

import jax
import jax.numpy as jnp
import numpy as np
from jax import lax
from jax.experimental import pallas as pl
from jax.experimental.pallas import tpu as pltpu

_NEG = 0.2      # LeakyReLU negative slope
_EPS = 1e-5     # BatchNorm eps
_KMAX = 3 * 128 # max packed K (layer 4: 3 taps x 128 in-channels)


# ------------------------------ Fused kernel -------------------------------

def _disc_fused_kernel(x_ref, w_ref, v_ref, o_ref, *, n, l0, c_in):
    f32 = jnp.float32

    def conv(x, l_in, cin, cout, stride, layer):
        """k=3 / pad=1 conv = per-batch tap gather + one bf16 MXU matmul."""
        l_out = l_in // stride
        # Tiny per-batch 0/1 selection tensors (n, l_out, l_in): linear in n,
        # O(l_out*l_in) per batch.  Out-of-range taps select nothing, which
        # reproduces the zero-padding semantics exactly.
        o_idx = lax.broadcasted_iota(jnp.int32, (n, l_out, l_in), 1)
        i_idx = lax.broadcasted_iota(jnp.int32, (n, l_out, l_in), 2)

        def tap(off):
            sel = jnp.where(i_idx == stride * o_idx + off, 1.0, 0.0)
            # Gather stays f32 (exact: 0/1 times x); batched dot, no transpose.
            return jnp.einsum("boi,bic->boc", sel, x,
                              preferred_element_type=f32)

        # Lane-packed tap slab (n, l_out, 3*cin) -- exact K, no padding waste.
        slab = jnp.concatenate([tap(-1), tap(0), tap(1)], axis=-1)
        w = w_ref[layer][:3 * cin, :cout]                  # (3*cin, cout) bf16
        w_b = jnp.broadcast_to(w, (n, 3 * cin, cout))      # batched MXU operand
        y = jnp.einsum("bok,bkc->boc", slab.astype(w.dtype), w_b,
                       preferred_element_type=f32)         # f32 accumulation
        return y, l_out

    def batchnorm(y, gamma, beta):
        # Training-mode (biased) batch stats over (N, L) per channel.
        mean = jnp.mean(y, axis=(0, 1), keepdims=True)
        var = jnp.mean(jnp.square(y - mean), axis=(0, 1), keepdims=True)
        return (y - mean) * lax.rsqrt(var + _EPS) * gamma + beta

    def lrelu(y):
        return jnp.where(y >= 0, y, _NEG * y)

    x = x_ref[...]                                         # (n, l0, c_in) f32

    y, l1 = conv(x, l0, c_in, 32, stride=2, layer=0)
    y = lrelu(y + v_ref[0][:32])

    y, l2 = conv(y, l1, 32, 64, stride=2, layer=1)
    y = lrelu(batchnorm(y + v_ref[1][:64], v_ref[2][:64], v_ref[3][:64]))

    y, l3 = conv(y, l2, 64, 128, stride=2, layer=2)
    y = lrelu(batchnorm(y + v_ref[4][:128], v_ref[5][:128], v_ref[6][:128]))

    # Layer 4: real Cout = 1 lives in lane 0; lanes 1..127 of W4/b4 are zero,
    # so the activation stays lane-dense with zeros in the padded lanes.
    y, l4 = conv(y, l3, 128, 128, stride=1, layer=3)
    y = y + v_ref[7]

    # AdaptiveAvgPool1d(1): per-batch mean over the l4 positions (sublane
    # reduction).  Lane-dense (n, 128) store; scalar result sits in lane 0.
    o_ref[...] = jnp.mean(y, axis=1)


# ------------------------------ Wrappers ------------------------------------

def pack_params(params):
    """One-time packing (coalesces 13 tiny kernel inputs into 2 + x):
       * 4 conv weights with exact K = 3*cin, zero-padded and stacked into one
         (4, 384, 128) bf16 slab (layer-4's single out-channel in column 0),
       * 8 per-channel vectors (conv biases + BN gamma/beta) stacked into one
         (8, 128) f32 slab."""
    w_stack = jnp.zeros((4, _KMAX, 128), jnp.float32)
    for li, p in enumerate(params):
        k, cin, cout = p["w"].shape
        w_stack = w_stack.at[li, :k * cin, :cout].set(
            p["w"].reshape(k * cin, cout))

    v_stack = jnp.zeros((8, 128), jnp.float32)
    rows = [params[0]["b"],
            params[1]["b"], params[1]["gamma"], params[1]["beta"],
            params[2]["b"], params[2]["gamma"], params[2]["beta"],
            params[3]["b"]]
    for r, vec in enumerate(rows):
        vec = vec.reshape(-1)
        v_stack = v_stack.at[r, :vec.shape[0]].set(vec)

    return {"w": w_stack.astype(jnp.bfloat16), "v": v_stack}


def discriminator_forward(x_ncl, packed):
    """x_ncl: (N, C_in, L) float32 (PyTorch layout). Returns (N,) like view(-1)."""
    n, c_in, l = x_ncl.shape
    assert c_in <= 128
    # Three stride-2 layers with l_out = l_in // 2 require L % 8 == 0.
    assert l >= 8 and l % 8 == 0

    # TODO(synk): fold this NCL->NLC relayout into the first-layer gather
    # einsum if input bandwidth ever matters; it is one tiny XLA op, linear in
    # the input size, and every inter-layer activation stays in VMEM.
    x_nlc = jnp.transpose(x_ncl, (0, 2, 1))                # (N, L, C_in)

    # TODO(synk): for large N*L, add a row-block grid over N
    # (dimension_semantics=("parallel",)) with a two-pass BatchNorm so v7x's
    # second TensorCore is used and its 64 MiB VMEM ceiling is respected; at
    # the representative tiny sizes a single block is optimal.
    kernel = functools.partial(_disc_fused_kernel, n=n, l0=l, c_in=c_in)
    out = pl.pallas_call(
        kernel,
        out_shape=jax.ShapeDtypeStruct((n, 128), jnp.float32),
        in_specs=[pl.BlockSpec(memory_space=pltpu.MemorySpace.VMEM)] * 3,
        out_specs=pl.BlockSpec(memory_space=pltpu.MemorySpace.VMEM),
        compiler_params=pltpu.CompilerParams(
            # Explicit, modest scoped-VMEM budget (safe on v5e/v6e/v7x);
            # actual use at this size is a few hundred KiB, linear in N*L.
            vmem_limit_bytes=32 * 1024 * 1024),
    )(x_nlc, packed["w"], packed["v"])
    return out[:, 0]


# --------------------------- Parameter init ---------------------------------

def init_params(key, in_channels=12):
    dims = [(in_channels, 32), (32, 64), (64, 128), (128, 1)]
    params = []
    for cin, cout in dims:
        key, kw, kb, kg, kbe = jax.random.split(key, 5)
        params.append(dict(
            w=jax.random.normal(kw, (3, cin, cout), jnp.float32)
              * (1.0 / np.sqrt(3 * cin)),                  # (K, Cin, Cout)
            b=jax.random.normal(kb, (1, cout), jnp.float32) * 0.05,
            gamma=1.0 + 0.1 * jax.random.normal(kg, (1, cout), jnp.float32),
            beta=0.1 * jax.random.normal(kbe, (1, cout), jnp.float32),
        ))
    return params


# ------------------------- Pure-JAX reference -------------------------------

def reference_forward(x_ncl, params):
    def conv1d(x, w_kio, b, stride):
        w_oik = jnp.transpose(w_kio, (2, 1, 0))            # (Cout, Cin, K)
        y = lax.conv_general_dilated(
            x, w_oik, window_strides=(stride,), padding=[(1, 1)],
            dimension_numbers=("NCH", "OIH", "NCH"))
        return y + b.reshape(1, -1, 1)

    def bn(y, gamma, beta, eps=_EPS):
        mean = jnp.mean(y, axis=(0, 2), keepdims=True)
        var = jnp.mean((y - mean) ** 2, axis=(0, 2), keepdims=True)
        return ((y - mean) / jnp.sqrt(var + eps)
                * gamma.reshape(1, -1, 1) + beta.reshape(1, -1, 1))

    def lrelu(y):
        return jnp.where(y >= 0, y, _NEG * y)

    y = lrelu(conv1d(x_ncl, params[0]["w"], params[0]["b"], 2))
    y = lrelu(bn(conv1d(y, params[1]["w"], params[1]["b"], 2),
                 params[1]["gamma"], params[1]["beta"]))
    y = lrelu(bn(conv1d(y, params[2]["w"], params[2]["b"], 2),
                 params[2]["gamma"], params[2]["beta"]))
    y = conv1d(y, params[3]["w"], params[3]["b"], 1)
    y = jnp.mean(y, axis=2, keepdims=True)                 # AdaptiveAvgPool1d(1)
    return y.reshape(-1)


# --------------------------------- Main --------------------------------------

if __name__ == "__main__":
    key = jax.random.PRNGKey(0)
    kx, kp = jax.random.split(key)

    N, C_IN, L = 2, 12, 16
    x = jax.random.normal(kx, (N, C_IN, L), jnp.float32)
    params = init_params(kp, C_IN)
    packed = pack_params(params)          # one-time weight/vector packing (bf16)

    out = jax.block_until_ready(discriminator_forward(x, packed))
    ref = jax.block_until_ready(reference_forward(x, params))

    assert out.shape == (N,), out.shape
    # Tolerance reflects bf16 MXU operands in the four conv matmuls (f32
    # accumulation); the f32 reference differs by ~bf16 rounding per layer.
    np.testing.assert_allclose(np.asarray(out), np.asarray(ref),
                               rtol=3e-2, atol=3e-2)
    print("KERNEL_OK")
</pallas_src>

<mosaic_0001>
module attributes {stable_mosaic.version = 11 : i64} {
  func.func @_disc_fused_kernel(%arg0: memref<2x16x12xf32, #tpu.memory_space<vmem>>, %arg1: memref<4x384x128xbf16, #tpu.memory_space<vmem>>, %arg2: memref<8x128xf32, #tpu.memory_space<vmem>>, %arg3: memref<2x128xf32, #tpu.memory_space<vmem>>) attributes {dimension_semantics = [], scalar_prefetch = 0 : i64, scratch_operands = 0 : i64, tpu.core_type = #tpu.core_type<tc>} {
    %c0 = arith.constant 0 : index
    %c0_0 = arith.constant 0 : index
    %c0_1 = arith.constant 0 : index
    %0 = vector.load %arg0[%c0, %c0_0, %c0_1] : memref<2x16x12xf32, #tpu.memory_space<vmem>>, vector<2x16x12xf32>
    %1 = tpu.iota {dimensions = array<i32: 1>} : vector<2x8x16xi32>
    %2 = tpu.iota {dimensions = array<i32: 2>} : vector<2x8x16xi32>
    %c2_i32 = arith.constant 2 : i32
    %3 = vector.broadcast %c2_i32 : i32 to vector<2x8x16xi32>
    %4 = arith.muli %3, %1 : vector<2x8x16xi32>
    %c-1_i32 = arith.constant -1 : i32
    %5 = vector.broadcast %c-1_i32 : i32 to vector<2x8x16xi32>
    %6 = arith.addi %4, %5 : vector<2x8x16xi32>
    %7 = arith.cmpi eq, %2, %6 : vector<2x8x16xi32>
    %cst = arith.constant 1.000000e+00 : f32
    %cst_2 = arith.constant 0.000000e+00 : f32
    %8 = vector.broadcast %cst : f32 to vector<2x8x16xf32>
    %9 = vector.broadcast %cst_2 : f32 to vector<2x8x16xf32>
    %10 = arith.select %7, %8, %9 : vector<2x8x16xi1>, vector<2x8x16xf32>
    "tpu.trace_start"() <{level = 10 : i32, message = "boi,bic->boc"}> : () -> ()
    %cst_3 = arith.constant dense<0.000000e+00> : vector<2x8x12xf32>
    %11 = tpu.matmul %10, %0, %cst_3 {dimension_numbers = #tpu.dot_dimension_numbers<[2], [1], [1], [2], [0, 0, 0, 1, 1, 2], [0], [0]>} : vector<2x8x16xf32>, vector<2x16x12xf32>, vector<2x8x12xf32> -> vector<2x8x12xf32>
    "tpu.trace_stop"() : () -> ()
    %c2_i32_4 = arith.constant 2 : i32
    %12 = vector.broadcast %c2_i32_4 : i32 to vector<2x8x16xi32>
    %13 = arith.muli %12, %1 : vector<2x8x16xi32>
    %c0_i32 = arith.constant 0 : i32
    %14 = vector.broadcast %c0_i32 : i32 to vector<2x8x16xi32>
    %15 = arith.addi %13, %14 : vector<2x8x16xi32>
    %16 = arith.cmpi eq, %2, %15 : vector<2x8x16xi32>
    %cst_5 = arith.constant 1.000000e+00 : f32
    %cst_6 = arith.constant 0.000000e+00 : f32
    %17 = vector.broadcast %cst_5 : f32 to vector<2x8x16xf32>
    %18 = vector.broadcast %cst_6 : f32 to vector<2x8x16xf32>
    %19 = arith.select %16, %17, %18 : vector<2x8x16xi1>, vector<2x8x16xf32>
    "tpu.trace_start"() <{level = 10 : i32, message = "boi,bic->boc"}> : () -> ()
    %cst_7 = arith.constant dense<0.000000e+00> : vector<2x8x12xf32>
    %20 = tpu.matmul %19, %0, %cst_7 {dimension_numbers = #tpu.dot_dimension_numbers<[2], [1], [1], [2], [0, 0, 0, 1, 1, 2], [0], [0]>} : vector<2x8x16xf32>, vector<2x16x12xf32>, vector<2x8x12xf32> -> vector<2x8x12xf32>
    "tpu.trace_stop"() : () -> ()
    %c2_i32_8 = arith.constant 2 : i32
    %21 = vector.broadcast %c2_i32_8 : i32 to vector<2x8x16xi32>
    %22 = arith.muli %21, %1 : vector<2x8x16xi32>
    %c1_i32 = arith.constant 1 : i32
    %23 = vector.broadcast %c1_i32 : i32 to vector<2x8x16xi32>
    %24 = arith.addi %22, %23 : vector<2x8x16xi32>
    %25 = arith.cmpi eq, %2, %24 : vector<2x8x16xi32>
    %cst_9 = arith.constant 1.000000e+00 : f32
    %cst_10 = arith.constant 0.000000e+00 : f32
    %26 = vector.broadcast %cst_9 : f32 to vector<2x8x16xf32>
    %27 = vector.broadcast %cst_10 : f32 to vector<2x8x16xf32>
    %28 = arith.select %25, %26, %27 : vector<2x8x16xi1>, vector<2x8x16xf32>
    "tpu.trace_start"() <{level = 10 : i32, message = "boi,bic->boc"}> : () -> ()
    %cst_11 = arith.constant dense<0.000000e+00> : vector<2x8x12xf32>
    %29 = tpu.matmul %28, %0, %cst_11 {dimension_numbers = #tpu.dot_dimension_numbers<[2], [1], [1], [2], [0, 0, 0, 1, 1, 2], [0], [0]>} : vector<2x8x16xf32>, vector<2x16x12xf32>, vector<2x8x12xf32> -> vector<2x8x12xf32>
    "tpu.trace_stop"() : () -> ()
    %30 = tpu.concatenate %11, %20, %29 in 2 : vector<2x8x12xf32>, vector<2x8x12xf32>, vector<2x8x12xf32> -> vector<2x8x36xf32>
    %c0_12 = arith.constant 0 : index
    %c0_13 = arith.constant 0 : index
    %c0_14 = arith.constant 0 : index
    %31 = vector.load %arg1[%c0_12, %c0_13, %c0_14] : memref<4x384x128xbf16, #tpu.memory_space<vmem>>, vector<1x384x128xbf16>
    %32 = vector.shape_cast %31 : vector<1x384x128xbf16> to vector<384x128xbf16>
    %33 = vector.extract_strided_slice %32 {offsets = [0, 0], sizes = [36, 32], strides = [1, 1]} : vector<384x128xbf16> to vector<36x32xbf16>
    %34 = vector.shape_cast %33 : vector<36x32xbf16> to vector<1x36x32xbf16>
    %35 = vector.broadcast %34 : vector<1x36x32xbf16> to vector<2x36x32xbf16>
    %36 = arith.truncf %30 : vector<2x8x36xf32> to vector<2x8x36xbf16>
    "tpu.trace_start"() <{level = 10 : i32, message = "bok,bkc->boc"}> : () -> ()
    %cst_15 = arith.constant dense<0.000000e+00> : vector<2x8x32xf32>
    %37 = tpu.matmul %36, %35, %cst_15 {dimension_numbers = #tpu.dot_dimension_numbers<[2], [1], [1], [2], [0, 0, 0, 1, 1, 2], [0], [0]>} : vector<2x8x36xbf16>, vector<2x36x32xbf16>, vector<2x8x32xf32> -> vector<2x8x32xf32>
    "tpu.trace_stop"() : () -> ()
    %c0_16 = arith.constant 0 : index
    %c0_17 = arith.constant 0 : index
    %38 = vector.load %arg2[%c0_16, %c0_17] : memref<8x128xf32, #tpu.memory_space<vmem>>, vector<1x128xf32>
    %39 = vector.shape_cast %38 : vector<1x128xf32> to vector<128xf32>
    %40 = vector.extract_strided_slice %39 {offsets = [0], sizes = [32], strides = [1]} : vector<128xf32> to vector<32xf32>
    %41 = vector.shape_cast %40 : vector<32xf32> to vector<1x1x32xf32>
    %42 = vector.broadcast %41 : vector<1x1x32xf32> to vector<2x8x32xf32>
    %43 = arith.addf %37, %42 : vector<2x8x32xf32>
    %cst_18 = arith.constant 0.000000e+00 : f32
    %44 = vector.broadcast %cst_18 : f32 to vector<2x8x32xf32>
    %45 = arith.cmpf oge, %43, %44 : vector<2x8x32xf32>
    %cst_19 = arith.constant 2.000000e-01 : f32
    %46 = vector.broadcast %cst_19 : f32 to vector<2x8x32xf32>
    %47 = arith.mulf %46, %43 : vector<2x8x32xf32>
    %48 = arith.select %45, %43, %47 : vector<2x8x32xi1>, vector<2x8x32xf32>
    %49 = tpu.iota {dimensions = array<i32: 1>} : vector<2x4x8xi32>
    %50 = tpu.iota {dimensions = array<i32: 2>} : vector<2x4x8xi32>
    %c2_i32_20 = arith.constant 2 : i32
    %51 = vector.broadcast %c2_i32_20 : i32 to vector<2x4x8xi32>
    %52 = arith.muli %51, %49 : vector<2x4x8xi32>
    %c-1_i32_21 = arith.constant -1 : i32
    %53 = vector.broadcast %c-1_i32_21 : i32 to vector<2x4x8xi32>
    %54 = arith.addi %52, %53 : vector<2x4x8xi32>
    %55 = arith.cmpi eq, %50, %54 : vector<2x4x8xi32>
    %cst_22 = arith.constant 1.000000e+00 : f32
    %cst_23 = arith.constant 0.000000e+00 : f32
    %56 = vector.broadcast %cst_22 : f32 to vector<2x4x8xf32>
    %57 = vector.broadcast %cst_23 : f32 to vector<2x4x8xf32>
    %58 = arith.select %55, %56, %57 : vector<2x4x8xi1>, vector<2x4x8xf32>
    "tpu.trace_start"() <{level = 10 : i32, message = "boi,bic->boc"}> : () -> ()
    %cst_24 = arith.constant dense<0.000000e+00> : vector<2x4x32xf32>
    %59 = tpu.matmul %58, %48, %cst_24 {dimension_numbers = #tpu.dot_dimension_numbers<[2], [1], [1], [2], [0, 0, 0, 1, 1, 2], [0], [0]>} : vector<2x4x8xf32>, vector<2x8x32xf32>, vector<2x4x32xf32> -> vector<2x4x32xf32>
    "tpu.trace_stop"() : () -> ()
    %c2_i32_25 = arith.constant 2 : i32
    %60 = vector.broadcast %c2_i32_25 : i32 to vector<2x4x8xi32>
    %61 = arith.muli %60, %49 : vector<2x4x8xi32>
    %c0_i32_26 = arith.constant 0 : i32
    %62 = vector.broadcast %c0_i32_26 : i32 to vector<2x4x8xi32>
    %63 = arith.addi %61, %62 : vector<2x4x8xi32>
    %64 = arith.cmpi eq, %50, %63 : vector<2x4x8xi32>
    %cst_27 = arith.constant 1.000000e+00 : f32
    %cst_28 = arith.constant 0.000000e+00 : f32
    %65 = vector.broadcast %cst_27 : f32 to vector<2x4x8xf32>
    %66 = vector.broadcast %cst_28 : f32 to vector<2x4x8xf32>
    %67 = arith.select %64, %65, %66 : vector<2x4x8xi1>, vector<2x4x8xf32>
    "tpu.trace_start"() <{level = 10 : i32, message = "boi,bic->boc"}> : () -> ()
    %cst_29 = arith.constant dense<0.000000e+00> : vector<2x4x32xf32>
    %68 = tpu.matmul %67, %48, %cst_29 {dimension_numbers = #tpu.dot_dimension_numbers<[2], [1], [1], [2], [0, 0, 0, 1, 1, 2], [0], [0]>} : vector<2x4x8xf32>, vector<2x8x32xf32>, vector<2x4x32xf32> -> vector<2x4x32xf32>
    "tpu.trace_stop"() : () -> ()
    %c2_i32_30 = arith.constant 2 : i32
    %69 = vector.broadcast %c2_i32_30 : i32 to vector<2x4x8xi32>
    %70 = arith.muli %69, %49 : vector<2x4x8xi32>
    %c1_i32_31 = arith.constant 1 : i32
    %71 = vector.broadcast %c1_i32_31 : i32 to vector<2x4x8xi32>
    %72 = arith.addi %70, %71 : vector<2x4x8xi32>
    %73 = arith.cmpi eq, %50, %72 : vector<2x4x8xi32>
    %cst_32 = arith.constant 1.000000e+00 : f32
    %cst_33 = arith.constant 0.000000e+00 : f32
    %74 = vector.broadcast %cst_32 : f32 to vector<2x4x8xf32>
    %75 = vector.broadcast %cst_33 : f32 to vector<2x4x8xf32>
    %76 = arith.select %73, %74, %75 : vector<2x4x8xi1>, vector<2x4x8xf32>
    "tpu.trace_start"() <{level = 10 : i32, message = "boi,bic->boc"}> : () -> ()
    %cst_34 = arith.constant dense<0.000000e+00> : vector<2x4x32xf32>
    %77 = tpu.matmul %76, %48, %cst_34 {dimension_numbers = #tpu.dot_dimension_numbers<[2], [1], [1], [2], [0, 0, 0, 1, 1, 2], [0], [0]>} : vector<2x4x8xf32>, vector<2x8x32xf32>, vector<2x4x32xf32> -> vector<2x4x32xf32>
    "tpu.trace_stop"() : () -> ()
    %78 = tpu.concatenate %59, %68, %77 in 2 : vector<2x4x32xf32>, vector<2x4x32xf32>, vector<2x4x32xf32> -> vector<2x4x96xf32>
    %c1 = arith.constant 1 : index
    %c0_35 = arith.constant 0 : index
    %c0_36 = arith.constant 0 : index
    %79 = vector.load %arg1[%c1, %c0_35, %c0_36] : memref<4x384x128xbf16, #tpu.memory_space<vmem>>, vector<1x384x128xbf16>
    %80 = vector.shape_cast %79 : vector<1x384x128xbf16> to vector<384x128xbf16>
    %81 = vector.extract_strided_slice %80 {offsets = [0, 0], sizes = [96, 64], strides = [1, 1]} : vector<384x128xbf16> to vector<96x64xbf16>
    %82 = vector.shape_cast %81 : vector<96x64xbf16> to vector<1x96x64xbf16>
    %83 = vector.broadcast %82 : vector<1x96x64xbf16> to vector<2x96x64xbf16>
    %84 = arith.truncf %78 : vector<2x4x96xf32> to vector<2x4x96xbf16>
    "tpu.trace_start"() <{level = 10 : i32, message = "bok,bkc->boc"}> : () -> ()
    %cst_37 = arith.constant dense<0.000000e+00> : vector<2x4x64xf32>
    %85 = tpu.matmul %84, %83, %cst_37 {dimension_numbers = #tpu.dot_dimension_numbers<[2], [1], [1], [2], [0, 0, 0, 1, 1, 2], [0], [0]>} : vector<2x4x96xbf16>, vector<2x96x64xbf16>, vector<2x4x64xf32> -> vector<2x4x64xf32>
    "tpu.trace_stop"() : () -> ()
    %c1_38 = arith.constant 1 : index
    %c0_39 = arith.constant 0 : index
    %86 = vector.load %arg2[%c1_38, %c0_39] : memref<8x128xf32, #tpu.memory_space<vmem>>, vector<1x128xf32>
    %87 = vector.shape_cast %86 : vector<1x128xf32> to vector<128xf32>
    %88 = vector.extract_strided_slice %87 {offsets = [0], sizes = [64], strides = [1]} : vector<128xf32> to vector<64xf32>
    %89 = vector.shape_cast %88 : vector<64xf32> to vector<1x1x64xf32>
    %90 = vector.broadcast %89 : vector<1x1x64xf32> to vector<2x4x64xf32>
    %91 = arith.addf %85, %90 : vector<2x4x64xf32>
    %c2 = arith.constant 2 : index
    %c0_40 = arith.constant 0 : index
    %92 = vector.load %arg2[%c2, %c0_40] : memref<8x128xf32, #tpu.memory_space<vmem>>, vector<1x128xf32>
    %93 = vector.shape_cast %92 : vector<1x128xf32> to vector<128xf32>
    %94 = vector.extract_strided_slice %93 {offsets = [0], sizes = [64], strides = [1]} : vector<128xf32> to vector<64xf32>
    %c3 = arith.constant 3 : index
    %c0_41 = arith.constant 0 : index
    %95 = vector.load %arg2[%c3, %c0_41] : memref<8x128xf32, #tpu.memory_space<vmem>>, vector<1x128xf32>
    %96 = vector.shape_cast %95 : vector<1x128xf32> to vector<128xf32>
    %97 = vector.extract_strided_slice %96 {offsets = [0], sizes = [64], strides = [1]} : vector<128xf32> to vector<64xf32>
    %cst_42 = arith.constant dense<0.000000e+00> : vector<64xf32>
    %98 = vector.multi_reduction <add>, %91, %cst_42 [0, 1] : vector<2x4x64xf32> to vector<64xf32>
    %99 = vector.shape_cast %98 : vector<64xf32> to vector<1x1x64xf32>
    %cst_43 = arith.constant 8.000000e+00 : f32
    %100 = vector.broadcast %cst_43 : f32 to vector<1x1x64xf32>
    %101 = arith.divf %99, %100 : vector<1x1x64xf32>
    %102 = vector.broadcast %101 : vector<1x1x64xf32> to vector<2x4x64xf32>
    %103 = arith.subf %91, %102 : vector<2x4x64xf32>
    %104 = arith.mulf %103, %103 : vector<2x4x64xf32>
    %cst_44 = arith.constant dense<0.000000e+00> : vector<64xf32>
    %105 = vector.multi_reduction <add>, %104, %cst_44 [0, 1] : vector<2x4x64xf32> to vector<64xf32>
    %106 = vector.shape_cast %105 : vector<64xf32> to vector<1x1x64xf32>
    %cst_45 = arith.constant 8.000000e+00 : f32
    %107 = vector.broadcast %cst_45 : f32 to vector<1x1x64xf32>
    %108 = arith.divf %106, %107 : vector<1x1x64xf32>
    %109 = vector.broadcast %101 : vector<1x1x64xf32> to vector<2x4x64xf32>
    %110 = arith.subf %91, %109 : vector<2x4x64xf32>
    %cst_46 = arith.constant 9.99999974E-6 : f32
    %111 = vector.broadcast %cst_46 : f32 to vector<1x1x64xf32>
    %112 = arith.addf %108, %111 : vector<1x1x64xf32>
    %113 = math.rsqrt %112 : vector<1x1x64xf32>
    %114 = vector.broadcast %113 : vector<1x1x64xf32> to vector<2x4x64xf32>
    %115 = arith.mulf %110, %114 : vector<2x4x64xf32>
    %116 = vector.shape_cast %94 : vector<64xf32> to vector<1x1x64xf32>
    %117 = vector.broadcast %116 : vector<1x1x64xf32> to vector<2x4x64xf32>
    %118 = arith.mulf %115, %117 : vector<2x4x64xf32>
    %119 = vector.shape_cast %97 : vector<64xf32> to vector<1x1x64xf32>
    %120 = vector.broadcast %119 : vector<1x1x64xf32> to vector<2x4x64xf32>
    %121 = arith.addf %118, %120 : vector<2x4x64xf32>
    %cst_47 = arith.constant 0.000000e+00 : f32
    %122 = vector.broadcast %cst_47 : f32 to vector<2x4x64xf32>
    %123 = arith.cmpf oge, %121, %122 : vector<2x4x64xf32>
    %cst_48 = arith.constant 2.000000e-01 : f32
    %124 = vector.broadcast %cst_48 : f32 to vector<2x4x64xf32>
    %125 = arith.mulf %124, %121 : vector<2x4x64xf32>
    %126 = arith.select %123, %121, %125 : vector<2x4x64xi1>, vector<2x4x64xf32>
    %127 = tpu.iota {dimensions = array<i32: 1>} : vector<2x2x4xi32>
    %128 = tpu.iota {dimensions = array<i32: 2>} : vector<2x2x4xi32>
    %c2_i32_49 = arith.constant 2 : i32
    %129 = vector.broadcast %c2_i32_49 : i32 to vector<2x2x4xi32>
    %130 = arith.muli %129, %127 : vector<2x2x4xi32>
    %c-1_i32_50 = arith.constant -1 : i32
    %131 = vector.broadcast %c-1_i32_50 : i32 to vector<2x2x4xi32>
    %132 = arith.addi %130, %131 : vector<2x2x4xi32>
    %133 = arith.cmpi eq, %128, %132 : vector<2x2x4xi32>
    %cst_51 = arith.constant 1.000000e+00 : f32
    %cst_52 = arith.constant 0.000000e+00 : f32
    %134 = vector.broadcast %cst_51 : f32 to vector<2x2x4xf32>
    %135 = vector.broadcast %cst_52 : f32 to vector<2x2x4xf32>
    %136 = arith.select %133, %134, %135 : vector<2x2x4xi1>, vector<2x2x4xf32>
    "tpu.trace_start"() <{level = 10 : i32, message = "boi,bic->boc"}> : () -> ()
    %cst_53 = arith.constant dense<0.000000e+00> : vector<2x2x64xf32>
    %137 = tpu.matmul %136, %126, %cst_53 {dimension_numbers = #tpu.dot_dimension_numbers<[2], [1], [1], [2], [0, 0, 0, 1, 1, 2], [0], [0]>} : vector<2x2x4xf32>, vector<2x4x64xf32>, vector<2x2x64xf32> -> vector<2x2x64xf32>
    "tpu.trace_stop"() : () -> ()
    %c2_i32_54 = arith.constant 2 : i32
    %138 = vector.broadcast %c2_i32_54 : i32 to vector<2x2x4xi32>
    %139 = arith.muli %138, %127 : vector<2x2x4xi32>
    %c0_i32_55 = arith.constant 0 : i32
    %140 = vector.broadcast %c0_i32_55 : i32 to vector<2x2x4xi32>
    %141 = arith.addi %139, %140 : vector<2x2x4xi32>
    %142 = arith.cmpi eq, %128, %141 : vector<2x2x4xi32>
    %cst_56 = arith.constant 1.000000e+00 : f32
    %cst_57 = arith.constant 0.000000e+00 : f32
    %143 = vector.broadcast %cst_56 : f32 to vector<2x2x4xf32>
    %144 = vector.broadcast %cst_57 : f32 to vector<2x2x4xf32>
    %145 = arith.select %142, %143, %144 : vector<2x2x4xi1>, vector<2x2x4xf32>
    "tpu.trace_start"() <{level = 10 : i32, message = "boi,bic->boc"}> : () -> ()
    %cst_58 = arith.constant dense<0.000000e+00> : vector<2x2x64xf32>
    %146 = tpu.matmul %145, %126, %cst_58 {dimension_numbers = #tpu.dot_dimension_numbers<[2], [1], [1], [2], [0, 0, 0, 1, 1, 2], [0], [0]>} : vector<2x2x4xf32>, vector<2x4x64xf32>, vector<2x2x64xf32> -> vector<2x2x64xf32>
    "tpu.trace_stop"() : () -> ()
    %c2_i32_59 = arith.constant 2 : i32
    %147 = vector.broadcast %c2_i32_59 : i32 to vector<2x2x4xi32>
    %148 = arith.muli %147, %127 : vector<2x2x4xi32>
    %c1_i32_60 = arith.constant 1 : i32
    %149 = vector.broadcast %c1_i32_60 : i32 to vector<2x2x4xi32>
    %150 = arith.addi %148, %149 : vector<2x2x4xi32>
    %151 = arith.cmpi eq, %128, %150 : vector<2x2x4xi32>
    %cst_61 = arith.constant 1.000000e+00 : f32
    %cst_62 = arith.constant 0.000000e+00 : f32
    %152 = vector.broadcast %cst_61 : f32 to vector<2x2x4xf32>
    %153 = vector.broadcast %cst_62 : f32 to vector<2x2x4xf32>
    %154 = arith.select %151, %152, %153 : vector<2x2x4xi1>, vector<2x2x4xf32>
    "tpu.trace_start"() <{level = 10 : i32, message = "boi,bic->boc"}> : () -> ()
    %cst_63 = arith.constant dense<0.000000e+00> : vector<2x2x64xf32>
    %155 = tpu.matmul %154, %126, %cst_63 {dimension_numbers = #tpu.dot_dimension_numbers<[2], [1], [1], [2], [0, 0, 0, 1, 1, 2], [0], [0]>} : vector<2x2x4xf32>, vector<2x4x64xf32>, vector<2x2x64xf32> -> vector<2x2x64xf32>
    "tpu.trace_stop"() : () -> ()
    %156 = tpu.concatenate %137, %146, %155 in 2 : vector<2x2x64xf32>, vector<2x2x64xf32>, vector<2x2x64xf32> -> vector<2x2x192xf32>
    %c2_64 = arith.constant 2 : index
    %c0_65 = arith.constant 0 : index
    %c0_66 = arith.constant 0 : index
    %157 = vector.load %arg1[%c2_64, %c0_65, %c0_66] : memref<4x384x128xbf16, #tpu.memory_space<vmem>>, vector<1x384x128xbf16>
    %158 = vector.shape_cast %157 : vector<1x384x128xbf16> to vector<384x128xbf16>
    %159 = vector.extract_strided_slice %158 {offsets = [0, 0], sizes = [192, 128], strides = [1, 1]} : vector<384x128xbf16> to vector<192x128xbf16>
    %160 = vector.shape_cast %159 : vector<192x128xbf16> to vector<1x192x128xbf16>
    %161 = vector.broadcast %160 : vector<1x192x128xbf16> to vector<2x192x128xbf16>
    %162 = arith.truncf %156 : vector<2x2x192xf32> to vector<2x2x192xbf16>
    "tpu.trace_start"() <{level = 10 : i32, message = "bok,bkc->boc"}> : () -> ()
    %cst_67 = arith.constant dense<0.000000e+00> : vector<2x2x128xf32>
    %163 = tpu.matmul %162, %161, %cst_67 {dimension_numbers = #tpu.dot_dimension_numbers<[2], [1], [1], [2], [0, 0, 0, 1, 1, 2], [0], [0]>} : vector<2x2x192xbf16>, vector<2x192x128xbf16>, vector<2x2x128xf32> -> vector<2x2x128xf32>
    "tpu.trace_stop"() : () -> ()
    %c4 = arith.constant 4 : index
    %c0_68 = arith.constant 0 : index
    %164 = vector.load %arg2[%c4, %c0_68] : memref<8x128xf32, #tpu.memory_space<vmem>>, vector<1x128xf32>
    %165 = vector.shape_cast %164 : vector<1x128xf32> to vector<128xf32>
    %166 = vector.shape_cast %165 : vector<128xf32> to vector<1x1x128xf32>
    %167 = vector.broadcast %166 : vector<1x1x128xf32> to vector<2x2x128xf32>
    %168 = arith.addf %163, %167 : vector<2x2x128xf32>
    %c5 = arith.constant 5 : index
    %c0_69 = arith.constant 0 : index
    %169 = vector.load %arg2[%c5, %c0_69] : memref<8x128xf32, #tpu.memory_space<vmem>>, vector<1x128xf32>
    %170 = vector.shape_cast %169 : vector<1x128xf32> to vector<128xf32>
    %c6 = arith.constant 6 : index
    %c0_70 = arith.constant 0 : index
    %171 = vector.load %arg2[%c6, %c0_70] : memref<8x128xf32, #tpu.memory_space<vmem>>, vector<1x128xf32>
    %172 = vector.shape_cast %171 : vector<1x128xf32> to vector<128xf32>
    %cst_71 = arith.constant dense<0.000000e+00> : vector<128xf32>
    %173 = vector.multi_reduction <add>, %168, %cst_71 [0, 1] : vector<2x2x128xf32> to vector<128xf32>
    %174 = vector.shape_cast %173 : vector<128xf32> to vector<1x1x128xf32>
    %cst_72 = arith.constant 4.000000e+00 : f32
    %175 = vector.broadcast %cst_72 : f32 to vector<1x1x128xf32>
    %176 = arith.divf %174, %175 : vector<1x1x128xf32>
    %177 = vector.broadcast %176 : vector<1x1x128xf32> to vector<2x2x128xf32>
    %178 = arith.subf %168, %177 : vector<2x2x128xf32>
    %179 = arith.mulf %178, %178 : vector<2x2x128xf32>
    %cst_73 = arith.constant dense<0.000000e+00> : vector<128xf32>
    %180 = vector.multi_reduction <add>, %179, %cst_73 [0, 1] : vector<2x2x128xf32> to vector<128xf32>
    %181 = vector.shape_cast %180 : vector<128xf32> to vector<1x1x128xf32>
    %cst_74 = arith.constant 4.000000e+00 : f32
    %182 = vector.broadcast %cst_74 : f32 to vector<1x1x128xf32>
    %183 = arith.divf %181, %182 : vector<1x1x128xf32>
    %184 = vector.broadcast %176 : vector<1x1x128xf32> to vector<2x2x128xf32>
    %185 = arith.subf %168, %184 : vector<2x2x128xf32>
    %cst_75 = arith.constant 9.99999974E-6 : f32
    %186 = vector.broadcast %cst_75 : f32 to vector<1x1x128xf32>
    %187 = arith.addf %183, %186 : vector<1x1x128xf32>
    %188 = math.rsqrt %187 : vector<1x1x128xf32>
    %189 = vector.broadcast %188 : vector<1x1x128xf32> to vector<2x2x128xf32>
    %190 = arith.mulf %185, %189 : vector<2x2x128xf32>
    %191 = vector.shape_cast %170 : vector<128xf32> to vector<1x1x128xf32>
    %192 = vector.broadcast %191 : vector<1x1x128xf32> to vector<2x2x128xf32>
    %193 = arith.mulf %190, %192 : vector<2x2x128xf32>
    %194 = vector.shape_cast %172 : vector<128xf32> to vector<1x1x128xf32>
    %195 = vector.broadcast %194 : vector<1x1x128xf32> to vector<2x2x128xf32>
    %196 = arith.addf %193, %195 : vector<2x2x128xf32>
    %cst_76 = arith.constant 0.000000e+00 : f32
    %197 = vector.broadcast %cst_76 : f32 to vector<2x2x128xf32>
    %198 = arith.cmpf oge, %196, %197 : vector<2x2x128xf32>
    %cst_77 = arith.constant 2.000000e-01 : f32
    %199 = vector.broadcast %cst_77 : f32 to vector<2x2x128xf32>
    %200 = arith.mulf %199, %196 : vector<2x2x128xf32>
    %201 = arith.select %198, %196, %200 : vector<2x2x128xi1>, vector<2x2x128xf32>
    %202 = tpu.iota {dimensions = array<i32: 1>} : vector<2x2x2xi32>
    %203 = tpu.iota {dimensions = array<i32: 2>} : vector<2x2x2xi32>
    %c1_i32_78 = arith.constant 1 : i32
    %204 = vector.broadcast %c1_i32_78 : i32 to vector<2x2x2xi32>
    %205 = arith.muli %204, %202 : vector<2x2x2xi32>
    %c-1_i32_79 = arith.constant -1 : i32
    %206 = vector.broadcast %c-1_i32_79 : i32 to vector<2x2x2xi32>
    %207 = arith.addi %205, %206 : vector<2x2x2xi32>
    %208 = arith.cmpi eq, %203, %207 : vector<2x2x2xi32>
    %cst_80 = arith.constant 1.000000e+00 : f32
    %cst_81 = arith.constant 0.000000e+00 : f32
    %209 = vector.broadcast %cst_80 : f32 to vector<2x2x2xf32>
    %210 = vector.broadcast %cst_81 : f32 to vector<2x2x2xf32>
    %211 = arith.select %208, %209, %210 : vector<2x2x2xi1>, vector<2x2x2xf32>
    "tpu.trace_start"() <{level = 10 : i32, message = "boi,bic->boc"}> : () -> ()
    %cst_82 = arith.constant dense<0.000000e+00> : vector<2x2x128xf32>
    %212 = tpu.matmul %211, %201, %cst_82 {dimension_numbers = #tpu.dot_dimension_numbers<[2], [1], [1], [2], [0, 0, 0, 1, 1, 2], [0], [0]>} : vector<2x2x2xf32>, vector<2x2x128xf32>, vector<2x2x128xf32> -> vector<2x2x128xf32>
    "tpu.trace_stop"() : () -> ()
    %c1_i32_83 = arith.constant 1 : i32
    %213 = vector.broadcast %c1_i32_83 : i32 to vector<2x2x2xi32>
    %214 = arith.muli %213, %202 : vector<2x2x2xi32>
    %c0_i32_84 = arith.constant 0 : i32
    %215 = vector.broadcast %c0_i32_84 : i32 to vector<2x2x2xi32>
    %216 = arith.addi %214, %215 : vector<2x2x2xi32>
    %217 = arith.cmpi eq, %203, %216 : vector<2x2x2xi32>
    %cst_85 = arith.constant 1.000000e+00 : f32
    %cst_86 = arith.constant 0.000000e+00 : f32
    %218 = vector.broadcast %cst_85 : f32 to vector<2x2x2xf32>
    %219 = vector.broadcast %cst_86 : f32 to vector<2x2x2xf32>
    %220 = arith.select %217, %218, %219 : vector<2x2x2xi1>, vector<2x2x2xf32>
    "tpu.trace_start"() <{level = 10 : i32, message = "boi,bic->boc"}> : () -> ()
    %cst_87 = arith.constant dense<0.000000e+00> : vector<2x2x128xf32>
    %221 = tpu.matmul %220, %201, %cst_87 {dimension_numbers = #tpu.dot_dimension_numbers<[2], [1], [1], [2], [0, 0, 0, 1, 1, 2], [0], [0]>} : vector<2x2x2xf32>, vector<2x2x128xf32>, vector<2x2x128xf32> -> vector<2x2x128xf32>
    "tpu.trace_stop"() : () -> ()
    %c1_i32_88 = arith.constant 1 : i32
    %222 = vector.broadcast %c1_i32_88 : i32 to vector<2x2x2xi32>
    %223 = arith.muli %222, %202 : vector<2x2x2xi32>
    %c1_i32_89 = arith.constant 1 : i32
    %224 = vector.broadcast %c1_i32_89 : i32 to vector<2x2x2xi32>
    %225 = arith.addi %223, %224 : vector<2x2x2xi32>
    %226 = arith.cmpi eq, %203, %225 : vector<2x2x2xi32>
    %cst_90 = arith.constant 1.000000e+00 : f32
    %cst_91 = arith.constant 0.000000e+00 : f32
    %227 = vector.broadcast %cst_90 : f32 to vector<2x2x2xf32>
    %228 = vector.broadcast %cst_91 : f32 to vector<2x2x2xf32>
    %229 = arith.select %226, %227, %228 : vector<2x2x2xi1>, vector<2x2x2xf32>
    "tpu.trace_start"() <{level = 10 : i32, message = "boi,bic->boc"}> : () -> ()
    %cst_92 = arith.constant dense<0.000000e+00> : vector<2x2x128xf32>
    %230 = tpu.matmul %229, %201, %cst_92 {dimension_numbers = #tpu.dot_dimension_numbers<[2], [1], [1], [2], [0, 0, 0, 1, 1, 2], [0], [0]>} : vector<2x2x2xf32>, vector<2x2x128xf32>, vector<2x2x128xf32> -> vector<2x2x128xf32>
    "tpu.trace_stop"() : () -> ()
    %231 = tpu.concatenate %212, %221, %230 in 2 : vector<2x2x128xf32>, vector<2x2x128xf32>, vector<2x2x128xf32> -> vector<2x2x384xf32>
    %c3_93 = arith.constant 3 : index
    %c0_94 = arith.constant 0 : index
    %c0_95 = arith.constant 0 : index
    %232 = vector.load %arg1[%c3_93, %c0_94, %c0_95] : memref<4x384x128xbf16, #tpu.memory_space<vmem>>, vector<1x384x128xbf16>
    %233 = vector.shape_cast %232 : vector<1x384x128xbf16> to vector<384x128xbf16>
    %234 = vector.shape_cast %233 : vector<384x128xbf16> to vector<1x384x128xbf16>
    %235 = vector.broadcast %234 : vector<1x384x128xbf16> to vector<2x384x128xbf16>
    %236 = arith.truncf %231 : vector<2x2x384xf32> to vector<2x2x384xbf16>
    "tpu.trace_start"() <{level = 10 : i32, message = "bok,bkc->boc"}> : () -> ()
    %cst_96 = arith.constant dense<0.000000e+00> : vector<2x2x128xf32>
    %237 = tpu.matmul %236, %235, %cst_96 {dimension_numbers = #tpu.dot_dimension_numbers<[2], [1], [1], [2], [0, 0, 0, 1, 1, 2], [0], [0]>} : vector<2x2x384xbf16>, vector<2x384x128xbf16>, vector<2x2x128xf32> -> vector<2x2x128xf32>
    "tpu.trace_stop"() : () -> ()
    %c7 = arith.constant 7 : index
    %c0_97 = arith.constant 0 : index
    %238 = vector.load %arg2[%c7, %c0_97] : memref<8x128xf32, #tpu.memory_space<vmem>>, vector<1x128xf32>
    %239 = vector.shape_cast %238 : vector<1x128xf32> to vector<128xf32>
    %240 = vector.shape_cast %239 : vector<128xf32> to vector<1x1x128xf32>
    %241 = vector.broadcast %240 : vector<1x1x128xf32> to vector<2x2x128xf32>
    %242 = arith.addf %237, %241 : vector<2x2x128xf32>
    %cst_98 = arith.constant dense<0.000000e+00> : vector<2x128xf32>
    %243 = vector.multi_reduction <add>, %242, %cst_98 [1] : vector<2x2x128xf32> to vector<2x128xf32>
    %cst_99 = arith.constant 2.000000e+00 : f32
    %244 = vector.broadcast %cst_99 : f32 to vector<2x128xf32>
    %245 = arith.divf %243, %244 : vector<2x128xf32>
    %c0_100 = arith.constant 0 : index
    %c0_101 = arith.constant 0 : index
    %246 = vector.load %arg3[%c0_100, %c0_101] : memref<2x128xf32, #tpu.memory_space<vmem>>, vector<2x128xf32>
    tpu.vector_store %arg3[%c0_100, %c0_101], %245 {strides = array<i32>} : memref<2x128xf32, #tpu.memory_space<vmem>>, vector<2x128xf32>,
    return
  }
}

</mosaic_0001>

<llo_original>
// kernel: tpu_custom_call.1
$region0: #{tpu_custom_call.1}
  #allocation0 [shape = 'u32[]', space=smem, size = 0x4, offset = 0x4, fixed_abs, tag = 'smem constant byte address 0x4 - core index']
  #allocation1 [shape = 'u32[144,128]{1,0:T(1,128)}', space=vmem, size = 0x12000, scoped, tag = 'internal scratch']
  %s0 = inlined_call_operand.vmem [shape: f32[2,16,12], index: 0, kind: input, shape index: {}]
  %s1 = inlined_call_operand.hbm [shape: bf16[4,384,128], index: 1, kind: input, shape index: {}]
  %s2 = inlined_call_operand.vmem [shape: f32[8,128], index: 2, kind: input, shape index: {}]
  %s3 = inlined_call_operand.hbm [shape: f32[2,128], index: 3, kind: output, shape index: {}]
  %s4 = sld [smem:[#allocation0]]
  $region26: #{tpu_custom_call.1} parent=0
    _
  %s6 = ssub.s32 1, %s4
  %s7 = scalar_select 0, %s6, %s4
  $region1: #{tpu_custom_call.1} parent=0
    #allocation2 [shape = 'u8[393216]{0}', space=vmem, size = 0x60000, scoped, tag = 'input window, operand 1, single buffered']
    #allocation3 [shape = 's32[1]{0}', space=sflag, size = 0x4, scoped, tag = 'scoped memory for tpu_custom_call.1']
    #allocation4 [shape = 's32[1]{0}', space=sflag, size = 0x4, scoped, tag = 'scoped memory for tpu_custom_call.1']
    #allocation5 [shape = 'u8[1024]{0}', space=vmem, size = 0x400, scoped, tag = 'output window, operand 0, single buffered']
    %8 = vsyncpa [#allocation3], 0
    %9 = vsyncpa [#allocation4], 0
    // Predicated region
    $region2: #{tpu_custom_call.1} parent=1 // pred_check
      _
    $region3: #{tpu_custom_call.1} parent=1 // pred_check_branch
      %11 = sbr.rel (0) target = $region5
    $region4: #{tpu_custom_call.1} parent=1 // pred_region
      _
    $region5: #{tpu_custom_call.1} parent=1 // pred_fallthru
      _
    // Predicated region
    $region6: #{tpu_custom_call.1} parent=1 // pred_check
      _
    $region7: #{tpu_custom_call.1} parent=1 // pred_check_branch
      %13 = sbr.rel (0) target = $region9
    $region8: #{tpu_custom_call.1} parent=1 // pred_region
      %s15 = ssub.s32 12288, 12288
      %16 = vsyncadd [#allocation3], %s15
      %s17 = sshll.u32 [#allocation2], 4
      %s18 = int_to_ptr.vmem [resolvable:$true] %s17
      %23 = dma.hbm_to_vmem [thread:$0]  %s1, 12288, %s18, [#allocation3], 64, 64, 4
    $region9: #{tpu_custom_call.1} parent=1 // pred_fallthru
      _
    // Predicated region
    $region10: #{tpu_custom_call.1} parent=1 // pred_check
      _
    $region11: #{tpu_custom_call.1} parent=1 // pred_check_branch
      %25 = sbr.rel (0) target = $region13
    $region12: #{tpu_custom_call.1} parent=1 // pred_region
      _
    $region13: #{tpu_custom_call.1} parent=1 // pred_fallthru
      _
    // Predicated region
    $region14: #{tpu_custom_call.1} parent=1 // pred_check
      _
    $region15: #{tpu_custom_call.1} parent=1 // pred_check_branch
      %27 = sbr.rel (0) target = $region17
    $region16: #{tpu_custom_call.1} parent=1 // pred_region
      %28 = dma.done [#allocation3], 12288
    $region17: #{tpu_custom_call.1} parent=1 // pred_fallthru
      _
    %v30 = vld [vmem:[%s0] sm:$0xff]
    %v31 = vld [vmem:[%s0 + $0x8] sm:$0xff]
    %v32 = vld [vmem:[%s0 + $0x10] sm:$0xff]
    %v33 = vld [vmem:[%s0 + $0x18] sm:$0xff]
    %v34 = vlaneseq
    %v35 = vshrl.u32 %v34, 7
    %v36 = vlaneseq
    %v37 = vand.u32 %v36, 127
    %v38 = vmul.u32 %v35, 2
    %v39 = vadd.s32 %v38, 4294967295
    %vm40 = vcmp.eq.s32.totalorder %v37, %v39
    %v41 = vsel %vm40, 1.0, 0.0
    %vm42 = vcmask 130048
    %v44 = vsel %vm42, %v41, 0
    %46 = vmatprep.subr.mxu0 0.0
    %47 = vmatpush1.msra.mxu0 %v30
    %48 = vmatprep.subr.mxu0 0.0
    %49 = vmatpush1.msra.mxu0 %v31
    %50 = vmatprep.subr.mxu0 0.0
    %51 = vmatpush1.msra.mxu0 0.0
    %52 = vmatprep.subr.mxu0 0.0
    %53 = vmatpush1.msra.mxu0 0.0
    %54 = vmatprep.subr.mxu0 0.0
    %55 = vmatpush1.msra.mxu0 0.0
    %56 = vmatprep.subr.mxu0 0.0
    %57 = vmatpush1.msra.mxu0 0.0
    %58 = vmatprep.subr.mxu0 0.0
    %59 = vmatpush1.msra.mxu0 0.0
    %60 = vmatprep.subr.mxu0 0.0
    %61 = vmatpush1.msra.mxu0 0.0
    %62 = vmatprep.subr.mxu0 0.0
    %63 = vmatpush1.msra.mxu0 0.0
    %64 = vmatprep.subr.mxu0 0.0
    %65 = vmatpush1.msra.mxu0 0.0
    %66 = vmatprep.subr.mxu0 0.0
    %67 = vmatpush1.msra.mxu0 0.0
    %68 = vmatprep.subr.mxu0 0.0
    %69 = vmatpush1.msra.mxu0 0.0
    %70 = vmatprep.subr.mxu0 0.0
    %71 = vmatpush1.msra.mxu0 0.0
    %72 = vmatprep.subr.mxu0 0.0
    %73 = vmatpush1.msra.mxu0 0.0
    %74 = vmatprep.subr.mxu0 0.0
    %75 = vmatpush1.msra.mxu0 0.0
    %76 = vmatprep.subr.mxu0 0.0
    %77 = vmatpush1.msra.mxu0 0.0
    %78 = vmatprep.subr.mxu0 0.0
    %79 = vmatpush1.msra.mxu0 0.0
    %80 = vmatprep.subr.mxu0 0.0
    %81 = vmatpush1.msra.mxu0 0.0
    %82 = vmatprep.subr.mxu0 0.0
    %83 = vmatpush1.msra.mxu0 0.0
    %84 = vmatprep.subr.mxu0 0.0
    %85 = vmatpush1.msra.mxu0 0.0
    %86 = vmatprep.subr.mxu0 0.0
    %87 = vmatpush1.msra.mxu0 0.0
    %88 = vmatprep.subr.mxu0 0.0
    %89 = vmatpush1.msra.mxu0 0.0
    %90 = vmatprep.subr.mxu0 0.0
    %91 = vmatpush1.msra.mxu0 0.0
    %92 = vmatprep.subr.mxu0 0.0
    %93 = vmatpush1.msra.mxu0 0.0
    %94 = vmatprep.subr.mxu0 0.0
    %95 = vmatpush1.msra.mxu0 0.0
    %96 = vmatprep.subr.mxu0 0.0
    %97 = vmatpush1.msra.mxu0 0.0
    %98 = vmatprep.subr.mxu0 0.0
    %99 = vmatpush1.msra.mxu0 0.0
    %100 = vmatprep.subr.mxu0 0.0
    %101 = vmatpush1.msra.mxu0 0.0
    %102 = vmatprep.subr.mxu0 0.0
    %103 = vmatpush1.msra.mxu0 0.0
    %104 = vmatprep.subr.mxu0 0.0
    %105 = vmatpush1.msra.mxu0 0.0
    %106 = vmatprep.subr.mxu0 0.0
    %107 = vmatpush1.msra.mxu0 0.0
    %108 = vmatprep.subr.mxu0 0.0
    %109 = vmatpush1.msra.mxu0 0.0
    %110 = vmatprep.mubr.f32.mxu0 0.0
    %111 = vmatmul.mubr.f32.gmra.mrb[0].mxu0 %v44
    %v112 = vpop.f32.mrb[0].mxu0
    %v113 = vadd.f32 0.0, %v112
    %v114 = vpop.f32.mrb[0].mxu0
    %115 = vdwg.mxu0
    %116 = vmatprep.subr.mxu0 0.0
    %117 = vmatpush1.msra.mxu0 %v32
    %118 = vmatprep.subr.mxu0 0.0
    %119 = vmatpush1.msra.mxu0 %v33
    %120 = vmatprep.subr.mxu0 0.0
    %121 = vmatpush1.msra.mxu0 0.0
    %122 = vmatprep.subr.mxu0 0.0
    %123 = vmatpush1.msra.mxu0 0.0
    %124 = vmatprep.subr.mxu0 0.0
    %125 = vmatpush1.msra.mxu0 0.0
    %126 = vmatprep.subr.mxu0 0.0
    %127 = vmatpush1.msra.mxu0 0.0
    %128 = vmatprep.subr.mxu0 0.0
    %129 = vmatpush1.msra.mxu0 0.0
    %130 = vmatprep.subr.mxu0 0.0
    %131 = vmatpush1.msra.mxu0 0.0
    %132 = vmatprep.subr.mxu0 0.0
    %133 = vmatpush1.msra.mxu0 0.0
    %134 = vmatprep.subr.mxu0 0.0
    %135 = vmatpush1.msra.mxu0 0.0
    %136 = vmatprep.subr.mxu0 0.0
    %137 = vmatpush1.msra.mxu0 0.0
    %138 = vmatprep.subr.mxu0 0.0
    %139 = vmatpush1.msra.mxu0 0.0
    %140 = vmatprep.subr.mxu0 0.0
    %141 = vmatpush1.msra.mxu0 0.0
    %142 = vmatprep.subr.mxu0 0.0
    %143 = vmatpush1.msra.mxu0 0.0
    %144 = vmatprep.subr.mxu0 0.0
    %145 = vmatpush1.msra.mxu0 0.0
    %146 = vmatprep.subr.mxu0 0.0
    %147 = vmatpush1.msra.mxu0 0.0
    %148 = vmatprep.subr.mxu0 0.0
    %149 = vmatpush1.msra.mxu0 0.0
    %150 = vmatprep.subr.mxu0 0.0
    %151 = vmatpush1.msra.mxu0 0.0
    %152 = vmatprep.subr.mxu0 0.0
    %153 = vmatpush1.msra.mxu0 0.0
    %154 = vmatprep.subr.mxu0 0.0
    %155 = vmatpush1.msra.mxu0 0.0
    %156 = vmatprep.subr.mxu0 0.0
    %157 = vmatpush1.msra.mxu0 0.0
    %158 = vmatprep.subr.mxu0 0.0
    %159 = vmatpush1.msra.mxu0 0.0
    %160 = vmatprep.subr.mxu0 0.0
    %161 = vmatpush1.msra.mxu0 0.0
    %162 = vmatprep.subr.mxu0 0.0
    %163 = vmatpush1.msra.mxu0 0.0
    %164 = vmatprep.subr.mxu0 0.0
    %165 = vmatpush1.msra.mxu0 0.0
    %166 = vmatprep.subr.mxu0 0.0
    %167 = vmatpush1.msra.mxu0 0.0
    %168 = vmatprep.subr.mxu0 0.0
    %169 = vmatpush1.msra.mxu0 0.0
    %170 = vmatprep.subr.mxu0 0.0
    %171 = vmatpush1.msra.mxu0 0.0
    %172 = vmatprep.subr.mxu0 0.0
    %173 = vmatpush1.msra.mxu0 0.0
    %174 = vmatprep.subr.mxu0 0.0
    %175 = vmatpush1.msra.mxu0 0.0
    %176 = vmatprep.subr.mxu0 0.0
    %177 = vmatpush1.msra.mxu0 0.0
    %178 = vmatprep.subr.mxu0 0.0
    %179 = vmatpush1.msra.mxu0 0.0
    %180 = vmatprep.mubr.f32.mxu0 0.0
    %181 = vmatmul.mubr.f32.gmra.mrb[0].mxu0 %v44
    %v182 = vpop.f32.mrb[0].mxu0
    %v183 = vadd.f32 0.0, %v182
    %v184 = vpop.f32.mrb[0].mxu0
    %185 = vdwg.mxu0
    %vm186 = vcmp.eq.s32.totalorder %v37, %v38
    %v187 = vsel %vm186, 1.0, 0.0
    %v189 = vsel %vm42, %v187, 0
    %191 = vmatprep.subr.mxu0 0.0
    %192 = vmatpush1.msra.mxu0 %v30
    %193 = vmatprep.subr.mxu0 0.0
    %194 = vmatpush1.msra.mxu0 %v31
    %195 = vmatprep.subr.mxu0 0.0
    %196 = vmatpush1.msra.mxu0 0.0
    %197 = vmatprep.subr.mxu0 0.0
    %198 = vmatpush1.msra.mxu0 0.0
    %199 = vmatprep.subr.mxu0 0.0
    %200 = vmatpush1.msra.mxu0 0.0
    %201 = vmatprep.subr.mxu0 0.0
    %202 = vmatpush1.msra.mxu0 0.0
    %203 = vmatprep.subr.mxu0 0.0
    %204 = vmatpush1.msra.mxu0 0.0
    %205 = vmatprep.subr.mxu0 0.0
    %206 = vmatpush1.msra.mxu0 0.0
    %207 = vmatprep.subr.mxu0 0.0
    %208 = vmatpush1.msra.mxu0 0.0
    %209 = vmatprep.subr.mxu0 0.0
    %210 = vmatpush1.msra.mxu0 0.0
    %211 = vmatprep.subr.mxu0 0.0
    %212 = vmatpush1.msra.mxu0 0.0
    %213 = vmatprep.subr.mxu0 0.0
    %214 = vmatpush1.msra.mxu0 0.0
    %215 = vmatprep.subr.mxu0 0.0
    %216 = vmatpush1.msra.mxu0 0.0
    %217 = vmatprep.subr.mxu0 0.0
    %218 = vmatpush1.msra.mxu0 0.0
    %219 = vmatprep.subr.mxu0 0.0
    %220 = vmatpush1.msra.mxu0 0.0
    %221 = vmatprep.subr.mxu0 0.0
    %222 = vmatpush1.msra.mxu0 0.0
    %223 = vmatprep.subr.mxu0 0.0
    %224 = vmatpush1.msra.mxu0 0.0
    %225 = vmatprep.subr.mxu0 0.0
    %226 = vmatpush1.msra.mxu0 0.0
    %227 = vmatprep.subr.mxu0 0.0
    %228 = vmatpush1.msra.mxu0 0.0
    %229 = vmatprep.subr.mxu0 0.0
    %230 = vmatpush1.msra.mxu0 0.0
    %231 = vmatprep.subr.mxu0 0.0
    %232 = vmatpush1.msra.mxu0 0.0
    %233 = vmatprep.subr.mxu0 0.0
    %234 = vmatpush1.msra.mxu0 0.0
    %235 = vmatprep.subr.mxu0 0.0
    %236 = vmatpush1.msra.mxu0 0.0
    %237 = vmatprep.subr.mxu0 0.0
    %238 = vmatpush1.msra.mxu0 0.0
    %239 = vmatprep.subr.mxu0 0.0
    %240 = vmatpush1.msra.mxu0 0.0
    %241 = vmatprep.subr.mxu0 0.0
    %242 = vmatpush1.msra.mxu0 0.0
    %243 = vmatprep.subr.mxu0 0.0
    %244 = vmatpush1.msra.mxu0 0.0
    %245 = vmatprep.subr.mxu0 0.0
    %246 = vmatpush1.msra.mxu0 0.0
    %247 = vmatprep.subr.mxu0 0.0
    %248 = vmatpush1.msra.mxu0 0.0
    %249 = vmatprep.subr.mxu0 0.0
    %250 = vmatpush1.msra.mxu0 0.0
    %251 = vmatprep.subr.mxu0 0.0
    %252 = vmatpush1.msra.mxu0 0.0
    %253 = vmatprep.subr.mxu0 0.0
    %254 = vmatpush1.msra.mxu0 0.0
    %255 = vmatprep.mubr.f32.mxu0 0.0
    %256 = vmatmul.mubr.f32.gmra.mrb[0].mxu0 %v189
    %v257 = vpop.f32.mrb[0].mxu0
    %v258 = vadd.f32 0.0, %v257
    %v259 = vpop.f32.mrb[0].mxu0
    %260 = vdwg.mxu0
    %261 = vmatprep.subr.mxu0 0.0
    %262 = vmatpush1.msra.mxu0 %v32
    %263 = vmatprep.subr.mxu0 0.0
    %264 = vmatpush1.msra.mxu0 %v33
    %265 = vmatprep.subr.mxu0 0.0
    %266 = vmatpush1.msra.mxu0 0.0
    %267 = vmatprep.subr.mxu0 0.0
    %268 = vmatpush1.msra.mxu0 0.0
    %269 = vmatprep.subr.mxu0 0.0
    %270 = vmatpush1.msra.mxu0 0.0
    %271 = vmatprep.subr.mxu0 0.0
    %272 = vmatpush1.msra.mxu0 0.0
    %273 = vmatprep.subr.mxu0 0.0
    %274 = vmatpush1.msra.mxu0 0.0
    %275 = vmatprep.subr.mxu0 0.0
    %276 = vmatpush1.msra.mxu0 0.0
    %277 = vmatprep.subr.mxu0 0.0
    %278 = vmatpush1.msra.mxu0 0.0
    %279 = vmatprep.subr.mxu0 0.0
    %280 = vmatpush1.msra.mxu0 0.0
    %281 = vmatprep.subr.mxu0 0.0
    %282 = vmatpush1.msra.mxu0 0.0
    %283 = vmatprep.subr.mxu0 0.0
    %284 = vmatpush1.msra.mxu0 0.0
    %285 = vmatprep.subr.mxu0 0.0
    %286 = vmatpush1.msra.mxu0 0.0
    %287 = vmatprep.subr.mxu0 0.0
    %288 = vmatpush1.msra.mxu0 0.0
    %289 = vmatprep.subr.mxu0 0.0
    %290 = vmatpush1.msra.mxu0 0.0
    %291 = vmatprep.subr.mxu0 0.0
    %292 = vmatpush1.msra.mxu0 0.0
    %293 = vmatprep.subr.mxu0 0.0
    %294 = vmatpush1.msra.mxu0 0.0
    %295 = vmatprep.subr.mxu0 0.0
    %296 = vmatpush1.msra.mxu0 0.0
    %297 = vmatprep.subr.mxu0 0.0
    %298 = vmatpush1.msra.mxu0 0.0
    %299 = vmatprep.subr.mxu0 0.0
    %300 = vmatpush1.msra.mxu0 0.0
    %301 = vmatprep.subr.mxu0 0.0
    %302 = vmatpush1.msra.mxu0 0.0
    %303 = vmatprep.subr.mxu0 0.0
    %304 = vmatpush1.msra.mxu0 0.0
    %305 = vmatprep.subr.mxu0 0.0
    %306 = vmatpush1.msra.mxu0 0.0
    %307 = vmatprep.subr.mxu0 0.0
    %308 = vmatpush1.msra.mxu0 0.0
    %309 = vmatprep.subr.mxu0 0.0
    %310 = vmatpush1.msra.mxu0 0.0
    %311 = vmatprep.subr.mxu0 0.0
    %312 = vmatpush1.msra.mxu0 0.0
    %313 = vmatprep.subr.mxu0 0.0
    %314 = vmatpush1.msra.mxu0 0.0
    %315 = vmatprep.subr.mxu0 0.0
    %316 = vmatpush1.msra.mxu0 0.0
    %317 = vmatprep.subr.mxu0 0.0
    %318 = vmatpush1.msra.mxu0 0.0
    %319 = vmatprep.subr.mxu0 0.0
    %320 = vmatpush1.msra.mxu0 0.0
    %321 = vmatprep.subr.mxu0 0.0
    %322 = vmatpush1.msra.mxu0 0.0
    %323 = vmatprep.subr.mxu0 0.0
    %324 = vmatpush1.msra.mxu0 0.0
    %325 = vmatprep.mubr.f32.mxu0 0.0
    %326 = vmatmul.mubr.f32.gmra.mrb[0].mxu0 %v189
    %v327 = vpop.f32.mrb[0].mxu0
    %v328 = vadd.f32 0.0, %v327
    %v329 = vpop.f32.mrb[0].mxu0
    %330 = vdwg.mxu0
    %v331 = vadd.s32 %v38, 1
    %vm332 = vcmp.eq.s32.totalorder %v37, %v331
    %v333 = vsel %vm332, 1.0, 0.0
    %v335 = vsel %vm42, %v333, 0
    %337 = vmatprep.subr.mxu0 0.0
    %338 = vmatpush1.msra.mxu0 %v30
    %339 = vmatprep.subr.mxu0 0.0
    %340 = vmatpush1.msra.mxu0 %v31
    %341 = vmatprep.subr.mxu0 0.0
    %342 = vmatpush1.msra.mxu0 0.0
    %343 = vmatprep.subr.mxu0 0.0
    %344 = vmatpush1.msra.mxu0 0.0
    %345 = vmatprep.subr.mxu0 0.0
    %346 = vmatpush1.msra.mxu0 0.0
    %347 = vmatprep.subr.mxu0 0.0
    %348 = vmatpush1.msra.mxu0 0.0
    %349 = vmatprep.subr.mxu0 0.0
    %350 = vmatpush1.msra.mxu0 0.0
    %351 = vmatprep.subr.mxu0 0.0
    %352 = vmatpush1.msra.mxu0 0.0
    %353 = vmatprep.subr.mxu0 0.0
    %354 = vmatpush1.msra.mxu0 0.0
    %355 = vmatprep.subr.mxu0 0.0
    %356 = vmatpush1.msra.mxu0 0.0
    %357 = vmatprep.subr.mxu0 0.0
    %358 = vmatpush1.msra.mxu0 0.0
    %359 = vmatprep.subr.mxu0 0.0
    %360 = vmatpush1.msra.mxu0 0.0
    %361 = vmatprep.subr.mxu0 0.0
    %362 = vmatpush1.msra.mxu0 0.0
    %363 = vmatprep.subr.mxu0 0.0
    %364 = vmatpush1.msra.mxu0 0.0
    %365 = vmatprep.subr.mxu0 0.0
    %366 = vmatpush1.msra.mxu0 0.0
    %367 = vmatprep.subr.mxu0 0.0
    %368 = vmatpush1.msra.mxu0 0.0
    %369 = vmatprep.subr.mxu0 0.0
    %370 = vmatpush1.msra.mxu0 0.0
    %371 = vmatprep.subr.mxu0 0.0
    %372 = vmatpush1.msra.mxu0 0.0
    %373 = vmatprep.subr.mxu0 0.0
    %374 = vmatpush1.msra.mxu0 0.0
    %375 = vmatprep.subr.mxu0 0.0
    %376 = vmatpush1.msra.mxu0 0.0
    %377 = vmatprep.subr.mxu0 0.0
    %378 = vmatpush1.msra.mxu0 0.0
    %379 = vmatprep.subr.mxu0 0.0
    %380 = vmatpush1.msra.mxu0 0.0
    %381 = vmatprep.subr.mxu0 0.0
    %382 = vmatpush1.msra.mxu0 0.0
    %383 = vmatprep.subr.mxu0 0.0
    %384 = vmatpush1.msra.mxu0 0.0
    %385 = vmatprep.subr.mxu0 0.0
    %386 = vmatpush1.msra.mxu0 0.0
    %387 = vmatprep.subr.mxu0 0.0
    %388 = vmatpush1.msra.mxu0 0.0
    %389 = vmatprep.subr.mxu0 0.0
    %390 = vmatpush1.msra.mxu0 0.0
    %391 = vmatprep.subr.mxu0 0.0
    %392 = vmatpush1.msra.mxu0 0.0
    %393 = vmatprep.subr.mxu0 0.0
    %394 = vmatpush1.msra.mxu0 0.0
    %395 = vmatprep.subr.mxu0 0.0
    %396 = vmatpush1.msra.mxu0 0.0
    %397 = vmatprep.subr.mxu0 0.0
    %398 = vmatpush1.msra.mxu0 0.0
    %399 = vmatprep.subr.mxu0 0.0
    %400 = vmatpush1.msra.mxu0 0.0
    %401 = vmatprep.mubr.f32.mxu0 0.0
    %402 = vmatmul.mubr.f32.gmra.mrb[0].mxu0 %v335
    %v403 = vpop.f32.mrb[0].mxu0
    %v404 = vadd.f32 0.0, %v403
    %v405 = vpop.f32.mrb[0].mxu0
    %406 = vdwg.mxu0
    %407 = vmatprep.subr.mxu0 0.0
    %408 = vmatpush1.msra.mxu0 %v32
    %409 = vmatprep.subr.mxu0 0.0
    %410 = vmatpush1.msra.mxu0 %v33
    %411 = vmatprep.subr.mxu0 0.0
    %412 = vmatpush1.msra.mxu0 0.0
    %413 = vmatprep.subr.mxu0 0.0
    %414 = vmatpush1.msra.mxu0 0.0
    %415 = vmatprep.subr.mxu0 0.0
    %416 = vmatpush1.msra.mxu0 0.0
    %417 = vmatprep.subr.mxu0 0.0
    %418 = vmatpush1.msra.mxu0 0.0
    %419 = vmatprep.subr.mxu0 0.0
    %420 = vmatpush1.msra.mxu0 0.0
    %421 = vmatprep.subr.mxu0 0.0
    %422 = vmatpush1.msra.mxu0 0.0
    %423 = vmatprep.subr.mxu0 0.0
    %424 = vmatpush1.msra.mxu0 0.0
    %425 = vmatprep.subr.mxu0 0.0
    %426 = vmatpush1.msra.mxu0 0.0
    %427 = vmatprep.subr.mxu0 0.0
    %428 = vmatpush1.msra.mxu0 0.0
    %429 = vmatprep.subr.mxu0 0.0
    %430 = vmatpush1.msra.mxu0 0.0
    %431 = vmatprep.subr.mxu0 0.0
    %432 = vmatpush1.msra.mxu0 0.0
    %433 = vmatprep.subr.mxu0 0.0
    %434 = vmatpush1.msra.mxu0 0.0
    %435 = vmatprep.subr.mxu0 0.0
    %436 = vmatpush1.msra.mxu0 0.0
    %437 = vmatprep.subr.mxu0 0.0
    %438 = vmatpush1.msra.mxu0 0.0
    %439 = vmatprep.subr.mxu0 0.0
    %440 = vmatpush1.msra.mxu0 0.0
    %441 = vmatprep.subr.mxu0 0.0
    %442 = vmatpush1.msra.mxu0 0.0
    %443 = vmatprep.subr.mxu0 0.0
    %444 = vmatpush1.msra.mxu0 0.0
    %445 = vmatprep.subr.mxu0 0.0
    %446 = vmatpush1.msra.mxu0 0.0
    %447 = vmatprep.subr.mxu0 0.0
    %448 = vmatpush1.msra.mxu0 0.0
    %449 = vmatprep.subr.mxu0 0.0
    %450 = vmatpush1.msra.mxu0 0.0
    %451 = vmatprep.subr.mxu0 0.0
    %452 = vmatpush1.msra.mxu0 0.0
    %453 = vmatprep.subr.mxu0 0.0
    %454 = vmatpush1.msra.mxu0 0.0
    %455 = vmatprep.subr.mxu0 0.0
    %456 = vmatpush1.msra.mxu0 0.0
    %457 = vmatprep.subr.mxu0 0.0
    %458 = vmatpush1.msra.mxu0 0.0
    %459 = vmatprep.subr.mxu0 0.0
    %460 = vmatpush1.msra.mxu0 0.0
    %461 = vmatprep.subr.mxu0 0.0
    %462 = vmatpush1.msra.mxu0 0.0
    %463 = vmatprep.subr.mxu0 0.0
    %464 = vmatpush1.msra.mxu0 0.0
    %465 = vmatprep.subr.mxu0 0.0
    %466 = vmatpush1.msra.mxu0 0.0
    %467 = vmatprep.subr.mxu0 0.0
    %468 = vmatpush1.msra.mxu0 0.0
    %469 = vmatprep.subr.mxu0 0.0
    %470 = vmatpush1.msra.mxu0 0.0
    %471 = vmatprep.mubr.f32.mxu0 0.0
    %472 = vmatmul.mubr.f32.gmra.mrb[0].mxu0 %v335
    %v473 = vpop.f32.mrb[0].mxu0
    %v474 = vadd.f32 0.0, %v473
    %v475 = vpop.f32.mrb[0].mxu0
    %476 = vdwg.mxu0
    %479 = vrot.lane.b32.xlu0 %v258, 12
    %v480 = vpop.permute.xlu0 %479
    %481 = vrot.lane.b32.xlu0 %v328, 12
    %v482 = vpop.permute.xlu0 %481
    %487 = vrot.lane.b32.xlu0 %v404, 24
    %v488 = vpop.permute.xlu0 %487
    %489 = vrot.lane.b32.xlu0 %v474, 24
    %v490 = vpop.permute.xlu0 %489
    %vm493 = vcmask 97280
    %v494 = vsel %vm493, %v113, %v480
    %v495 = vsel %vm493, %v183, %v482
    %vm496 = vcmask 195584
    %v497 = vsel %vm496, %v494, %v488
    %v498 = vsel %vm496, %v495, %v490
    %v499 = vld [vmem:[#allocation2] sm:$0xf]
    %v500 = vld [vmem:[#allocation2 + $0x4] sm:$0xf]
    %v501 = vld [vmem:[#allocation2 + $0x8] sm:$0xf]
    %v502 = vld [vmem:[#allocation2 + $0xc] sm:$0xf]
    %v503 = vld [vmem:[#allocation2 + $0x10] sm:$0xf]
    %v504 = vpack.c.bf16 %v497, %v497
    %v505 = vpack.c.bf16 %v498, %v498
    %v506 = vld [vmem:[%s2] sm:$0x1]
    %v507 = vlaneseq
    %v508 = vshrl.u32 %v507, 7
    %v509 = vsub.s32 0, %v508
    %v510 = vrot.slane %v506, %v509
    %v516 = vunpack.c.l.b16 %v499
    %v517 = vunpack.c.l.b16 %v500
    %v518 = vunpack.c.l.b16 %v501
    %v519 = vunpack.c.l.b16 %v502
    %v520 = vunpack.c.l.b16 %v503
    %v521 = vpack.c.b16 %v517, %v516
    %v522 = vpack.c.b16 %v519, %v518
    %v523 = vpack.c.b16 %v520, %v520
    %vm526 = vcmask 293888
    %v528 = vsel %vm526, %v504, 0
    %vm530 = vcmask 1041408
    %v532 = vsel %vm530, %v523, 0
    %534 = vmatprep.subr.bf16.mxu0 0
    %535 = vmatpush1.bf16.msra.mxu0 %v521
    %536 = vmatprep.subr.bf16.mxu0 0
    %537 = vmatpush1.bf16.msra.mxu0 %v522
    %538 = vmatprep.subr.bf16.mxu0 0
    %539 = vmatpush1.bf16.msra.mxu0 %v532
    %540 = vmatprep.subr.bf16.mxu0 0
    %541 = vmatpush1.bf16.msra.mxu0 0
    %542 = vmatprep.subr.bf16.mxu0 0
    %543 = vmatpush1.bf16.msra.mxu0 0
    %544 = vmatprep.subr.bf16.mxu0 0
    %545 = vmatpush1.bf16.msra.mxu0 0
    %546 = vmatprep.subr.bf16.mxu0 0
    %547 = vmatpush1.bf16.msra.mxu0 0
    %548 = vmatprep.subr.bf16.mxu0 0
    %549 = vmatpush1.bf16.msra.mxu0 0
    %550 = vmatprep.subr.bf16.mxu0 0
    %551 = vmatpush1.bf16.msra.mxu0 0
    %552 = vmatprep.subr.bf16.mxu0 0
    %553 = vmatpush1.bf16.msra.mxu0 0
    %554 = vmatprep.subr.bf16.mxu0 0
    %555 = vmatpush1.bf16.msra.mxu0 0
    %556 = vmatprep.subr.bf16.mxu0 0
    %557 = vmatpush1.bf16.msra.mxu0 0
    %558 = vmatprep.subr.bf16.mxu0 0
    %559 = vmatpush1.bf16.msra.mxu0 0
    %560 = vmatprep.subr.bf16.mxu0 0
    %561 = vmatpush1.bf16.msra.mxu0 0
    %562 = vmatprep.subr.bf16.mxu0 0
    %563 = vmatpush1.bf16.msra.mxu0 0
    %564 = vmatprep.subr.bf16.mxu0 0
    %565 = vmatpush1.bf16.msra.mxu0 0
    %566 = vmatprep.mubr.bf16.mxu0 0
    %567 = vmatmul.mubr.bf16.gmra.mrb[0].mxu0 %v528
    %v568 = vpop.f32.mrb[0].mxu0
    %v569 = vadd.f32 %v510, %v568
    %v570 = vpop.f32.mrb[0].mxu0
    %v571 = vpop.f32.mrb[0].mxu0
    %v572 = vpop.f32.mrb[0].mxu0
    %573 = vdwg.mxu0
    %v575 = vsel %vm526, %v505, 0
    %577 = vmatprep.subr.bf16.mxu0 0
    %578 = vmatpush1.bf16.msra.mxu0 %v521
    %579 = vmatprep.subr.bf16.mxu0 0
    %580 = vmatpush1.bf16.msra.mxu0 %v522
    %581 = vmatprep.subr.bf16.mxu0 0
    %582 = vmatpush1.bf16.msra.mxu0 %v532
    %583 = vmatprep.subr.bf16.mxu0 0
    %584 = vmatpush1.bf16.msra.mxu0 0
    %585 = vmatprep.subr.bf16.mxu0 0
    %586 = vmatpush1.bf16.msra.mxu0 0
    %587 = vmatprep.subr.bf16.mxu0 0
    %588 = vmatpush1.bf16.msra.mxu0 0
    %589 = vmatprep.subr.bf16.mxu0 0
    %590 = vmatpush1.bf16.msra.mxu0 0
    %591 = vmatprep.subr.bf16.mxu0 0
    %592 = vmatpush1.bf16.msra.mxu0 0
    %593 = vmatprep.subr.bf16.mxu0 0
    %594 = vmatpush1.bf16.msra.mxu0 0
    %595 = vmatprep.subr.bf16.mxu0 0
    %596 = vmatpush1.bf16.msra.mxu0 0
    %597 = vmatprep.subr.bf16.mxu0 0
    %598 = vmatpush1.bf16.msra.mxu0 0
    %599 = vmatprep.subr.bf16.mxu0 0
    %600 = vmatpush1.bf16.msra.mxu0 0
    %601 = vmatprep.subr.bf16.mxu0 0
    %602 = vmatpush1.bf16.msra.mxu0 0
    %603 = vmatprep.subr.bf16.mxu0 0
    %604 = vmatpush1.bf16.msra.mxu0 0
    %605 = vmatprep.subr.bf16.mxu0 0
    %606 = vmatpush1.bf16.msra.mxu0 0
    %607 = vmatprep.subr.bf16.mxu0 0
    %608 = vmatpush1.bf16.msra.mxu0 0
    %609 = vmatprep.mubr.bf16.mxu0 0
    %610 = vmatmul.mubr.bf16.gmra.mrb[0].mxu0 %v575
    %v611 = vpop.f32.mrb[0].mxu0
    %v612 = vadd.f32 %v510, %v611
    %v613 = vpop.f32.mrb[0].mxu0
    %v614 = vpop.f32.mrb[0].mxu0
    %v615 = vpop.f32.mrb[0].mxu0
    %616 = vdwg.mxu0
    %vm617 = vcmp.ge.f32.partialorder %v569, 0.0
    %vm618 = vcmp.ge.f32.partialorder %v612, 0.0
    %v619 = vmul.f32 %v569, 0.2
    %v620 = vmul.f32 %v612, 0.2
    %v621 = vsel %vm617, %v569, %v619
    %v622 = vsel %vm618, %v612, %v620
    %vm623 = vcmask 64512
    %v624 = vsel %vm623, %v41, 0
    %626 = vmatprep.subr.mxu0 0.0
    %627 = vmatpush1.msra.mxu0 %v621
    %628 = vmatprep.subr.mxu0 0.0
    %629 = vmatpush1.msra.mxu0 0.0
    %630 = vmatprep.subr.mxu0 0.0
    %631 = vmatpush1.msra.mxu0 0.0
    %632 = vmatprep.subr.mxu0 0.0
    %633 = vmatpush1.msra.mxu0 0.0
    %634 = vmatprep.subr.mxu0 0.0
    %635 = vmatpush1.msra.mxu0 0.0
    %636 = vmatprep.subr.mxu0 0.0
    %637 = vmatpush1.msra.mxu0 0.0
    %638 = vmatprep.subr.mxu0 0.0
    %639 = vmatpush1.msra.mxu0 0.0
    %640 = vmatprep.subr.mxu0 0.0
    %641 = vmatpush1.msra.mxu0 0.0
    %642 = vmatprep.subr.mxu0 0.0
    %643 = vmatpush1.msra.mxu0 0.0
    %644 = vmatprep.subr.mxu0 0.0
    %645 = vmatpush1.msra.mxu0 0.0
    %646 = vmatprep.subr.mxu0 0.0
    %647 = vmatpush1.msra.mxu0 0.0
    %648 = vmatprep.subr.mxu0 0.0
    %649 = vmatpush1.msra.mxu0 0.0
    %650 = vmatprep.subr.mxu0 0.0
    %651 = vmatpush1.msra.mxu0 0.0
    %652 = vmatprep.subr.mxu0 0.0
    %653 = vmatpush1.msra.mxu0 0.0
    %654 = vmatprep.subr.mxu0 0.0
    %655 = vmatpush1.msra.mxu0 0.0
    %656 = vmatprep.subr.mxu0 0.0
    %657 = vmatpush1.msra.mxu0 0.0
    %658 = vmatprep.subr.mxu0 0.0
    %659 = vmatpush1.msra.mxu0 0.0
    %660 = vmatprep.subr.mxu0 0.0
    %661 = vmatpush1.msra.mxu0 0.0
    %662 = vmatprep.subr.mxu0 0.0
    %663 = vmatpush1.msra.mxu0 0.0
    %664 = vmatprep.subr.mxu0 0.0
    %665 = vmatpush1.msra.mxu0 0.0
    %666 = vmatprep.subr.mxu0 0.0
    %667 = vmatpush1.msra.mxu0 0.0
    %668 = vmatprep.subr.mxu0 0.0
    %669 = vmatpush1.msra.mxu0 0.0
    %670 = vmatprep.subr.mxu0 0.0
    %671 = vmatpush1.msra.mxu0 0.0
    %672 = vmatprep.subr.mxu0 0.0
    %673 = vmatpush1.msra.mxu0 0.0
    %674 = vmatprep.subr.mxu0 0.0
    %675 = vmatpush1.msra.mxu0 0.0
    %676 = vmatprep.subr.mxu0 0.0
    %677 = vmatpush1.msra.mxu0 0.0
    %678 = vmatprep.subr.mxu0 0.0
    %679 = vmatpush1.msra.mxu0 0.0
    %680 = vmatprep.subr.mxu0 0.0
    %681 = vmatpush1.msra.mxu0 0.0
    %682 = vmatprep.subr.mxu0 0.0
    %683 = vmatpush1.msra.mxu0 0.0
    %684 = vmatprep.subr.mxu0 0.0
    %685 = vmatpush1.msra.mxu0 0.0
    %686 = vmatprep.subr.mxu0 0.0
    %687 = vmatpush1.msra.mxu0 0.0
    %688 = vmatprep.subr.mxu0 0.0
    %689 = vmatpush1.msra.mxu0 0.0
    %690 = vmatprep.mubr.f32.mxu0 0.0
    %691 = vmatmul.mubr.f32.gmra.mrb[0].mxu0 %v624
    %v692 = vpop.f32.mrb[0].mxu0
    %v693 = vadd.f32 0.0, %v692
    %v694 = vpop.f32.mrb[0].mxu0
    %695 = vdwg.mxu0
    %696 = vmatprep.subr.mxu0 0.0
    %697 = vmatpush1.msra.mxu0 %v622
    %698 = vmatprep.subr.mxu0 0.0
    %699 = vmatpush1.msra.mxu0 0.0
    %700 = vmatprep.subr.mxu0 0.0
    %701 = vmatpush1.msra.mxu0 0.0
    %702 = vmatprep.subr.mxu0 0.0
    %703 = vmatpush1.msra.mxu0 0.0
    %704 = vmatprep.subr.mxu0 0.0
    %705 = vmatpush1.msra.mxu0 0.0
    %706 = vmatprep.subr.mxu0 0.0
    %707 = vmatpush1.msra.mxu0 0.0
    %708 = vmatprep.subr.mxu0 0.0
    %709 = vmatpush1.msra.mxu0 0.0
    %710 = vmatprep.subr.mxu0 0.0
    %711 = vmatpush1.msra.mxu0 0.0
    %712 = vmatprep.subr.mxu0 0.0
    %713 = vmatpush1.msra.mxu0 0.0
    %714 = vmatprep.subr.mxu0 0.0
    %715 = vmatpush1.msra.mxu0 0.0
    %716 = vmatprep.subr.mxu0 0.0
    %717 = vmatpush1.msra.mxu0 0.0
    %718 = vmatprep.subr.mxu0 0.0
    %719 = vmatpush1.msra.mxu0 0.0
    %720 = vmatprep.subr.mxu0 0.0
    %721 = vmatpush1.msra.mxu0 0.0
    %722 = vmatprep.subr.mxu0 0.0
    %723 = vmatpush1.msra.mxu0 0.0
    %724 = vmatprep.subr.mxu0 0.0
    %725 = vmatpush1.msra.mxu0 0.0
    %726 = vmatprep.subr.mxu0 0.0
    %727 = vmatpush1.msra.mxu0 0.0
    %728 = vmatprep.subr.mxu0 0.0
    %729 = vmatpush1.msra.mxu0 0.0
    %730 = vmatprep.subr.mxu0 0.0
    %731 = vmatpush1.msra.mxu0 0.0
    %732 = vmatprep.subr.mxu0 0.0
    %733 = vmatpush1.msra.mxu0 0.0
    %734 = vmatprep.subr.mxu0 0.0
    %735 = vmatpush1.msra.mxu0 0.0
    %736 = vmatprep.subr.mxu0 0.0
    %737 = vmatpush1.msra.mxu0 0.0
    %738 = vmatprep.subr.mxu0 0.0
    %739 = vmatpush1.msra.mxu0 0.0
    %740 = vmatprep.subr.mxu0 0.0
    %741 = vmatpush1.msra.mxu0 0.0
    %742 = vmatprep.subr.mxu0 0.0
    %743 = vmatpush1.msra.mxu0 0.0
    %744 = vmatprep.subr.mxu0 0.0
    %745 = vmatpush1.msra.mxu0 0.0
    %746 = vmatprep.subr.mxu0 0.0
    %747 = vmatpush1.msra.mxu0 0.0
    %748 = vmatprep.subr.mxu0 0.0
    %749 = vmatpush1.msra.mxu0 0.0
    %750 = vmatprep.subr.mxu0 0.0
    %751 = vmatpush1.msra.mxu0 0.0
    %752 = vmatprep.subr.mxu0 0.0
    %753 = vmatpush1.msra.mxu0 0.0
    %754 = vmatprep.subr.mxu0 0.0
    %755 = vmatpush1.msra.mxu0 0.0
    %756 = vmatprep.subr.mxu0 0.0
    %757 = vmatpush1.msra.mxu0 0.0
    %758 = vmatprep.subr.mxu0 0.0
    %759 = vmatpush1.msra.mxu0 0.0
    %760 = vmatprep.mubr.f32.mxu0 0.0
    %761 = vmatmul.mubr.f32.gmra.mrb[0].mxu0 %v624
    %v762 = vpop.f32.mrb[0].mxu0
    %v763 = vadd.f32 0.0, %v762
    %v764 = vpop.f32.mrb[0].mxu0
    %765 = vdwg.mxu0
    %v766 = vsel %vm623, %v187, 0
    %768 = vmatprep.subr.mxu0 0.0
    %769 = vmatpush1.msra.mxu0 %v621
    %770 = vmatprep.subr.mxu0 0.0
    %771 = vmatpush1.msra.mxu0 0.0
    %772 = vmatprep.subr.mxu0 0.0
    %773 = vmatpush1.msra.mxu0 0.0
    %774 = vmatprep.subr.mxu0 0.0
    %775 = vmatpush1.msra.mxu0 0.0
    %776 = vmatprep.subr.mxu0 0.0
    %777 = vmatpush1.msra.mxu0 0.0
    %778 = vmatprep.subr.mxu0 0.0
    %779 = vmatpush1.msra.mxu0 0.0
    %780 = vmatprep.subr.mxu0 0.0
    %781 = vmatpush1.msra.mxu0 0.0
    %782 = vmatprep.subr.mxu0 0.0
    %783 = vmatpush1.msra.mxu0 0.0
    %784 = vmatprep.subr.mxu0 0.0
    %785 = vmatpush1.msra.mxu0 0.0
    %786 = vmatprep.subr.mxu0 0.0
    %787 = vmatpush1.msra.mxu0 0.0
    %788 = vmatprep.subr.mxu0 0.0
    %789 = vmatpush1.msra.mxu0 0.0
    %790 = vmatprep.subr.mxu0 0.0
    %791 = vmatpush1.msra.mxu0 0.0
    %792 = vmatprep.subr.mxu0 0.0
    %793 = vmatpush1.msra.mxu0 0.0
    %794 = vmatprep.subr.mxu0 0.0
    %795 = vmatpush1.msra.mxu0 0.0
    %796 = vmatprep.subr.mxu0 0.0
    %797 = vmatpush1.msra.mxu0 0.0
    %798 = vmatprep.subr.mxu0 0.0
    %799 = vmatpush1.msra.mxu0 0.0
    %800 = vmatprep.subr.mxu0 0.0
    %801 = vmatpush1.msra.mxu0 0.0
    %802 = vmatprep.subr.mxu0 0.0
    %803 = vmatpush1.msra.mxu0 0.0
    %804 = vmatprep.subr.mxu0 0.0
    %805 = vmatpush1.msra.mxu0 0.0
    %806 = vmatprep.subr.mxu0 0.0
    %807 = vmatpush1.msra.mxu0 0.0
    %808 = vmatprep.subr.mxu0 0.0
    %809 = vmatpush1.msra.mxu0 0.0
    %810 = vmatprep.subr.mxu0 0.0
    %811 = vmatpush1.msra.mxu0 0.0
    %812 = vmatprep.subr.mxu0 0.0
    %813 = vmatpush1.msra.mxu0 0.0
    %814 = vmatprep.subr.mxu0 0.0
    %815 = vmatpush1.msra.mxu0 0.0
    %816 = vmatprep.subr.mxu0 0.0
    %817 = vmatpush1.msra.mxu0 0.0
    %818 = vmatprep.subr.mxu0 0.0
    %819 = vmatpush1.msra.mxu0 0.0
    %820 = vmatprep.subr.mxu0 0.0
    %821 = vmatpush1.msra.mxu0 0.0
    %822 = vmatprep.subr.mxu0 0.0
    %823 = vmatpush1.msra.mxu0 0.0
    %824 = vmatprep.subr.mxu0 0.0
    %825 = vmatpush1.msra.mxu0 0.0
    %826 = vmatprep.subr.mxu0 0.0
    %827 = vmatpush1.msra.mxu0 0.0
    %828 = vmatprep.subr.mxu0 0.0
    %829 = vmatpush1.msra.mxu0 0.0
    %830 = vmatprep.subr.mxu0 0.0
    %831 = vmatpush1.msra.mxu0 0.0
    %832 = vmatprep.mubr.f32.mxu0 0.0
    %833 = vmatmul.mubr.f32.gmra.mrb[0].mxu0 %v766
    %v834 = vpop.f32.mrb[0].mxu0
    %v835 = vadd.f32 0.0, %v834
    %v836 = vpop.f32.mrb[0].mxu0
    %837 = vdwg.mxu0
    %838 = vmatprep.subr.mxu0 0.0
    %839 = vmatpush1.msra.mxu0 %v622
    %840 = vmatprep.subr.mxu0 0.0
    %841 = vmatpush1.msra.mxu0 0.0
    %842 = vmatprep.subr.mxu0 0.0
    %843 = vmatpush1.msra.mxu0 0.0
    %844 = vmatprep.subr.mxu0 0.0
    %845 = vmatpush1.msra.mxu0 0.0
    %846 = vmatprep.subr.mxu0 0.0
    %847 = vmatpush1.msra.mxu0 0.0
    %848 = vmatprep.subr.mxu0 0.0
    %849 = vmatpush1.msra.mxu0 0.0
    %850 = vmatprep.subr.mxu0 0.0
    %851 = vmatpush1.msra.mxu0 0.0
    %852 = vmatprep.subr.mxu0 0.0
    %853 = vmatpush1.msra.mxu0 0.0
    %854 = vmatprep.subr.mxu0 0.0
    %855 = vmatpush1.msra.mxu0 0.0
    %856 = vmatprep.subr.mxu0 0.0
    %857 = vmatpush1.msra.mxu0 0.0
    %858 = vmatprep.subr.mxu0 0.0
    %859 = vmatpush1.msra.mxu0 0.0
    %860 = vmatprep.subr.mxu0 0.0
    %861 = vmatpush1.msra.mxu0 0.0
    %862 = vmatprep.subr.mxu0 0.0
    %863 = vmatpush1.msra.mxu0 0.0
    %864 = vmatprep.subr.mxu0 0.0
    %865 = vmatpush1.msra.mxu0 0.0
    %866 = vmatprep.subr.mxu0 0.0
    %867 = vmatpush1.msra.mxu0 0.0
    %868 = vmatprep.subr.mxu0 0.0
    %869 = vmatpush1.msra.mxu0 0.0
    %870 = vmatprep.subr.mxu0 0.0
    %871 = vmatpush1.msra.mxu0 0.0
    %872 = vmatprep.subr.mxu0 0.0
    %873 = vmatpush1.msra.mxu0 0.0
    %874 = vmatprep.subr.mxu0 0.0
    %875 = vmatpush1.msra.mxu0 0.0
    %876 = vmatprep.subr.mxu0 0.0
    %877 = vmatpush1.msra.mxu0 0.0
    %878 = vmatprep.subr.mxu0 0.0
    %879 = vmatpush1.msra.mxu0 0.0
    %880 = vmatprep.subr.mxu0 0.0
    %881 = vmatpush1.msra.mxu0 0.0
    %882 = vmatprep.subr.mxu0 0.0
    %883 = vmatpush1.msra.mxu0 0.0
    %884 = vmatprep.subr.mxu0 0.0
    %885 = vmatpush1.msra.mxu0 0.0
    %886 = vmatprep.subr.mxu0 0.0
    %887 = vmatpush1.msra.mxu0 0.0
    %888 = vmatprep.subr.mxu0 0.0
    %889 = vmatpush1.msra.mxu0 0.0
    %890 = vmatprep.subr.mxu0 0.0
    %891 = vmatpush1.msra.mxu0 0.0
    %892 = vmatprep.subr.mxu0 0.0
    %893 = vmatpush1.msra.mxu0 0.0
    %894 = vmatprep.subr.mxu0 0.0
    %895 = vmatpush1.msra.mxu0 0.0
    %896 = vmatprep.subr.mxu0 0.0
    %897 = vmatpush1.msra.mxu0 0.0
    %898 = vmatprep.subr.mxu0 0.0
    %899 = vmatpush1.msra.mxu0 0.0
    %900 = vmatprep.subr.mxu0 0.0
    %901 = vmatpush1.msra.mxu0 0.0
    %902 = vmatprep.mubr.f32.mxu0 0.0
    %903 = vmatmul.mubr.f32.gmra.mrb[0].mxu0 %v766
    %v904 = vpop.f32.mrb[0].mxu0
    %v905 = vadd.f32 0.0, %v904
    %v906 = vpop.f32.mrb[0].mxu0
    %907 = vdwg.mxu0
    %v908 = vsel %vm623, %v333, 0
    %910 = vmatprep.subr.mxu0 0.0
    %911 = vmatpush1.msra.mxu0 %v621
    %912 = vmatprep.subr.mxu0 0.0
    %913 = vmatpush1.msra.mxu0 0.0
    %914 = vmatprep.subr.mxu0 0.0
    %915 = vmatpush1.msra.mxu0 0.0
    %916 = vmatprep.subr.mxu0 0.0
    %917 = vmatpush1.msra.mxu0 0.0
    %918 = vmatprep.subr.mxu0 0.0
    %919 = vmatpush1.msra.mxu0 0.0
    %920 = vmatprep.subr.mxu0 0.0
    %921 = vmatpush1.msra.mxu0 0.0
    %922 = vmatprep.subr.mxu0 0.0
    %923 = vmatpush1.msra.mxu0 0.0
    %924 = vmatprep.subr.mxu0 0.0
    %925 = vmatpush1.msra.mxu0 0.0
    %926 = vmatprep.subr.mxu0 0.0
    %927 = vmatpush1.msra.mxu0 0.0
    %928 = vmatprep.subr.mxu0 0.0
    %929 = vmatpush1.msra.mxu0 0.0
    %930 = vmatprep.subr.mxu0 0.0
    %931 = vmatpush1.msra.mxu0 0.0
    %932 = vmatprep.subr.mxu0 0.0
    %933 = vmatpush1.msra.mxu0 0.0
    %934 = vmatprep.subr.mxu0 0.0
    %935 = vmatpush1.msra.mxu0 0.0
    %936 = vmatprep.subr.mxu0 0.0
    %937 = vmatpush1.msra.mxu0 0.0
    %938 = vmatprep.subr.mxu0 0.0
    %939 = vmatpush1.msra.mxu0 0.0
    %940 = vmatprep.subr.mxu0 0.0
    %941 = vmatpush1.msra.mxu0 0.0
    %942 = vmatprep.subr.mxu0 0.0
    %943 = vmatpush1.msra.mxu0 0.0
    %944 = vmatprep.subr.mxu0 0.0
    %945 = vmatpush1.msra.mxu0 0.0
    %946 = vmatprep.subr.mxu0 0.0
    %947 = vmatpush1.msra.mxu0 0.0
    %948 = vmatprep.subr.mxu0 0.0
    %949 = vmatpush1.msra.mxu0 0.0
    %950 = vmatprep.subr.mxu0 0.0
    %951 = vmatpush1.msra.mxu0 0.0
    %952 = vmatprep.subr.mxu0 0.0
    %953 = vmatpush1.msra.mxu0 0.0
    %954 = vmatprep.subr.mxu0 0.0
    %955 = vmatpush1.msra.mxu0 0.0
    %956 = vmatprep.subr.mxu0 0.0
    %957 = vmatpush1.msra.mxu0 0.0
    %958 = vmatprep.subr.mxu0 0.0
    %959 = vmatpush1.msra.mxu0 0.0
    %960 = vmatprep.subr.mxu0 0.0
    %961 = vmatpush1.msra.mxu0 0.0
    %962 = vmatprep.subr.mxu0 0.0
    %963 = vmatpush1.msra.mxu0 0.0
    %964 = vmatprep.subr.mxu0 0.0
    %965 = vmatpush1.msra.mxu0 0.0
    %966 = vmatprep.subr.mxu0 0.0
    %967 = vmatpush1.msra.mxu0 0.0
    %968 = vmatprep.subr.mxu0 0.0
    %969 = vmatpush1.msra.mxu0 0.0
    %970 = vmatprep.subr.mxu0 0.0
    %971 = vmatpush1.msra.mxu0 0.0
    %972 = vmatprep.subr.mxu0 0.0
    %973 = vmatpush1.msra.mxu0 0.0
    %974 = vmatprep.mubr.f32.mxu0 0.0
    %975 = vmatmul.mubr.f32.gmra.mrb[0].mxu0 %v908
    %v976 = vpop.f32.mrb[0].mxu0
    %v977 = vadd.f32 0.0, %v976
    %v978 = vpop.f32.mrb[0].mxu0
    %979 = vdwg.mxu0
    %980 = vmatprep.subr.mxu0 0.0
    %981 = vmatpush1.msra.mxu0 %v622
    %982 = vmatprep.subr.mxu0 0.0
    %983 = vmatpush1.msra.mxu0 0.0
    %984 = vmatprep.subr.mxu0 0.0
    %985 = vmatpush1.msra.mxu0 0.0
    %986 = vmatprep.subr.mxu0 0.0
    %987 = vmatpush1.msra.mxu0 0.0
    %988 = vmatprep.subr.mxu0 0.0
    %989 = vmatpush1.msra.mxu0 0.0
    %990 = vmatprep.subr.mxu0 0.0
    %991 = vmatpush1.msra.mxu0 0.0
    %992 = vmatprep.subr.mxu0 0.0
    %993 = vmatpush1.msra.mxu0 0.0
    %994 = vmatprep.subr.mxu0 0.0
    %995 = vmatpush1.msra.mxu0 0.0
    %996 = vmatprep.subr.mxu0 0.0
    %997 = vmatpush1.msra.mxu0 0.0
    %998 = vmatprep.subr.mxu0 0.0
    %999 = vmatpush1.msra.mxu0 0.0
    %1000 = vmatprep.subr.mxu0 0.0
    %1001 = vmatpush1.msra.mxu0 0.0
    %1002 = vmatprep.subr.mxu0 0.0
    %1003 = vmatpush1.msra.mxu0 0.0
    %1004 = vmatprep.subr.mxu0 0.0
    %1005 = vmatpush1.msra.mxu0 0.0
    %1006 = vmatprep.subr.mxu0 0.0
    %1007 = vmatpush1.msra.mxu0 0.0
    %1008 = vmatprep.subr.mxu0 0.0
    %1009 = vmatpush1.msra.mxu0 0.0
    %1010 = vmatprep.subr.mxu0 0.0
    %1011 = vmatpush1.msra.mxu0 0.0
    %1012 = vmatprep.subr.mxu0 0.0
    %1013 = vmatpush1.msra.mxu0 0.0
    %1014 = vmatprep.subr.mxu0 0.0
    %1015 = vmatpush1.msra.mxu0 0.0
    %1016 = vmatprep.subr.mxu0 0.0
    %1017 = vmatpush1.msra.mxu0 0.0
    %1018 = vmatprep.subr.mxu0 0.0
    %1019 = vmatpush1.msra.mxu0 0.0
    %1020 = vmatprep.subr.mxu0 0.0
    %1021 = vmatpush1.msra.mxu0 0.0
    %1022 = vmatprep.subr.mxu0 0.0
    %1023 = vmatpush1.msra.mxu0 0.0
    %1024 = vmatprep.subr.mxu0 0.0
    %1025 = vmatpush1.msra.mxu0 0.0
    %1026 = vmatprep.subr.mxu0 0.0
    %1027 = vmatpush1.msra.mxu0 0.0
    %1028 = vmatprep.subr.mxu0 0.0
    %1029 = vmatpush1.msra.mxu0 0.0
    %1030 = vmatprep.subr.mxu0 0.0
    %1031 = vmatpush1.msra.mxu0 0.0
    %1032 = vmatprep.subr.mxu0 0.0
    %1033 = vmatpush1.msra.mxu0 0.0
    %1034 = vmatprep.subr.mxu0 0.0
    %1035 = vmatpush1.msra.mxu0 0.0
    %1036 = vmatprep.subr.mxu0 0.0
    %1037 = vmatpush1.msra.mxu0 0.0
    %1038 = vmatprep.subr.mxu0 0.0
    %1039 = vmatpush1.msra.mxu0 0.0
    %1040 = vmatprep.subr.mxu0 0.0
    %1041 = vmatpush1.msra.mxu0 0.0
    %1042 = vmatprep.subr.mxu0 0.0
    %1043 = vmatpush1.msra.mxu0 0.0
    %1044 = vmatprep.mubr.f32.mxu0 0.0
    %1045 = vmatmul.mubr.f32.gmra.mrb[0].mxu0 %v908
    %v1046 = vpop.f32.mrb[0].mxu0
    %v1047 = vadd.f32 0.0, %v1046
    %v1048 = vpop.f32.mrb[0].mxu0
    %1049 = vdwg.mxu0
    %1052 = vrot.lane.b32.xlu0 %v835, 32
    %v1053 = vpop.permute.xlu0 %1052
    %1054 = vrot.lane.b32.xlu0 %v905, 32
    %v1055 = vpop.permute.xlu0 %1054
    %1060 = vrot.lane.b32.xlu0 %v977, 64
    %v1061 = vpop.permute.xlu0 %1060
    %1062 = vrot.lane.b32.xlu0 %v1047, 64
    %v1063 = vpop.permute.xlu0 %1062
    %vm1066 = vcmask 261120
    %v1067 = vsel %vm1066, %v693, %v1053
    %v1068 = vsel %vm1066, %v763, %v1055
    %vm1069 = vcmask 523264
    %v1070 = vsel %vm1069, %v1067, %v1061
    %v1071 = vsel %vm1069, %v1068, %v1063
    %s1072 = scalar_lea.vmem [#allocation2], 192
    %v1073 = vld [vmem:[%s1072] sm:$0xf]
    %v1074 = vld [vmem:[%s1072 + $0x4] sm:$0xf]
    %v1075 = vld [vmem:[%s1072 + $0x8] sm:$0xf]
    %v1076 = vld [vmem:[%s1072 + $0xc] sm:$0xf]
    %v1077 = vld [vmem:[%s1072 + $0x10] sm:$0xf]
    %v1078 = vld [vmem:[%s1072 + $0x14] sm:$0xf]
    %v1079 = vld [vmem:[%s1072 + $0x18] sm:$0xf]
    %v1080 = vld [vmem:[%s1072 + $0x1c] sm:$0xf]
    %v1081 = vld [vmem:[%s1072 + $0x20] sm:$0xf]
    %v1082 = vld [vmem:[%s1072 + $0x24] sm:$0xf]
    %v1083 = vld [vmem:[%s1072 + $0x28] sm:$0xf]
    %v1084 = vld [vmem:[%s1072 + $0x2c] sm:$0xf]
    %v1085 = vpack.c.bf16 %v1070, %v1070
    %v1086 = vpack.c.bf16 %v1071, %v1071
    %v1087 = vld [vmem:[%s2 + $0x1] sm:$0x1]
    %v1088 = vlaneseq
    %v1089 = vshrl.u32 %v1088, 7
    %v1090 = vsub.s32 0, %v1089
    %v1091 = vrot.slane %v1087, %v1090
    %v1104 = vunpack.c.l.b16 %v1073
    %v1105 = vunpack.c.l.b16 %v1074
    %v1106 = vunpack.c.l.b16 %v1075
    %v1107 = vunpack.c.l.b16 %v1076
    %v1108 = vunpack.c.l.b16 %v1077
    %v1109 = vunpack.c.l.b16 %v1078
    %v1110 = vunpack.c.l.b16 %v1079
    %v1111 = vunpack.c.l.b16 %v1080
    %v1112 = vunpack.c.l.b16 %v1081
    %v1113 = vunpack.c.l.b16 %v1082
    %v1114 = vunpack.c.l.b16 %v1083
    %v1115 = vunpack.c.l.b16 %v1084
    %v1116 = vpack.c.b16 %v1105, %v1104
    %v1117 = vpack.c.b16 %v1107, %v1106
    %v1118 = vpack.c.b16 %v1109, %v1108
    %v1119 = vpack.c.b16 %v1111, %v1110
    %v1120 = vpack.c.b16 %v1113, %v1112
    %v1121 = vpack.c.b16 %v1115, %v1114
    %vm1128 = vcmask 785408
    %v1130 = vsel %vm1128, %v1085, 0
    %1132 = vmatprep.subr.bf16.mxu0 0
    %1133 = vmatpush1.bf16.msra.mxu0 %v1116
    %1134 = vmatprep.subr.bf16.mxu0 0
    %1135 = vmatpush1.bf16.msra.mxu0 %v1117
    %1136 = vmatprep.subr.bf16.mxu0 0
    %1137 = vmatpush1.bf16.msra.mxu0 %v1118
    %1138 = vmatprep.subr.bf16.mxu0 0
    %1139 = vmatpush1.bf16.msra.mxu0 %v1119
    %1140 = vmatprep.subr.bf16.mxu0 0
    %1141 = vmatpush1.bf16.msra.mxu0 %v1120
    %1142 = vmatprep.subr.bf16.mxu0 0
    %1143 = vmatpush1.bf16.msra.mxu0 %v1121
    %1144 = vmatprep.subr.bf16.mxu0 0
    %1145 = vmatpush1.bf16.msra.mxu0 0
    %1146 = vmatprep.subr.bf16.mxu0 0
    %1147 = vmatpush1.bf16.msra.mxu0 0
    %1148 = vmatprep.subr.bf16.mxu0 0
    %1149 = vmatpush1.bf16.msra.mxu0 0
    %1150 = vmatprep.subr.bf16.mxu0 0
    %1151 = vmatpush1.bf16.msra.mxu0 0
    %1152 = vmatprep.subr.bf16.mxu0 0
    %1153 = vmatpush1.bf16.msra.mxu0 0
    %1154 = vmatprep.subr.bf16.mxu0 0
    %1155 = vmatpush1.bf16.msra.mxu0 0
    %1156 = vmatprep.subr.bf16.mxu0 0
    %1157 = vmatpush1.bf16.msra.mxu0 0
    %1158 = vmatprep.subr.bf16.mxu0 0
    %1159 = vmatpush1.bf16.msra.mxu0 0
    %1160 = vmatprep.subr.bf16.mxu0 0
    %1161 = vmatpush1.bf16.msra.mxu0 0
    %1162 = vmatprep.subr.bf16.mxu0 0
    %1163 = vmatpush1.bf16.msra.mxu0 0
    %1164 = vmatprep.mubr.bf16.mxu0 0
    %1165 = vmatmul.mubr.bf16.gmra.mrb[0].mxu0 %v1130
    %v1166 = vpop.f32.mrb[0].mxu0
    %v1167 = vadd.f32 %v1091, %v1166
    %v1168 = vpop.f32.mrb[0].mxu0
    %v1169 = vpop.f32.mrb[0].mxu0
    %v1170 = vpop.f32.mrb[0].mxu0
    %1171 = vdwg.mxu0
    %v1173 = vsel %vm1128, %v1086, 0
    %1175 = vmatprep.subr.bf16.mxu0 0
    %1176 = vmatpush1.bf16.msra.mxu0 %v1116
    %1177 = vmatprep.subr.bf16.mxu0 0
    %1178 = vmatpush1.bf16.msra.mxu0 %v1117
    %1179 = vmatprep.subr.bf16.mxu0 0
    %1180 = vmatpush1.bf16.msra.mxu0 %v1118
    %1181 = vmatprep.subr.bf16.mxu0 0
    %1182 = vmatpush1.bf16.msra.mxu0 %v1119
    %1183 = vmatprep.subr.bf16.mxu0 0
    %1184 = vmatpush1.bf16.msra.mxu0 %v1120
    %1185 = vmatprep.subr.bf16.mxu0 0
    %1186 = vmatpush1.bf16.msra.mxu0 %v1121
    %1187 = vmatprep.subr.bf16.mxu0 0
    %1188 = vmatpush1.bf16.msra.mxu0 0
    %1189 = vmatprep.subr.bf16.mxu0 0
    %1190 = vmatpush1.bf16.msra.mxu0 0
    %1191 = vmatprep.subr.bf16.mxu0 0
    %1192 = vmatpush1.bf16.msra.mxu0 0
    %1193 = vmatprep.subr.bf16.mxu0 0
    %1194 = vmatpush1.bf16.msra.mxu0 0
    %1195 = vmatprep.subr.bf16.mxu0 0
    %1196 = vmatpush1.bf16.msra.mxu0 0
    %1197 = vmatprep.subr.bf16.mxu0 0
    %1198 = vmatpush1.bf16.msra.mxu0 0
    %1199 = vmatprep.subr.bf16.mxu0 0
    %1200 = vmatpush1.bf16.msra.mxu0 0
    %1201 = vmatprep.subr.bf16.mxu0 0
    %1202 = vmatpush1.bf16.msra.mxu0 0
    %1203 = vmatprep.subr.bf16.mxu0 0
    %1204 = vmatpush1.bf16.msra.mxu0 0
    %1205 = vmatprep.subr.bf16.mxu0 0
    %1206 = vmatpush1.bf16.msra.mxu0 0
    %1207 = vmatprep.mubr.bf16.mxu0 0
    %1208 = vmatmul.mubr.bf16.gmra.mrb[0].mxu0 %v1173
    %v1209 = vpop.f32.mrb[0].mxu0
    %v1210 = vadd.f32 %v1091, %v1209
    %v1211 = vpop.f32.mrb[0].mxu0
    %v1212 = vpop.f32.mrb[0].mxu0
    %v1213 = vpop.f32.mrb[0].mxu0
    %1214 = vdwg.mxu0
    %v1215 = vld [vmem:[%s2 + $0x2] sm:$0x1]
    %v1216 = vld [vmem:[%s2 + $0x3] sm:$0x1]
    %vm1217 = vcmask 519168
    %v1218 = vsel %vm1217, %v1167, 0.0
    %v1219 = vsel %vm1217, %v1210, 0.0
    %v1220 = vadd.f32 %v1218, %v1219
    %v1221 = vrot.slane %v1220, 4
    %v1222 = vadd.f32 %v1220, %v1221
    %v1223 = vrot.slane %v1222, 2
    %v1224 = vadd.f32 %v1222, %v1223
    %v1225 = vrot.slane %v1224, 1
    %v1226 = vadd.f32 %v1224, %v1225
    %v1227 = vrcp.pop 8.0
    %v1228 = vmul.f32 %v1226, %v1227
    %v1229 = vsub.f32 %v1167, %v1228
    %v1230 = vsub.f32 %v1210, %v1228
    %v1231 = vmul.f32 %v1229, %v1229
    %v1232 = vmul.f32 %v1230, %v1230
    %v1233 = vsel %vm1217, %v1231, 0.0
    %v1234 = vsel %vm1217, %v1232, 0.0
    %v1235 = vadd.f32 %v1233, %v1234
    %v1236 = vrot.slane %v1235, 4
    %v1237 = vadd.f32 %v1235, %v1236
    %v1238 = vrot.slane %v1237, 2
    %v1239 = vadd.f32 %v1237, %v1238
    %v1240 = vrot.slane %v1239, 1
    %v1241 = vadd.f32 %v1239, %v1240
    %v1242 = vmul.f32 %v1241, %v1227
    %v1243 = vadd.f32 %v1242, 1e-05
    %v1244 = vrsqrt.pop %v1243
    %v1245 = vmul.f32 %v1229, %v1244
    %v1246 = vmul.f32 %v1230, %v1244
    %v1247 = vlaneseq
    %v1248 = vshrl.u32 %v1247, 7
    %v1249 = vsub.s32 0, %v1248
    %v1250 = vrot.slane %v1215, %v1249
    %v1251 = vmul.f32 %v1245, %v1250
    %v1252 = vmul.f32 %v1246, %v1250
    %v1253 = vlaneseq
    %v1254 = vshrl.u32 %v1253, 7
    %v1255 = vsub.s32 0, %v1254
    %v1256 = vrot.slane %v1216, %v1255
    %v1257 = vadd.f32 %v1251, %v1256
    %v1258 = vadd.f32 %v1252, %v1256
    %vm1259 = vcmp.ge.f32.partialorder %v1257, 0.0
    %vm1260 = vcmp.ge.f32.partialorder %v1258, 0.0
    %v1261 = vmul.f32 %v1257, 0.2
    %v1262 = vmul.f32 %v1258, 0.2
    %v1263 = vsel %vm1259, %v1257, %v1261
    %v1264 = vsel %vm1260, %v1258, %v1262
    %vm1265 = vcmask 31744
    %v1266 = vsel %vm1265, %v41, 0
    %vm1268 = vcmask 1043456
    %v1270 = vsel %vm1268, %v1263, 0
    %1272 = vmatprep.subr.mxu0 0.0
    %1273 = vmatpush1.msra.mxu0 %v1270
    %1274 = vmatprep.subr.mxu0 0.0
    %1275 = vmatpush1.msra.mxu0 0.0
    %1276 = vmatprep.subr.mxu0 0.0
    %1277 = vmatpush1.msra.mxu0 0.0
    %1278 = vmatprep.subr.mxu0 0.0
    %1279 = vmatpush1.msra.mxu0 0.0
    %1280 = vmatprep.subr.mxu0 0.0
    %1281 = vmatpush1.msra.mxu0 0.0
    %1282 = vmatprep.subr.mxu0 0.0
    %1283 = vmatpush1.msra.mxu0 0.0
    %1284 = vmatprep.subr.mxu0 0.0
    %1285 = vmatpush1.msra.mxu0 0.0
    %1286 = vmatprep.subr.mxu0 0.0
    %1287 = vmatpush1.msra.mxu0 0.0
    %1288 = vmatprep.subr.mxu0 0.0
    %1289 = vmatpush1.msra.mxu0 0.0
    %1290 = vmatprep.subr.mxu0 0.0
    %1291 = vmatpush1.msra.mxu0 0.0
    %1292 = vmatprep.subr.mxu0 0.0
    %1293 = vmatpush1.msra.mxu0 0.0
    %1294 = vmatprep.subr.mxu0 0.0
    %1295 = vmatpush1.msra.mxu0 0.0
    %1296 = vmatprep.subr.mxu0 0.0
    %1297 = vmatpush1.msra.mxu0 0.0
    %1298 = vmatprep.subr.mxu0 0.0
    %1299 = vmatpush1.msra.mxu0 0.0
    %1300 = vmatprep.subr.mxu0 0.0
    %1301 = vmatpush1.msra.mxu0 0.0
    %1302 = vmatprep.subr.mxu0 0.0
    %1303 = vmatpush1.msra.mxu0 0.0
    %1304 = vmatprep.subr.mxu0 0.0
    %1305 = vmatpush1.msra.mxu0 0.0
    %1306 = vmatprep.subr.mxu0 0.0
    %1307 = vmatpush1.msra.mxu0 0.0
    %1308 = vmatprep.subr.mxu0 0.0
    %1309 = vmatpush1.msra.mxu0 0.0
    %1310 = vmatprep.subr.mxu0 0.0
    %1311 = vmatpush1.msra.mxu0 0.0
    %1312 = vmatprep.subr.mxu0 0.0
    %1313 = vmatpush1.msra.mxu0 0.0
    %1314 = vmatprep.subr.mxu0 0.0
    %1315 = vmatpush1.msra.mxu0 0.0
    %1316 = vmatprep.subr.mxu0 0.0
    %1317 = vmatpush1.msra.mxu0 0.0
    %1318 = vmatprep.subr.mxu0 0.0
    %1319 = vmatpush1.msra.mxu0 0.0
    %1320 = vmatprep.subr.mxu0 0.0
    %1321 = vmatpush1.msra.mxu0 0.0
    %1322 = vmatprep.subr.mxu0 0.0
    %1323 = vmatpush1.msra.mxu0 0.0
    %1324 = vmatprep.subr.mxu0 0.0
    %1325 = vmatpush1.msra.mxu0 0.0
    %1326 = vmatprep.subr.mxu0 0.0
    %1327 = vmatpush1.msra.mxu0 0.0
    %1328 = vmatprep.subr.mxu0 0.0
    %1329 = vmatpush1.msra.mxu0 0.0
    %1330 = vmatprep.subr.mxu0 0.0
    %1331 = vmatpush1.msra.mxu0 0.0
    %1332 = vmatprep.subr.mxu0 0.0
    %1333 = vmatpush1.msra.mxu0 0.0
    %1334 = vmatprep.subr.mxu0 0.0
    %1335 = vmatpush1.msra.mxu0 0.0
    %1336 = vmatprep.mubr.f32.mxu0 0.0
    %1337 = vmatmul.mubr.f32.gmra.mrb[0].mxu0 %v1266
    %v1338 = vpop.f32.mrb[0].mxu0
    %v1339 = vadd.f32 0.0, %v1338
    %v1340 = vpop.f32.mrb[0].mxu0
    %1341 = vdwg.mxu0
    %v1343 = vsel %vm1268, %v1264, 0
    %1345 = vmatprep.subr.mxu0 0.0
    %1346 = vmatpush1.msra.mxu0 %v1343
    %1347 = vmatprep.subr.mxu0 0.0
    %1348 = vmatpush1.msra.mxu0 0.0
    %1349 = vmatprep.subr.mxu0 0.0
    %1350 = vmatpush1.msra.mxu0 0.0
    %1351 = vmatprep.subr.mxu0 0.0
    %1352 = vmatpush1.msra.mxu0 0.0
    %1353 = vmatprep.subr.mxu0 0.0
    %1354 = vmatpush1.msra.mxu0 0.0
    %1355 = vmatprep.subr.mxu0 0.0
    %1356 = vmatpush1.msra.mxu0 0.0
    %1357 = vmatprep.subr.mxu0 0.0
    %1358 = vmatpush1.msra.mxu0 0.0
    %1359 = vmatprep.subr.mxu0 0.0
    %1360 = vmatpush1.msra.mxu0 0.0
    %1361 = vmatprep.subr.mxu0 0.0
    %1362 = vmatpush1.msra.mxu0 0.0
    %1363 = vmatprep.subr.mxu0 0.0
    %1364 = vmatpush1.msra.mxu0 0.0
    %1365 = vmatprep.subr.mxu0 0.0
    %1366 = vmatpush1.msra.mxu0 0.0
    %1367 = vmatprep.subr.mxu0 0.0
    %1368 = vmatpush1.msra.mxu0 0.0
    %1369 = vmatprep.subr.mxu0 0.0
    %1370 = vmatpush1.msra.mxu0 0.0
    %1371 = vmatprep.subr.mxu0 0.0
    %1372 = vmatpush1.msra.mxu0 0.0
    %1373 = vmatprep.subr.mxu0 0.0
    %1374 = vmatpush1.msra.mxu0 0.0
    %1375 = vmatprep.subr.mxu0 0.0
    %1376 = vmatpush1.msra.mxu0 0.0
    %1377 = vmatprep.subr.mxu0 0.0
    %1378 = vmatpush1.msra.mxu0 0.0
    %1379 = vmatprep.subr.mxu0 0.0
    %1380 = vmatpush1.msra.mxu0 0.0
    %1381 = vmatprep.subr.mxu0 0.0
    %1382 = vmatpush1.msra.mxu0 0.0
    %1383 = vmatprep.subr.mxu0 0.0
    %1384 = vmatpush1.msra.mxu0 0.0
    %1385 = vmatprep.subr.mxu0 0.0
    %1386 = vmatpush1.msra.mxu0 0.0
    %1387 = vmatprep.subr.mxu0 0.0
    %1388 = vmatpush1.msra.mxu0 0.0
    %1389 = vmatprep.subr.mxu0 0.0
    %1390 = vmatpush1.msra.mxu0 0.0
    %1391 = vmatprep.subr.mxu0 0.0
    %1392 = vmatpush1.msra.mxu0 0.0
    %1393 = vmatprep.subr.mxu0 0.0
    %1394 = vmatpush1.msra.mxu0 0.0
    %1395 = vmatprep.subr.mxu0 0.0
    %1396 = vmatpush1.msra.mxu0 0.0
    %1397 = vmatprep.subr.mxu0 0.0
    %1398 = vmatpush1.msra.mxu0 0.0
    %1399 = vmatprep.subr.mxu0 0.0
    %1400 = vmatpush1.msra.mxu0 0.0
    %1401 = vmatprep.subr.mxu0 0.0
    %1402 = vmatpush1.msra.mxu0 0.0
    %1403 = vmatprep.subr.mxu0 0.0
    %1404 = vmatpush1.msra.mxu0 0.0
    %1405 = vmatprep.subr.mxu0 0.0
    %1406 = vmatpush1.msra.mxu0 0.0
    %1407 = vmatprep.subr.mxu0 0.0
    %1408 = vmatpush1.msra.mxu0 0.0
    %1409 = vmatprep.mubr.f32.mxu0 0.0
    %1410 = vmatmul.mubr.f32.gmra.mrb[0].mxu0 %v1266
    %v1411 = vpop.f32.mrb[0].mxu0
    %v1412 = vadd.f32 0.0, %v1411
    %v1413 = vpop.f32.mrb[0].mxu0
    %1414 = vdwg.mxu0
    %v1415 = vsel %vm1265, %v187, 0
    %1417 = vmatprep.subr.mxu0 0.0
    %1418 = vmatpush1.msra.mxu0 %v1270
    %1419 = vmatprep.subr.mxu0 0.0
    %1420 = vmatpush1.msra.mxu0 0.0
    %1421 = vmatprep.subr.mxu0 0.0
    %1422 = vmatpush1.msra.mxu0 0.0
    %1423 = vmatprep.subr.mxu0 0.0
    %1424 = vmatpush1.msra.mxu0 0.0
    %1425 = vmatprep.subr.mxu0 0.0
    %1426 = vmatpush1.msra.mxu0 0.0
    %1427 = vmatprep.subr.mxu0 0.0
    %1428 = vmatpush1.msra.mxu0 0.0
    %1429 = vmatprep.subr.mxu0 0.0
    %1430 = vmatpush1.msra.mxu0 0.0
    %1431 = vmatprep.subr.mxu0 0.0
    %1432 = vmatpush1.msra.mxu0 0.0
    %1433 = vmatprep.subr.mxu0 0.0
    %1434 = vmatpush1.msra.mxu0 0.0
    %1435 = vmatprep.subr.mxu0 0.0
    %1436 = vmatpush1.msra.mxu0 0.0
    %1437 = vmatprep.subr.mxu0 0.0
    %1438 = vmatpush1.msra.mxu0 0.0
    %1439 = vmatprep.subr.mxu0 0.0
    %1440 = vmatpush1.msra.mxu0 0.0
    %1441 = vmatprep.subr.mxu0 0.0
    %1442 = vmatpush1.msra.mxu0 0.0
    %1443 = vmatprep.subr.mxu0 0.0
    %1444 = vmatpush1.msra.mxu0 0.0
    %1445 = vmatprep.subr.mxu0 0.0
    %1446 = vmatpush1.msra.mxu0 0.0
    %1447 = vmatprep.subr.mxu0 0.0
    %1448 = vmatpush1.msra.mxu0 0.0
    %1449 = vmatprep.subr.mxu0 0.0
    %1450 = vmatpush1.msra.mxu0 0.0
    %1451 = vmatprep.subr.mxu0 0.0
    %1452 = vmatpush1.msra.mxu0 0.0
    %1453 = vmatprep.subr.mxu0 0.0
    %1454 = vmatpush1.msra.mxu0 0.0
    %1455 = vmatprep.subr.mxu0 0.0
    %1456 = vmatpush1.msra.mxu0 0.0
    %1457 = vmatprep.subr.mxu0 0.0
    %1458 = vmatpush1.msra.mxu0 0.0
    %1459 = vmatprep.subr.mxu0 0.0
    %1460 = vmatpush1.msra.mxu0 0.0
    %1461 = vmatprep.subr.mxu0 0.0
    %1462 = vmatpush1.msra.mxu0 0.0
    %1463 = vmatprep.subr.mxu0 0.0
    %1464 = vmatpush1.msra.mxu0 0.0
    %1465 = vmatprep.subr.mxu0 0.0
    %1466 = vmatpush1.msra.mxu0 0.0
    %1467 = vmatprep.subr.mxu0 0.0
    %1468 = vmatpush1.msra.mxu0 0.0
    %1469 = vmatprep.subr.mxu0 0.0
    %1470 = vmatpush1.msra.mxu0 0.0
    %1471 = vmatprep.subr.mxu0 0.0
    %1472 = vmatpush1.msra.mxu0 0.0
    %1473 = vmatprep.subr.mxu0 0.0
    %1474 = vmatpush1.msra.mxu0 0.0
    %1475 = vmatprep.subr.mxu0 0.0
    %1476 = vmatpush1.msra.mxu0 0.0
    %1477 = vmatprep.subr.mxu0 0.0
    %1478 = vmatpush1.msra.mxu0 0.0
    %1479 = vmatprep.subr.mxu0 0.0
    %1480 = vmatpush1.msra.mxu0 0.0
    %1481 = vmatprep.mubr.f32.mxu0 0.0
    %1482 = vmatmul.mubr.f32.gmra.mrb[0].mxu0 %v1415
    %v1483 = vpop.f32.mrb[0].mxu0
    %v1484 = vadd.f32 0.0, %v1483
    %v1485 = vpop.f32.mrb[0].mxu0
    %1486 = vdwg.mxu0
    %1487 = vmatprep.subr.mxu0 0.0
    %1488 = vmatpush1.msra.mxu0 %v1343
    %1489 = vmatprep.subr.mxu0 0.0
    %1490 = vmatpush1.msra.mxu0 0.0
    %1491 = vmatprep.subr.mxu0 0.0
    %1492 = vmatpush1.msra.mxu0 0.0
    %1493 = vmatprep.subr.mxu0 0.0
    %1494 = vmatpush1.msra.mxu0 0.0
    %1495 = vmatprep.subr.mxu0 0.0
    %1496 = vmatpush1.msra.mxu0 0.0
    %1497 = vmatprep.subr.mxu0 0.0
    %1498 = vmatpush1.msra.mxu0 0.0
    %1499 = vmatprep.subr.mxu0 0.0
    %1500 = vmatpush1.msra.mxu0 0.0
    %1501 = vmatprep.subr.mxu0 0.0
    %1502 = vmatpush1.msra.mxu0 0.0
    %1503 = vmatprep.subr.mxu0 0.0
    %1504 = vmatpush1.msra.mxu0 0.0
    %1505 = vmatprep.subr.mxu0 0.0
    %1506 = vmatpush1.msra.mxu0 0.0
    %1507 = vmatprep.subr.mxu0 0.0
    %1508 = vmatpush1.msra.mxu0 0.0
    %1509 = vmatprep.subr.mxu0 0.0
    %1510 = vmatpush1.msra.mxu0 0.0
    %1511 = vmatprep.subr.mxu0 0.0
    %1512 = vmatpush1.msra.mxu0 0.0
    %1513 = vmatprep.subr.mxu0 0.0
    %1514 = vmatpush1.msra.mxu0 0.0
    %1515 = vmatprep.subr.mxu0 0.0
    %1516 = vmatpush1.msra.mxu0 0.0
    %1517 = vmatprep.subr.mxu0 0.0
    %1518 = vmatpush1.msra.mxu0 0.0
    %1519 = vmatprep.subr.mxu0 0.0
    %1520 = vmatpush1.msra.mxu0 0.0
    %1521 = vmatprep.subr.mxu0 0.0
    %1522 = vmatpush1.msra.mxu0 0.0
    %1523 = vmatprep.subr.mxu0 0.0
    %1524 = vmatpush1.msra.mxu0 0.0
    %1525 = vmatprep.subr.mxu0 0.0
    %1526 = vmatpush1.msra.mxu0 0.0
    %1527 = vmatprep.subr.mxu0 0.0
    %1528 = vmatpush1.msra.mxu0 0.0
    %1529 = vmatprep.subr.mxu0 0.0
    %1530 = vmatpush1.msra.mxu0 0.0
    %1531 = vmatprep.subr.mxu0 0.0
    %1532 = vmatpush1.msra.mxu0 0.0
    %1533 = vmatprep.subr.mxu0 0.0
    %1534 = vmatpush1.msra.mxu0 0.0
    %1535 = vmatprep.subr.mxu0 0.0
    %1536 = vmatpush1.msra.mxu0 0.0
    %1537 = vmatprep.subr.mxu0 0.0
    %1538 = vmatpush1.msra.mxu0 0.0
    %1539 = vmatprep.subr.mxu0 0.0
    %1540 = vmatpush1.msra.mxu0 0.0
    %1541 = vmatprep.subr.mxu0 0.0
    %1542 = vmatpush1.msra.mxu0 0.0
    %1543 = vmatprep.subr.mxu0 0.0
    %1544 = vmatpush1.msra.mxu0 0.0
    %1545 = vmatprep.subr.mxu0 0.0
    %1546 = vmatpush1.msra.mxu0 0.0
    %1547 = vmatprep.subr.mxu0 0.0
    %1548 = vmatpush1.msra.mxu0 0.0
    %1549 = vmatprep.subr.mxu0 0.0
    %1550 = vmatpush1.msra.mxu0 0.0
    %1551 = vmatprep.mubr.f32.mxu0 0.0
    %1552 = vmatmul.mubr.f32.gmra.mrb[0].mxu0 %v1415
    %v1553 = vpop.f32.mrb[0].mxu0
    %v1554 = vadd.f32 0.0, %v1553
    %v1555 = vpop.f32.mrb[0].mxu0
    %1556 = vdwg.mxu0
    %v1557 = vsel %vm1265, %v333, 0
    %1559 = vmatprep.subr.mxu0 0.0
    %1560 = vmatpush1.msra.mxu0 %v1270
    %1561 = vmatprep.subr.mxu0 0.0
    %1562 = vmatpush1.msra.mxu0 0.0
    %1563 = vmatprep.subr.mxu0 0.0
    %1564 = vmatpush1.msra.mxu0 0.0
    %1565 = vmatprep.subr.mxu0 0.0
    %1566 = vmatpush1.msra.mxu0 0.0
    %1567 = vmatprep.subr.mxu0 0.0
    %1568 = vmatpush1.msra.mxu0 0.0
    %1569 = vmatprep.subr.mxu0 0.0
    %1570 = vmatpush1.msra.mxu0 0.0
    %1571 = vmatprep.subr.mxu0 0.0
    %1572 = vmatpush1.msra.mxu0 0.0
    %1573 = vmatprep.subr.mxu0 0.0
    %1574 = vmatpush1.msra.mxu0 0.0
    %1575 = vmatprep.subr.mxu0 0.0
    %1576 = vmatpush1.msra.mxu0 0.0
    %1577 = vmatprep.subr.mxu0 0.0
    %1578 = vmatpush1.msra.mxu0 0.0
    %1579 = vmatprep.subr.mxu0 0.0
    %1580 = vmatpush1.msra.mxu0 0.0
    %1581 = vmatprep.subr.mxu0 0.0
    %1582 = vmatpush1.msra.mxu0 0.0
    %1583 = vmatprep.subr.mxu0 0.0
    %1584 = vmatpush1.msra.mxu0 0.0
    %1585 = vmatprep.subr.mxu0 0.0
    %1586 = vmatpush1.msra.mxu0 0.0
    %1587 = vmatprep.subr.mxu0 0.0
    %1588 = vmatpush1.msra.mxu0 0.0
    %1589 = vmatprep.subr.mxu0 0.0
    %1590 = vmatpush1.msra.mxu0 0.0
    %1591 = vmatprep.subr.mxu0 0.0
    %1592 = vmatpush1.msra.mxu0 0.0
    %1593 = vmatprep.subr.mxu0 0.0
    %1594 = vmatpush1.msra.mxu0 0.0
    %1595 = vmatprep.subr.mxu0 0.0
    %1596 = vmatpush1.msra.mxu0 0.0
    %1597 = vmatprep.subr.mxu0 0.0
    %1598 = vmatpush1.msra.mxu0 0.0
    %1599 = vmatprep.subr.mxu0 0.0
    %1600 = vmatpush1.msra.mxu0 0.0
    %1601 = vmatprep.subr.mxu0 0.0
    %1602 = vmatpush1.msra.mxu0 0.0
    %1603 = vmatprep.subr.mxu0 0.0
    %1604 = vmatpush1.msra.mxu0 0.0
    %1605 = vmatprep.subr.mxu0 0.0
    %1606 = vmatpush1.msra.mxu0 0.0
    %1607 = vmatprep.subr.mxu0 0.0
    %1608 = vmatpush1.msra.mxu0 0.0
    %1609 = vmatprep.subr.mxu0 0.0
    %1610 = vmatpush1.msra.mxu0 0.0
    %1611 = vmatprep.subr.mxu0 0.0
    %1612 = vmatpush1.msra.mxu0 0.0
    %1613 = vmatprep.subr.mxu0 0.0
    %1614 = vmatpush1.msra.mxu0 0.0
    %1615 = vmatprep.subr.mxu0 0.0
    %1616 = vmatpush1.msra.mxu0 0.0
    %1617 = vmatprep.subr.mxu0 0.0
    %1618 = vmatpush1.msra.mxu0 0.0
    %1619 = vmatprep.subr.mxu0 0.0
    %1620 = vmatpush1.msra.mxu0 0.0
    %1621 = vmatprep.subr.mxu0 0.0
    %1622 = vmatpush1.msra.mxu0 0.0
    %1623 = vmatprep.mubr.f32.mxu0 0.0
    %1624 = vmatmul.mubr.f32.gmra.mrb[0].mxu0 %v1557
    %v1625 = vpop.f32.mrb[0].mxu0
    %v1626 = vadd.f32 0.0, %v1625
    %v1627 = vpop.f32.mrb[0].mxu0
    %1628 = vdwg.mxu0
    %1629 = vmatprep.subr.mxu0 0.0
    %1630 = vmatpush1.msra.mxu0 %v1343
    %1631 = vmatprep.subr.mxu0 0.0
    %1632 = vmatpush1.msra.mxu0 0.0
    %1633 = vmatprep.subr.mxu0 0.0
    %1634 = vmatpush1.msra.mxu0 0.0
    %1635 = vmatprep.subr.mxu0 0.0
    %1636 = vmatpush1.msra.mxu0 0.0
    %1637 = vmatprep.subr.mxu0 0.0
    %1638 = vmatpush1.msra.mxu0 0.0
    %1639 = vmatprep.subr.mxu0 0.0
    %1640 = vmatpush1.msra.mxu0 0.0
    %1641 = vmatprep.subr.mxu0 0.0
    %1642 = vmatpush1.msra.mxu0 0.0
    %1643 = vmatprep.subr.mxu0 0.0
    %1644 = vmatpush1.msra.mxu0 0.0
    %1645 = vmatprep.subr.mxu0 0.0
    %1646 = vmatpush1.msra.mxu0 0.0
    %1647 = vmatprep.subr.mxu0 0.0
    %1648 = vmatpush1.msra.mxu0 0.0
    %1649 = vmatprep.subr.mxu0 0.0
    %1650 = vmatpush1.msra.mxu0 0.0
    %1651 = vmatprep.subr.mxu0 0.0
    %1652 = vmatpush1.msra.mxu0 0.0
    %1653 = vmatprep.subr.mxu0 0.0
    %1654 = vmatpush1.msra.mxu0 0.0
    %1655 = vmatprep.subr.mxu0 0.0
    %1656 = vmatpush1.msra.mxu0 0.0
    %1657 = vmatprep.subr.mxu0 0.0
    %1658 = vmatpush1.msra.mxu0 0.0
    %1659 = vmatprep.subr.mxu0 0.0
    %1660 = vmatpush1.msra.mxu0 0.0
    %1661 = vmatprep.subr.mxu0 0.0
    %1662 = vmatpush1.msra.mxu0 0.0
    %1663 = vmatprep.subr.mxu0 0.0
    %1664 = vmatpush1.msra.mxu0 0.0
    %1665 = vmatprep.subr.mxu0 0.0
    %1666 = vmatpush1.msra.mxu0 0.0
    %1667 = vmatprep.subr.mxu0 0.0
    %1668 = vmatpush1.msra.mxu0 0.0
    %1669 = vmatprep.subr.mxu0 0.0
    %1670 = vmatpush1.msra.mxu0 0.0
    %1671 = vmatprep.subr.mxu0 0.0
    %1672 = vmatpush1.msra.mxu0 0.0
    %1673 = vmatprep.subr.mxu0 0.0
    %1674 = vmatpush1.msra.mxu0 0.0
    %1675 = vmatprep.subr.mxu0 0.0
    %1676 = vmatpush1.msra.mxu0 0.0
    %1677 = vmatprep.subr.mxu0 0.0
    %1678 = vmatpush1.msra.mxu0 0.0
    %1679 = vmatprep.subr.mxu0 0.0
    %1680 = vmatpush1.msra.mxu0 0.0
    %1681 = vmatprep.subr.mxu0 0.0
    %1682 = vmatpush1.msra.mxu0 0.0
    %1683 = vmatprep.subr.mxu0 0.0
    %1684 = vmatpush1.msra.mxu0 0.0
    %1685 = vmatprep.subr.mxu0 0.0
    %1686 = vmatpush1.msra.mxu0 0.0
    %1687 = vmatprep.subr.mxu0 0.0
    %1688 = vmatpush1.msra.mxu0 0.0
    %1689 = vmatprep.subr.mxu0 0.0
    %1690 = vmatpush1.msra.mxu0 0.0
    %1691 = vmatprep.subr.mxu0 0.0
    %1692 = vmatpush1.msra.mxu0 0.0
    %1693 = vmatprep.mubr.f32.mxu0 0.0
    %1694 = vmatmul.mubr.f32.gmra.mrb[0].mxu0 %v1557
    %v1695 = vpop.f32.mrb[0].mxu0
    %v1696 = vadd.f32 0.0, %v1695
    %v1697 = vpop.f32.mrb[0].mxu0
    %1698 = vdwg.mxu0
    %1701 = vrot.lane.b32.xlu0 %v1484, 64
    %v1702 = vpop.permute.xlu0 %1701
    %1703 = vrot.lane.b32.xlu0 %v1554, 64
    %v1704 = vpop.permute.xlu0 %1703
    %v1707 = vsel %vm1069, %v1339, %v1702
    %v1708 = vsel %vm1069, %v1412, %v1704
    %s1709 = scalar_lea.vmem [#allocation2], 384
    %v1710 = vld [vmem:[%s1709] sm:$0xf]
    %v1711 = vld [vmem:[%s1709 + $0x4] sm:$0xf]
    %v1712 = vld [vmem:[%s1709 + $0x8] sm:$0xf]
    %v1713 = vld [vmem:[%s1709 + $0xc] sm:$0xf]
    %v1714 = vld [vmem:[%s1709 + $0x10] sm:$0xf]
    %v1715 = vld [vmem:[%s1709 + $0x14] sm:$0xf]
    %v1716 = vld [vmem:[%s1709 + $0x18] sm:$0xf]
    %v1717 = vld [vmem:[%s1709 + $0x1c] sm:$0xf]
    %v1718 = vld [vmem:[%s1709 + $0x20] sm:$0xf]
    %v1719 = vld [vmem:[%s1709 + $0x24] sm:$0xf]
    %v1720 = vld [vmem:[%s1709 + $0x28] sm:$0xf]
    %v1721 = vld [vmem:[%s1709 + $0x2c] sm:$0xf]
    %v1722 = vld [vmem:[%s1709 + $0x30] sm:$0xf]
    %v1723 = vld [vmem:[%s1709 + $0x34] sm:$0xf]
    %v1724 = vld [vmem:[%s1709 + $0x38] sm:$0xf]
    %v1725 = vld [vmem:[%s1709 + $0x3c] sm:$0xf]
    %v1726 = vld [vmem:[%s1709 + $0x40] sm:$0xf]
    %v1727 = vld [vmem:[%s1709 + $0x44] sm:$0xf]
    %v1728 = vld [vmem:[%s1709 + $0x48] sm:$0xf]
    %v1729 = vld [vmem:[%s1709 + $0x4c] sm:$0xf]
    %v1730 = vld [vmem:[%s1709 + $0x50] sm:$0xf]
    %v1731 = vld [vmem:[%s1709 + $0x54] sm:$0xf]
    %v1732 = vld [vmem:[%s1709 + $0x58] sm:$0xf]
    %v1733 = vld [vmem:[%s1709 + $0x5c] sm:$0xf]
    %v1734 = vpack.c.bf16 %v1707, %v1707
    %v1735 = vpack.c.bf16 %v1626, %v1626
    %v1736 = vpack.c.bf16 %v1708, %v1708
    %v1737 = vpack.c.bf16 %v1696, %v1696
    %v1738 = vld [vmem:[%s2 + $0x4] sm:$0x1]
    %v1739 = vlaneseq
    %v1740 = vshrl.u32 %v1739, 7
    %v1741 = vsub.s32 0, %v1740
    %v1742 = vrot.slane %v1738, %v1741
    %v1767 = vunpack.c.l.b16 %v1710
    %v1768 = vunpack.c.l.b16 %v1711
    %v1769 = vunpack.c.l.b16 %v1712
    %v1770 = vunpack.c.l.b16 %v1713
    %v1771 = vunpack.c.l.b16 %v1714
    %v1772 = vunpack.c.l.b16 %v1715
    %v1773 = vunpack.c.l.b16 %v1716
    %v1774 = vunpack.c.l.b16 %v1717
    %v1775 = vunpack.c.l.b16 %v1718
    %v1776 = vunpack.c.l.b16 %v1719
    %v1777 = vunpack.c.l.b16 %v1720
    %v1778 = vunpack.c.l.b16 %v1721
    %v1779 = vunpack.c.l.b16 %v1722
    %v1780 = vunpack.c.l.b16 %v1723
    %v1781 = vunpack.c.l.b16 %v1724
    %v1782 = vunpack.c.l.b16 %v1725
    %v1783 = vunpack.c.l.b16 %v1726
    %v1784 = vunpack.c.l.b16 %v1727
    %v1785 = vunpack.c.l.b16 %v1728
    %v1786 = vunpack.c.l.b16 %v1729
    %v1787 = vunpack.c.l.b16 %v1730
    %v1788 = vunpack.c.l.b16 %v1731
    %v1789 = vunpack.c.l.b16 %v1732
    %v1790 = vunpack.c.l.b16 %v1733
    %v1791 = vpack.c.b16 %v1768, %v1767
    %v1792 = vpack.c.b16 %v1770, %v1769
    %v1793 = vpack.c.b16 %v1772, %v1771
    %v1794 = vpack.c.b16 %v1774, %v1773
    %v1795 = vpack.c.b16 %v1776, %v1775
    %v1796 = vpack.c.b16 %v1778, %v1777
    %v1797 = vpack.c.b16 %v1780, %v1779
    %v1798 = vpack.c.b16 %v1782, %v1781
    %v1799 = vpack.c.b16 %v1784, %v1783
    %v1800 = vpack.c.b16 %v1786, %v1785
    %v1801 = vpack.c.b16 %v1788, %v1787
    %v1802 = vpack.c.b16 %v1790, %v1789
    %v1816 = vsel %vm1069, %v1735, 0
    %1818 = vmatprep.subr.bf16.mxu0 0
    %1819 = vmatpush1.bf16.msra.mxu0 %v1791
    %1820 = vmatprep.subr.bf16.mxu0 0
    %1821 = vmatpush1.bf16.msra.mxu0 %v1792
    %1822 = vmatprep.subr.bf16.mxu0 0
    %1823 = vmatpush1.bf16.msra.mxu0 %v1793
    %1824 = vmatprep.subr.bf16.mxu0 0
    %1825 = vmatpush1.bf16.msra.mxu0 %v1794
    %1826 = vmatprep.subr.bf16.mxu0 0
    %1827 = vmatpush1.bf16.msra.mxu0 %v1795
    %1828 = vmatprep.subr.bf16.mxu0 0
    %1829 = vmatpush1.bf16.msra.mxu0 %v1796
    %1830 = vmatprep.subr.bf16.mxu0 0
    %1831 = vmatpush1.bf16.msra.mxu0 %v1797
    %1832 = vmatprep.subr.bf16.mxu0 0
    %1833 = vmatpush1.bf16.msra.mxu0 %v1798
    %1834 = vmatprep.subr.bf16.mxu0 0
    %1835 = vmatpush1.bf16.msra.mxu0 %v1799
    %1836 = vmatprep.subr.bf16.mxu0 0
    %1837 = vmatpush1.bf16.msra.mxu0 %v1800
    %1838 = vmatprep.subr.bf16.mxu0 0
    %1839 = vmatpush1.bf16.msra.mxu0 %v1801
    %1840 = vmatprep.subr.bf16.mxu0 0
    %1841 = vmatpush1.bf16.msra.mxu0 %v1802
    %1842 = vmatprep.subr.bf16.mxu0 0
    %1843 = vmatpush1.bf16.msra.mxu0 0
    %1844 = vmatprep.subr.bf16.mxu0 0
    %1845 = vmatpush1.bf16.msra.mxu0 0
    %1846 = vmatprep.subr.bf16.mxu0 0
    %1847 = vmatpush1.bf16.msra.mxu0 0
    %1848 = vmatprep.subr.bf16.mxu0 0
    %1849 = vmatpush1.bf16.msra.mxu0 0
    %1850 = vmatprep.mubr.bf16.mxu0 %v1816
    %1851 = vmatmul.mubr.bf16.gmra.mrb[0].mxu0 %v1734
    %v1852 = vpop.f32.mrb[0].mxu0
    %v1853 = vadd.f32 %v1742, %v1852
    %v1854 = vpop.f32.mrb[0].mxu0
    %v1855 = vpop.f32.mrb[0].mxu0
    %v1856 = vpop.f32.mrb[0].mxu0
    %1857 = vdwg.mxu0
    %v1859 = vsel %vm1069, %v1737, 0
    %1861 = vmatprep.subr.bf16.mxu0 0
    %1862 = vmatpush1.bf16.msra.mxu0 %v1791
    %1863 = vmatprep.subr.bf16.mxu0 0
    %1864 = vmatpush1.bf16.msra.mxu0 %v1792
    %1865 = vmatprep.subr.bf16.mxu0 0
    %1866 = vmatpush1.bf16.msra.mxu0 %v1793
    %1867 = vmatprep.subr.bf16.mxu0 0
    %1868 = vmatpush1.bf16.msra.mxu0 %v1794
    %1869 = vmatprep.subr.bf16.mxu0 0
    %1870 = vmatpush1.bf16.msra.mxu0 %v1795
    %1871 = vmatprep.subr.bf16.mxu0 0
    %1872 = vmatpush1.bf16.msra.mxu0 %v1796
    %1873 = vmatprep.subr.bf16.mxu0 0
    %1874 = vmatpush1.bf16.msra.mxu0 %v1797
    %1875 = vmatprep.subr.bf16.mxu0 0
    %1876 = vmatpush1.bf16.msra.mxu0 %v1798
    %1877 = vmatprep.subr.bf16.mxu0 0
    %1878 = vmatpush1.bf16.msra.mxu0 %v1799
    %1879 = vmatprep.subr.bf16.mxu0 0
    %1880 = vmatpush1.bf16.msra.mxu0 %v1800
    %1881 = vmatprep.subr.bf16.mxu0 0
    %1882 = vmatpush1.bf16.msra.mxu0 %v1801
    %1883 = vmatprep.subr.bf16.mxu0 0
    %1884 = vmatpush1.bf16.msra.mxu0 %v1802
    %1885 = vmatprep.subr.bf16.mxu0 0
    %1886 = vmatpush1.bf16.msra.mxu0 0
    %1887 = vmatprep.subr.bf16.mxu0 0
    %1888 = vmatpush1.bf16.msra.mxu0 0
    %1889 = vmatprep.subr.bf16.mxu0 0
    %1890 = vmatpush1.bf16.msra.mxu0 0
    %1891 = vmatprep.subr.bf16.mxu0 0
    %1892 = vmatpush1.bf16.msra.mxu0 0
    %1893 = vmatprep.mubr.bf16.mxu0 %v1859
    %1894 = vmatmul.mubr.bf16.gmra.mrb[0].mxu0 %v1736
    %v1895 = vpop.f32.mrb[0].mxu0
    %v1896 = vadd.f32 %v1742, %v1895
    %v1897 = vpop.f32.mrb[0].mxu0
    %v1898 = vpop.f32.mrb[0].mxu0
    %v1899 = vpop.f32.mrb[0].mxu0
    %1900 = vdwg.mxu0
    %v1901 = vld [vmem:[%s2 + $0x5] sm:$0x1]
    %v1902 = vld [vmem:[%s2 + $0x6] sm:$0x1]
    %v1903 = vsel %vm530, %v1853, 0.0
    %v1904 = vsel %vm530, %v1896, 0.0
    %v1905 = vadd.f32 %v1903, %v1904
    %v1906 = vrot.slane %v1905, 4
    %v1907 = vadd.f32 %v1905, %v1906
    %v1908 = vrot.slane %v1907, 2
    %v1909 = vadd.f32 %v1907, %v1908
    %v1910 = vrot.slane %v1909, 1
    %v1911 = vadd.f32 %v1909, %v1910
    %v1912 = vrcp.pop 4.0
    %v1913 = vmul.f32 %v1911, %v1912
    %v1914 = vsub.f32 %v1853, %v1913
    %v1915 = vsub.f32 %v1896, %v1913
    %v1916 = vmul.f32 %v1914, %v1914
    %v1917 = vmul.f32 %v1915, %v1915
    %v1918 = vsel %vm530, %v1916, 0.0
    %v1919 = vsel %vm530, %v1917, 0.0
    %v1920 = vadd.f32 %v1918, %v1919
    %v1921 = vrot.slane %v1920, 4
    %v1922 = vadd.f32 %v1920, %v1921
    %v1923 = vrot.slane %v1922, 2
    %v1924 = vadd.f32 %v1922, %v1923
    %v1925 = vrot.slane %v1924, 1
    %v1926 = vadd.f32 %v1924, %v1925
    %v1927 = vmul.f32 %v1926, %v1912
    %v1928 = vadd.f32 %v1927, 1e-05
    %v1929 = vrsqrt.pop %v1928
    %v1930 = vmul.f32 %v1914, %v1929
    %v1931 = vmul.f32 %v1915, %v1929
    %v1932 = vlaneseq
    %v1933 = vshrl.u32 %v1932, 7
    %v1934 = vsub.s32 0, %v1933
    %v1935 = vrot.slane %v1901, %v1934
    %v1936 = vmul.f32 %v1930, %v1935
    %v1937 = vmul.f32 %v1931, %v1935
    %v1938 = vlaneseq
    %v1939 = vshrl.u32 %v1938, 7
    %v1940 = vsub.s32 0, %v1939
    %v1941 = vrot.slane %v1902, %v1940
    %v1942 = vadd.f32 %v1936, %v1941
    %v1943 = vadd.f32 %v1937, %v1941
    %vm1944 = vcmp.ge.f32.partialorder %v1942, 0.0
    %vm1945 = vcmp.ge.f32.partialorder %v1943, 0.0
    %v1946 = vmul.f32 %v1942, 0.2
    %v1947 = vmul.f32 %v1943, 0.2
    %v1948 = vsel %vm1944, %v1942, %v1946
    %v1949 = vsel %vm1945, %v1943, %v1947
    %v1950 = vadd.s32 %v35, 4294967295
    %vm1951 = vcmp.eq.s32.totalorder %v37, %v1950
    %v1952 = vsel %vm1951, 1.0, 0.0
    %vm1953 = vcmask 15360
    %v1955 = vsel %vm1953, %v1952, 0
    %v1958 = vsel %vm530, %v1948, 0
    %1960 = vmatprep.subr.mxu0 0.0
    %1961 = vmatpush1.msra.mxu0 %v1958
    %1962 = vmatprep.subr.mxu0 0.0
    %1963 = vmatpush1.msra.mxu0 0.0
    %1964 = vmatprep.subr.mxu0 0.0
    %1965 = vmatpush1.msra.mxu0 0.0
    %1966 = vmatprep.subr.mxu0 0.0
    %1967 = vmatpush1.msra.mxu0 0.0
    %1968 = vmatprep.subr.mxu0 0.0
    %1969 = vmatpush1.msra.mxu0 0.0
    %1970 = vmatprep.subr.mxu0 0.0
    %1971 = vmatpush1.msra.mxu0 0.0
    %1972 = vmatprep.subr.mxu0 0.0
    %1973 = vmatpush1.msra.mxu0 0.0
    %1974 = vmatprep.subr.mxu0 0.0
    %1975 = vmatpush1.msra.mxu0 0.0
    %1976 = vmatprep.subr.mxu0 0.0
    %1977 = vmatpush1.msra.mxu0 0.0
    %1978 = vmatprep.subr.mxu0 0.0
    %1979 = vmatpush1.msra.mxu0 0.0
    %1980 = vmatprep.subr.mxu0 0.0
    %1981 = vmatpush1.msra.mxu0 0.0
    %1982 = vmatprep.subr.mxu0 0.0
    %1983 = vmatpush1.msra.mxu0 0.0
    %1984 = vmatprep.subr.mxu0 0.0
    %1985 = vmatpush1.msra.mxu0 0.0
    %1986 = vmatprep.subr.mxu0 0.0
    %1987 = vmatpush1.msra.mxu0 0.0
    %1988 = vmatprep.subr.mxu0 0.0
    %1989 = vmatpush1.msra.mxu0 0.0
    %1990 = vmatprep.subr.mxu0 0.0
    %1991 = vmatpush1.msra.mxu0 0.0
    %1992 = vmatprep.subr.mxu0 0.0
    %1993 = vmatpush1.msra.mxu0 0.0
    %1994 = vmatprep.subr.mxu0 0.0
    %1995 = vmatpush1.msra.mxu0 0.0
    %1996 = vmatprep.subr.mxu0 0.0
    %1997 = vmatpush1.msra.mxu0 0.0
    %1998 = vmatprep.subr.mxu0 0.0
    %1999 = vmatpush1.msra.mxu0 0.0
    %2000 = vmatprep.subr.mxu0 0.0
    %2001 = vmatpush1.msra.mxu0 0.0
    %2002 = vmatprep.subr.mxu0 0.0
    %2003 = vmatpush1.msra.mxu0 0.0
    %2004 = vmatprep.subr.mxu0 0.0
    %2005 = vmatpush1.msra.mxu0 0.0
    %2006 = vmatprep.subr.mxu0 0.0
    %2007 = vmatpush1.msra.mxu0 0.0
    %2008 = vmatprep.subr.mxu0 0.0
    %2009 = vmatpush1.msra.mxu0 0.0
    %2010 = vmatprep.subr.mxu0 0.0
    %2011 = vmatpush1.msra.mxu0 0.0
    %2012 = vmatprep.subr.mxu0 0.0
    %2013 = vmatpush1.msra.mxu0 0.0
    %2014 = vmatprep.subr.mxu0 0.0
    %2015 = vmatpush1.msra.mxu0 0.0
    %2016 = vmatprep.subr.mxu0 0.0
    %2017 = vmatpush1.msra.mxu0 0.0
    %2018 = vmatprep.subr.mxu0 0.0
    %2019 = vmatpush1.msra.mxu0 0.0
    %2020 = vmatprep.subr.mxu0 0.0
    %2021 = vmatpush1.msra.mxu0 0.0
    %2022 = vmatprep.subr.mxu0 0.0
    %2023 = vmatpush1.msra.mxu0 0.0
    %2024 = vmatprep.mubr.f32.mxu0 0.0
    %2025 = vmatmul.mubr.f32.gmra.mrb[0].mxu0 %v1955
    %v2026 = vpop.f32.mrb[0].mxu0
    %v2027 = vadd.f32 0.0, %v2026
    %v2028 = vpop.f32.mrb[0].mxu0
    %2029 = vdwg.mxu0
    %v2031 = vsel %vm530, %v1949, 0
    %2033 = vmatprep.subr.mxu0 0.0
    %2034 = vmatpush1.msra.mxu0 %v2031
    %2035 = vmatprep.subr.mxu0 0.0
    %2036 = vmatpush1.msra.mxu0 0.0
    %2037 = vmatprep.subr.mxu0 0.0
    %2038 = vmatpush1.msra.mxu0 0.0
    %2039 = vmatprep.subr.mxu0 0.0
    %2040 = vmatpush1.msra.mxu0 0.0
    %2041 = vmatprep.subr.mxu0 0.0
    %2042 = vmatpush1.msra.mxu0 0.0
    %2043 = vmatprep.subr.mxu0 0.0
    %2044 = vmatpush1.msra.mxu0 0.0
    %2045 = vmatprep.subr.mxu0 0.0
    %2046 = vmatpush1.msra.mxu0 0.0
    %2047 = vmatprep.subr.mxu0 0.0
    %2048 = vmatpush1.msra.mxu0 0.0
    %2049 = vmatprep.subr.mxu0 0.0
    %2050 = vmatpush1.msra.mxu0 0.0
    %2051 = vmatprep.subr.mxu0 0.0
    %2052 = vmatpush1.msra.mxu0 0.0
    %2053 = vmatprep.subr.mxu0 0.0
    %2054 = vmatpush1.msra.mxu0 0.0
    %2055 = vmatprep.subr.mxu0 0.0
    %2056 = vmatpush1.msra.mxu0 0.0
    %2057 = vmatprep.subr.mxu0 0.0
    %2058 = vmatpush1.msra.mxu0 0.0
    %2059 = vmatprep.subr.mxu0 0.0
    %2060 = vmatpush1.msra.mxu0 0.0
    %2061 = vmatprep.subr.mxu0 0.0
    %2062 = vmatpush1.msra.mxu0 0.0
    %2063 = vmatprep.subr.mxu0 0.0
    %2064 = vmatpush1.msra.mxu0 0.0
    %2065 = vmatprep.subr.mxu0 0.0
    %2066 = vmatpush1.msra.mxu0 0.0
    %2067 = vmatprep.subr.mxu0 0.0
    %2068 = vmatpush1.msra.mxu0 0.0
    %2069 = vmatprep.subr.mxu0 0.0
    %2070 = vmatpush1.msra.mxu0 0.0
    %2071 = vmatprep.subr.mxu0 0.0
    %2072 = vmatpush1.msra.mxu0 0.0
    %2073 = vmatprep.subr.mxu0 0.0
    %2074 = vmatpush1.msra.mxu0 0.0
    %2075 = vmatprep.subr.mxu0 0.0
    %2076 = vmatpush1.msra.mxu0 0.0
    %2077 = vmatprep.subr.mxu0 0.0
    %2078 = vmatpush1.msra.mxu0 0.0
    %2079 = vmatprep.subr.mxu0 0.0
    %2080 = vmatpush1.msra.mxu0 0.0
    %2081 = vmatprep.subr.mxu0 0.0
    %2082 = vmatpush1.msra.mxu0 0.0
    %2083 = vmatprep.subr.mxu0 0.0
    %2084 = vmatpush1.msra.mxu0 0.0
    %2085 = vmatprep.subr.mxu0 0.0
    %2086 = vmatpush1.msra.mxu0 0.0
    %2087 = vmatprep.subr.mxu0 0.0
    %2088 = vmatpush1.msra.mxu0 0.0
    %2089 = vmatprep.subr.mxu0 0.0
    %2090 = vmatpush1.msra.mxu0 0.0
    %2091 = vmatprep.subr.mxu0 0.0
    %2092 = vmatpush1.msra.mxu0 0.0
    %2093 = vmatprep.subr.mxu0 0.0
    %2094 = vmatpush1.msra.mxu0 0.0
    %2095 = vmatprep.subr.mxu0 0.0
    %2096 = vmatpush1.msra.mxu0 0.0
    %2097 = vmatprep.mubr.f32.mxu0 0.0
    %2098 = vmatmul.mubr.f32.gmra.mrb[0].mxu0 %v1955
    %v2099 = vpop.f32.mrb[0].mxu0
    %v2100 = vadd.f32 0.0, %v2099
    %v2101 = vpop.f32.mrb[0].mxu0
    %2102 = vdwg.mxu0
    %vm2103 = vcmp.eq.s32.totalorder %v37, %v35
    %v2104 = vsel %vm2103, 1.0, 0.0
    %v2106 = vsel %vm1953, %v2104, 0
    %2108 = vmatprep.subr.mxu0 0.0
    %2109 = vmatpush1.msra.mxu0 %v1958
    %2110 = vmatprep.subr.mxu0 0.0
    %2111 = vmatpush1.msra.mxu0 0.0
    %2112 = vmatprep.subr.mxu0 0.0
    %2113 = vmatpush1.msra.mxu0 0.0
    %2114 = vmatprep.subr.mxu0 0.0
    %2115 = vmatpush1.msra.mxu0 0.0
    %2116 = vmatprep.subr.mxu0 0.0
    %2117 = vmatpush1.msra.mxu0 0.0
    %2118 = vmatprep.subr.mxu0 0.0
    %2119 = vmatpush1.msra.mxu0 0.0
    %2120 = vmatprep.subr.mxu0 0.0
    %2121 = vmatpush1.msra.mxu0 0.0
    %2122 = vmatprep.subr.mxu0 0.0
    %2123 = vmatpush1.msra.mxu0 0.0
    %2124 = vmatprep.subr.mxu0 0.0
    %2125 = vmatpush1.msra.mxu0 0.0
    %2126 = vmatprep.subr.mxu0 0.0
    %2127 = vmatpush1.msra.mxu0 0.0
    %2128 = vmatprep.subr.mxu0 0.0
    %2129 = vmatpush1.msra.mxu0 0.0
    %2130 = vmatprep.subr.mxu0 0.0
    %2131 = vmatpush1.msra.mxu0 0.0
    %2132 = vmatprep.subr.mxu0 0.0
    %2133 = vmatpush1.msra.mxu0 0.0
    %2134 = vmatprep.subr.mxu0 0.0
    %2135 = vmatpush1.msra.mxu0 0.0
    %2136 = vmatprep.subr.mxu0 0.0
    %2137 = vmatpush1.msra.mxu0 0.0
    %2138 = vmatprep.subr.mxu0 0.0
    %2139 = vmatpush1.msra.mxu0 0.0
    %2140 = vmatprep.subr.mxu0 0.0
    %2141 = vmatpush1.msra.mxu0 0.0
    %2142 = vmatprep.subr.mxu0 0.0
    %2143 = vmatpush1.msra.mxu0 0.0
    %2144 = vmatprep.subr.mxu0 0.0
    %2145 = vmatpush1.msra.mxu0 0.0
    %2146 = vmatprep.subr.mxu0 0.0
    %2147 = vmatpush1.msra.mxu0 0.0
    %2148 = vmatprep.subr.mxu0 0.0
    %2149 = vmatpush1.msra.mxu0 0.0
    %2150 = vmatprep.subr.mxu0 0.0
    %2151 = vmatpush1.msra.mxu0 0.0
    %2152 = vmatprep.subr.mxu0 0.0
    %2153 = vmatpush1.msra.mxu0 0.0
    %2154 = vmatprep.subr.mxu0 0.0
    %2155 = vmatpush1.msra.mxu0 0.0
    %2156 = vmatprep.subr.mxu0 0.0
    %2157 = vmatpush1.msra.mxu0 0.0
    %2158 = vmatprep.subr.mxu0 0.0
    %2159 = vmatpush1.msra.mxu0 0.0
    %2160 = vmatprep.subr.mxu0 0.0
    %2161 = vmatpush1.msra.mxu0 0.0
    %2162 = vmatprep.subr.mxu0 0.0
    %2163 = vmatpush1.msra.mxu0 0.0
    %2164 = vmatprep.subr.mxu0 0.0
    %2165 = vmatpush1.msra.mxu0 0.0
    %2166 = vmatprep.subr.mxu0 0.0
    %2167 = vmatpush1.msra.mxu0 0.0
    %2168 = vmatprep.subr.mxu0 0.0
    %2169 = vmatpush1.msra.mxu0 0.0
    %2170 = vmatprep.subr.mxu0 0.0
    %2171 = vmatpush1.msra.mxu0 0.0
    %2172 = vmatprep.mubr.f32.mxu0 0.0
    %2173 = vmatmul.mubr.f32.gmra.mrb[0].mxu0 %v2106
    %v2174 = vpop.f32.mrb[0].mxu0
    %v2175 = vadd.f32 0.0, %v2174
    %v2176 = vpop.f32.mrb[0].mxu0
    %2177 = vdwg.mxu0
    %2178 = vmatprep.subr.mxu0 0.0
    %2179 = vmatpush1.msra.mxu0 %v2031
    %2180 = vmatprep.subr.mxu0 0.0
    %2181 = vmatpush1.msra.mxu0 0.0
    %2182 = vmatprep.subr.mxu0 0.0
    %2183 = vmatpush1.msra.mxu0 0.0
    %2184 = vmatprep.subr.mxu0 0.0
    %2185 = vmatpush1.msra.mxu0 0.0
    %2186 = vmatprep.subr.mxu0 0.0
    %2187 = vmatpush1.msra.mxu0 0.0
    %2188 = vmatprep.subr.mxu0 0.0
    %2189 = vmatpush1.msra.mxu0 0.0
    %2190 = vmatprep.subr.mxu0 0.0
    %2191 = vmatpush1.msra.mxu0 0.0
    %2192 = vmatprep.subr.mxu0 0.0
    %2193 = vmatpush1.msra.mxu0 0.0
    %2194 = vmatprep.subr.mxu0 0.0
    %2195 = vmatpush1.msra.mxu0 0.0
    %2196 = vmatprep.subr.mxu0 0.0
    %2197 = vmatpush1.msra.mxu0 0.0
    %2198 = vmatprep.subr.mxu0 0.0
    %2199 = vmatpush1.msra.mxu0 0.0
    %2200 = vmatprep.subr.mxu0 0.0
    %2201 = vmatpush1.msra.mxu0 0.0
    %2202 = vmatprep.subr.mxu0 0.0
    %2203 = vmatpush1.msra.mxu0 0.0
    %2204 = vmatprep.subr.mxu0 0.0
    %2205 = vmatpush1.msra.mxu0 0.0
    %2206 = vmatprep.subr.mxu0 0.0
    %2207 = vmatpush1.msra.mxu0 0.0
    %2208 = vmatprep.subr.mxu0 0.0
    %2209 = vmatpush1.msra.mxu0 0.0
    %2210 = vmatprep.subr.mxu0 0.0
    %2211 = vmatpush1.msra.mxu0 0.0
    %2212 = vmatprep.subr.mxu0 0.0
    %2213 = vmatpush1.msra.mxu0 0.0
    %2214 = vmatprep.subr.mxu0 0.0
    %2215 = vmatpush1.msra.mxu0 0.0
    %2216 = vmatprep.subr.mxu0 0.0
    %2217 = vmatpush1.msra.mxu0 0.0
    %2218 = vmatprep.subr.mxu0 0.0
    %2219 = vmatpush1.msra.mxu0 0.0
    %2220 = vmatprep.subr.mxu0 0.0
    %2221 = vmatpush1.msra.mxu0 0.0
    %2222 = vmatprep.subr.mxu0 0.0
    %2223 = vmatpush1.msra.mxu0 0.0
    %2224 = vmatprep.subr.mxu0 0.0
    %2225 = vmatpush1.msra.mxu0 0.0
    %2226 = vmatprep.subr.mxu0 0.0
    %2227 = vmatpush1.msra.mxu0 0.0
    %2228 = vmatprep.subr.mxu0 0.0
    %2229 = vmatpush1.msra.mxu0 0.0
    %2230 = vmatprep.subr.mxu0 0.0
    %2231 = vmatpush1.msra.mxu0 0.0
    %2232 = vmatprep.subr.mxu0 0.0
    %2233 = vmatpush1.msra.mxu0 0.0
    %2234 = vmatprep.subr.mxu0 0.0
    %2235 = vmatpush1.msra.mxu0 0.0
    %2236 = vmatprep.subr.mxu0 0.0
    %2237 = vmatpush1.msra.mxu0 0.0
    %2238 = vmatprep.subr.mxu0 0.0
    %2239 = vmatpush1.msra.mxu0 0.0
    %2240 = vmatprep.subr.mxu0 0.0
    %2241 = vmatpush1.msra.mxu0 0.0
    %2242 = vmatprep.mubr.f32.mxu0 0.0
    %2243 = vmatmul.mubr.f32.gmra.mrb[0].mxu0 %v2106
    %v2244 = vpop.f32.mrb[0].mxu0
    %v2245 = vadd.f32 0.0, %v2244
    %v2246 = vpop.f32.mrb[0].mxu0
    %2247 = vdwg.mxu0
    %v2248 = vadd.s32 %v35, 1
    %vm2249 = vcmp.eq.s32.totalorder %v37, %v2248
    %v2250 = vsel %vm2249, 1.0, 0.0
    %v2252 = vsel %vm1953, %v2250, 0
    %2254 = vmatprep.subr.mxu0 0.0
    %2255 = vmatpush1.msra.mxu0 %v1958
    %2256 = vmatprep.subr.mxu0 0.0
    %2257 = vmatpush1.msra.mxu0 0.0
    %2258 = vmatprep.subr.mxu0 0.0
    %2259 = vmatpush1.msra.mxu0 0.0
    %2260 = vmatprep.subr.mxu0 0.0
    %2261 = vmatpush1.msra.mxu0 0.0
    %2262 = vmatprep.subr.mxu0 0.0
    %2263 = vmatpush1.msra.mxu0 0.0
    %2264 = vmatprep.subr.mxu0 0.0
    %2265 = vmatpush1.msra.mxu0 0.0
    %2266 = vmatprep.subr.mxu0 0.0
    %2267 = vmatpush1.msra.mxu0 0.0
    %2268 = vmatprep.subr.mxu0 0.0
    %2269 = vmatpush1.msra.mxu0 0.0
    %2270 = vmatprep.subr.mxu0 0.0
    %2271 = vmatpush1.msra.mxu0 0.0
    %2272 = vmatprep.subr.mxu0 0.0
    %2273 = vmatpush1.msra.mxu0 0.0
    %2274 = vmatprep.subr.mxu0 0.0
    %2275 = vmatpush1.msra.mxu0 0.0
    %2276 = vmatprep.subr.mxu0 0.0
    %2277 = vmatpush1.msra.mxu0 0.0
    %2278 = vmatprep.subr.mxu0 0.0
    %2279 = vmatpush1.msra.mxu0 0.0
    %2280 = vmatprep.subr.mxu0 0.0
    %2281 = vmatpush1.msra.mxu0 0.0
    %2282 = vmatprep.subr.mxu0 0.0
    %2283 = vmatpush1.msra.mxu0 0.0
    %2284 = vmatprep.subr.mxu0 0.0
    %2285 = vmatpush1.msra.mxu0 0.0
    %2286 = vmatprep.subr.mxu0 0.0
    %2287 = vmatpush1.msra.mxu0 0.0
    %2288 = vmatprep.subr.mxu0 0.0
    %2289 = vmatpush1.msra.mxu0 0.0
    %2290 = vmatprep.subr.mxu0 0.0
    %2291 = vmatpush1.msra.mxu0 0.0
    %2292 = vmatprep.subr.mxu0 0.0
    %2293 = vmatpush1.msra.mxu0 0.0
    %2294 = vmatprep.subr.mxu0 0.0
    %2295 = vmatpush1.msra.mxu0 0.0
    %2296 = vmatprep.subr.mxu0 0.0
    %2297 = vmatpush1.msra.mxu0 0.0
    %2298 = vmatprep.subr.mxu0 0.0
    %2299 = vmatpush1.msra.mxu0 0.0
    %2300 = vmatprep.subr.mxu0 0.0
    %2301 = vmatpush1.msra.mxu0 0.0
    %2302 = vmatprep.subr.mxu0 0.0
    %2303 = vmatpush1.msra.mxu0 0.0
    %2304 = vmatprep.subr.mxu0 0.0
    %2305 = vmatpush1.msra.mxu0 0.0
    %2306 = vmatprep.subr.mxu0 0.0
    %2307 = vmatpush1.msra.mxu0 0.0
    %2308 = vmatprep.subr.mxu0 0.0
    %2309 = vmatpush1.msra.mxu0 0.0
    %2310 = vmatprep.subr.mxu0 0.0
    %2311 = vmatpush1.msra.mxu0 0.0
    %2312 = vmatprep.subr.mxu0 0.0
    %2313 = vmatpush1.msra.mxu0 0.0
    %2314 = vmatprep.subr.mxu0 0.0
    %2315 = vmatpush1.msra.mxu0 0.0
    %2316 = vmatprep.subr.mxu0 0.0
    %2317 = vmatpush1.msra.mxu0 0.0
    %2318 = vmatprep.mubr.f32.mxu0 0.0
    %2319 = vmatmul.mubr.f32.gmra.mrb[0].mxu0 %v2252
    %v2320 = vpop.f32.mrb[0].mxu0
    %v2321 = vadd.f32 0.0, %v2320
    %v2322 = vpop.f32.mrb[0].mxu0
    %2323 = vdwg.mxu0
    %2324 = vmatprep.subr.mxu0 0.0
    %2325 = vmatpush1.msra.mxu0 %v2031
    %2326 = vmatprep.subr.mxu0 0.0
    %2327 = vmatpush1.msra.mxu0 0.0
    %2328 = vmatprep.subr.mxu0 0.0
    %2329 = vmatpush1.msra.mxu0 0.0
    %2330 = vmatprep.subr.mxu0 0.0
    %2331 = vmatpush1.msra.mxu0 0.0
    %2332 = vmatprep.subr.mxu0 0.0
    %2333 = vmatpush1.msra.mxu0 0.0
    %2334 = vmatprep.subr.mxu0 0.0
    %2335 = vmatpush1.msra.mxu0 0.0
    %2336 = vmatprep.subr.mxu0 0.0
    %2337 = vmatpush1.msra.mxu0 0.0
    %2338 = vmatprep.subr.mxu0 0.0
    %2339 = vmatpush1.msra.mxu0 0.0
    %2340 = vmatprep.subr.mxu0 0.0
    %2341 = vmatpush1.msra.mxu0 0.0
    %2342 = vmatprep.subr.mxu0 0.0
    %2343 = vmatpush1.msra.mxu0 0.0
    %2344 = vmatprep.subr.mxu0 0.0
    %2345 = vmatpush1.msra.mxu0 0.0
    %2346 = vmatprep.subr.mxu0 0.0
    %2347 = vmatpush1.msra.mxu0 0.0
    %2348 = vmatprep.subr.mxu0 0.0
    %2349 = vmatpush1.msra.mxu0 0.0
    %2350 = vmatprep.subr.mxu0 0.0
    %2351 = vmatpush1.msra.mxu0 0.0
    %2352 = vmatprep.subr.mxu0 0.0
    %2353 = vmatpush1.msra.mxu0 0.0
    %2354 = vmatprep.subr.mxu0 0.0
    %2355 = vmatpush1.msra.mxu0 0.0
    %2356 = vmatprep.subr.mxu0 0.0
    %2357 = vmatpush1.msra.mxu0 0.0
    %2358 = vmatprep.subr.mxu0 0.0
    %2359 = vmatpush1.msra.mxu0 0.0
    %2360 = vmatprep.subr.mxu0 0.0
    %2361 = vmatpush1.msra.mxu0 0.0
    %2362 = vmatprep.subr.mxu0 0.0
    %2363 = vmatpush1.msra.mxu0 0.0
    %2364 = vmatprep.subr.mxu0 0.0
    %2365 = vmatpush1.msra.mxu0 0.0
    %2366 = vmatprep.subr.mxu0 0.0
    %2367 = vmatpush1.msra.mxu0 0.0
    %2368 = vmatprep.subr.mxu0 0.0
    %2369 = vmatpush1.msra.mxu0 0.0
    %2370 = vmatprep.subr.mxu0 0.0
    %2371 = vmatpush1.msra.mxu0 0.0
    %2372 = vmatprep.subr.mxu0 0.0
    %2373 = vmatpush1.msra.mxu0 0.0
    %2374 = vmatprep.subr.mxu0 0.0
    %2375 = vmatpush1.msra.mxu0 0.0
    %2376 = vmatprep.subr.mxu0 0.0
    %2377 = vmatpush1.msra.mxu0 0.0
    %2378 = vmatprep.subr.mxu0 0.0
    %2379 = vmatpush1.msra.mxu0 0.0
    %2380 = vmatprep.subr.mxu0 0.0
    %2381 = vmatpush1.msra.mxu0 0.0
    %2382 = vmatprep.subr.mxu0 0.0
    %2383 = vmatpush1.msra.mxu0 0.0
    %2384 = vmatprep.subr.mxu0 0.0
    %2385 = vmatpush1.msra.mxu0 0.0
    %2386 = vmatprep.subr.mxu0 0.0
    %2387 = vmatpush1.msra.mxu0 0.0
    %2388 = vmatprep.mubr.f32.mxu0 0.0
    %2389 = vmatmul.mubr.f32.gmra.mrb[0].mxu0 %v2252
    %v2390 = vpop.f32.mrb[0].mxu0
    %v2391 = vadd.f32 0.0, %v2390
    %v2392 = vpop.f32.mrb[0].mxu0
    %2393 = vdwg.mxu0
    %s2394 = scalar_lea.vmem [#allocation2], 576
    %v2395 = vld [vmem:[%s2394] sm:$0xf]
    %v2396 = vld [vmem:[%s2394 + $0x4] sm:$0xf]
    %v2397 = vld [vmem:[%s2394 + $0x8] sm:$0xf]
    %v2398 = vld [vmem:[%s2394 + $0xc] sm:$0xf]
    %v2399 = vld [vmem:[%s2394 + $0x10] sm:$0xf]
    %v2400 = vld [vmem:[%s2394 + $0x14] sm:$0xf]
    %v2401 = vld [vmem:[%s2394 + $0x18] sm:$0xf]
    %v2402 = vld [vmem:[%s2394 + $0x1c] sm:$0xf]
    %v2403 = vld [vmem:[%s2394 + $0x20] sm:$0xf]
    %v2404 = vld [vmem:[%s2394 + $0x24] sm:$0xf]
    %v2405 = vld [vmem:[%s2394 + $0x28] sm:$0xf]
    %v2406 = vld [vmem:[%s2394 + $0x2c] sm:$0xf]
    %v2407 = vld [vmem:[%s2394 + $0x30] sm:$0xf]
    %v2408 = vld [vmem:[%s2394 + $0x34] sm:$0xf]
    %v2409 = vld [vmem:[%s2394 + $0x38] sm:$0xf]
    %v2410 = vld [vmem:[%s2394 + $0x3c] sm:$0xf]
    %v2411 = vld [vmem:[%s2394 + $0x40] sm:$0xf]
    %v2412 = vld [vmem:[%s2394 + $0x44] sm:$0xf]
    %v2413 = vld [vmem:[%s2394 + $0x48] sm:$0xf]
    %v2414 = vld [vmem:[%s2394 + $0x4c] sm:$0xf]
    %v2415 = vld [vmem:[%s2394 + $0x50] sm:$0xf]
    %v2416 = vld [vmem:[%s2394 + $0x54] sm:$0xf]
    %v2417 = vld [vmem:[%s2394 + $0x58] sm:$0xf]
    %v2418 = vld [vmem:[%s2394 + $0x5c] sm:$0xf]
    %v2419 = vld [vmem:[%s2394 + $0x60] sm:$0xf]
    %v2420 = vld [vmem:[%s2394 + $0x64] sm:$0xf]
    %v2421 = vld [vmem:[%s2394 + $0x68] sm:$0xf]
    %v2422 = vld [vmem:[%s2394 + $0x6c] sm:$0xf]
    %v2423 = vld [vmem:[%s2394 + $0x70] sm:$0xf]
    %v2424 = vld [vmem:[%s2394 + $0x74] sm:$0xf]
    %v2425 = vld [vmem:[%s2394 + $0x78] sm:$0xf]
    %v2426 = vld [vmem:[%s2394 + $0x7c] sm:$0xf]
    %v2427 = vld [vmem:[%s2394 + $0x80] sm:$0xf]
    %v2428 = vld [vmem:[%s2394 + $0x84] sm:$0xf]
    %v2429 = vld [vmem:[%s2394 + $0x88] sm:$0xf]
    %v2430 = vld [vmem:[%s2394 + $0x8c] sm:$0xf]
    %v2431 = vld [vmem:[%s2394 + $0x90] sm:$0xf]
    %v2432 = vld [vmem:[%s2394 + $0x94] sm:$0xf]
    %v2433 = vld [vmem:[%s2394 + $0x98] sm:$0xf]
    %v2434 = vld [vmem:[%s2394 + $0x9c] sm:$0xf]
    %v2435 = vld [vmem:[%s2394 + $0xa0] sm:$0xf]
    %v2436 = vld [vmem:[%s2394 + $0xa4] sm:$0xf]
    %v2437 = vld [vmem:[%s2394 + $0xa8] sm:$0xf]
    %v2438 = vld [vmem:[%s2394 + $0xac] sm:$0xf]
    %v2439 = vld [vmem:[%s2394 + $0xb0] sm:$0xf]
    %v2440 = vld [vmem:[%s2394 + $0xb4] sm:$0xf]
    %v2441 = vld [vmem:[%s2394 + $0xb8] sm:$0xf]
    %v2442 = vld [vmem:[%s2394 + $0xbc] sm:$0xf]
    %v2443 = vpack.c.bf16 %v2027, %v2027
    %v2444 = vpack.c.bf16 %v2175, %v2175
    %v2445 = vpack.c.bf16 %v2321, %v2321
    %v2446 = vpack.c.bf16 %v2100, %v2100
    %v2447 = vpack.c.bf16 %v2245, %v2245
    %v2448 = vpack.c.bf16 %v2391, %v2391
    %v2449 = vld [vmem:[%s2 + $0x7] sm:$0x1]
    %v2450 = vlaneseq
    %v2451 = vshrl.u32 %v2450, 7
    %v2452 = vsub.s32 0, %v2451
    %v2453 = vrot.slane %v2449, %v2452
    %v2502 = vunpack.c.l.b16 %v2395
    %v2503 = vunpack.c.l.b16 %v2396
    %v2504 = vunpack.c.l.b16 %v2397
    %v2505 = vunpack.c.l.b16 %v2398
    %v2506 = vunpack.c.l.b16 %v2399
    %v2507 = vunpack.c.l.b16 %v2400
    %v2508 = vunpack.c.l.b16 %v2401
    %v2509 = vunpack.c.l.b16 %v2402
    %v2510 = vunpack.c.l.b16 %v2403
    %v2511 = vunpack.c.l.b16 %v2404
    %v2512 = vunpack.c.l.b16 %v2405
    %v2513 = vunpack.c.l.b16 %v2406
    %v2514 = vunpack.c.l.b16 %v2407
    %v2515 = vunpack.c.l.b16 %v2408
    %v2516 = vunpack.c.l.b16 %v2409
    %v2517 = vunpack.c.l.b16 %v2410
    %v2518 = vunpack.c.l.b16 %v2411
    %v2519 = vunpack.c.l.b16 %v2412
    %v2520 = vunpack.c.l.b16 %v2413
    %v2521 = vunpack.c.l.b16 %v2414
    %v2522 = vunpack.c.l.b16 %v2415
    %v2523 = vunpack.c.l.b16 %v2416
    %v2524 = vunpack.c.l.b16 %v2417
    %v2525 = vunpack.c.l.b16 %v2418
    %v2526 = vunpack.c.l.b16 %v2419
    %v2527 = vunpack.c.l.b16 %v2420
    %v2528 = vunpack.c.l.b16 %v2421
    %v2529 = vunpack.c.l.b16 %v2422
    %v2530 = vunpack.c.l.b16 %v2423
    %v2531 = vunpack.c.l.b16 %v2424
    %v2532 = vunpack.c.l.b16 %v2425
    %v2533 = vunpack.c.l.b16 %v2426
    %v2534 = vunpack.c.l.b16 %v2427
    %v2535 = vunpack.c.l.b16 %v2428
    %v2536 = vunpack.c.l.b16 %v2429
    %v2537 = vunpack.c.l.b16 %v2430
    %v2538 = vunpack.c.l.b16 %v2431
    %v2539 = vunpack.c.l.b16 %v2432
    %v2540 = vunpack.c.l.b16 %v2433
    %v2541 = vunpack.c.l.b16 %v2434
    %v2542 = vunpack.c.l.b16 %v2435
    %v2543 = vunpack.c.l.b16 %v2436
    %v2544 = vunpack.c.l.b16 %v2437
    %v2545 = vunpack.c.l.b16 %v2438
    %v2546 = vunpack.c.l.b16 %v2439
    %v2547 = vunpack.c.l.b16 %v2440
    %v2548 = vunpack.c.l.b16 %v2441
    %v2549 = vunpack.c.l.b16 %v2442
    %v2550 = vpack.c.b16 %v2503, %v2502
    %v2551 = vpack.c.b16 %v2505, %v2504
    %v2552 = vpack.c.b16 %v2507, %v2506
    %v2553 = vpack.c.b16 %v2509, %v2508
    %v2554 = vpack.c.b16 %v2511, %v2510
    %v2555 = vpack.c.b16 %v2513, %v2512
    %v2556 = vpack.c.b16 %v2515, %v2514
    %v2557 = vpack.c.b16 %v2517, %v2516
    %v2558 = vpack.c.b16 %v2519, %v2518
    %v2559 = vpack.c.b16 %v2521, %v2520
    %v2560 = vpack.c.b16 %v2523, %v2522
    %v2561 = vpack.c.b16 %v2525, %v2524
    %v2562 = vpack.c.b16 %v2527, %v2526
    %v2563 = vpack.c.b16 %v2529, %v2528
    %v2564 = vpack.c.b16 %v2531, %v2530
    %v2565 = vpack.c.b16 %v2533, %v2532
    %v2566 = vpack.c.b16 %v2535, %v2534
    %v2567 = vpack.c.b16 %v2537, %v2536
    %v2568 = vpack.c.b16 %v2539, %v2538
    %v2569 = vpack.c.b16 %v2541, %v2540
    %v2570 = vpack.c.b16 %v2543, %v2542
    %v2571 = vpack.c.b16 %v2545, %v2544
    %v2572 = vpack.c.b16 %v2547, %v2546
    %v2573 = vpack.c.b16 %v2549, %v2548
    %2598 = vmatprep.subr.bf16.mxu0 0
    %2599 = vmatpush1.bf16.msra.mxu0 %v2550
    %2600 = vmatprep.subr.bf16.mxu0 0
    %2601 = vmatpush1.bf16.msra.mxu0 %v2551
    %2602 = vmatprep.subr.bf16.mxu0 0
    %2603 = vmatpush1.bf16.msra.mxu0 %v2552
    %2604 = vmatprep.subr.bf16.mxu0 0
    %2605 = vmatpush1.bf16.msra.mxu0 %v2553
    %2606 = vmatprep.subr.bf16.mxu0 0
    %2607 = vmatpush1.bf16.msra.mxu0 %v2554
    %2608 = vmatprep.subr.bf16.mxu0 0
    %2609 = vmatpush1.bf16.msra.mxu0 %v2555
    %2610 = vmatprep.subr.bf16.mxu0 0
    %2611 = vmatpush1.bf16.msra.mxu0 %v2556
    %2612 = vmatprep.subr.bf16.mxu0 0
    %2613 = vmatpush1.bf16.msra.mxu0 %v2557
    %2614 = vmatprep.subr.bf16.mxu0 0
    %2615 = vmatpush1.bf16.msra.mxu0 %v2558
    %2616 = vmatprep.subr.bf16.mxu0 0
    %2617 = vmatpush1.bf16.msra.mxu0 %v2559
    %2618 = vmatprep.subr.bf16.mxu0 0
    %2619 = vmatpush1.bf16.msra.mxu0 %v2560
    %2620 = vmatprep.subr.bf16.mxu0 0
    %2621 = vmatpush1.bf16.msra.mxu0 %v2561
    %2622 = vmatprep.subr.bf16.mxu0 0
    %2623 = vmatpush1.bf16.msra.mxu0 %v2562
    %2624 = vmatprep.subr.bf16.mxu0 0
    %2625 = vmatpush1.bf16.msra.mxu0 %v2563
    %2626 = vmatprep.subr.bf16.mxu0 0
    %2627 = vmatpush1.bf16.msra.mxu0 %v2564
    %2628 = vmatprep.subr.bf16.mxu0 0
    %2629 = vmatpush1.bf16.msra.mxu0 %v2565
    %2630 = vmatprep.mubr.bf16.mxu0 %v2444
    %2631 = vmatmul.mubr.bf16.gmra.mrb[0].mxu0 %v2443
    %v2632 = vpop.f32.mrb[0].mxu0
    %v2633 = vadd.f32 %v2453, %v2632
    %v2634 = vpop.f32.mrb[0].mxu0
    %v2635 = vpop.f32.mrb[0].mxu0
    %v2636 = vpop.f32.mrb[0].mxu0
    %2637 = vdwg.mxu0
    %2638 = vmatprep.subr.bf16.mxu0 0
    %2639 = vmatpush1.bf16.msra.mxu0 %v2566
    %2640 = vmatprep.subr.bf16.mxu0 0
    %2641 = vmatpush1.bf16.msra.mxu0 %v2567
    %2642 = vmatprep.subr.bf16.mxu0 0
    %2643 = vmatpush1.bf16.msra.mxu0 %v2568
    %2644 = vmatprep.subr.bf16.mxu0 0
    %2645 = vmatpush1.bf16.msra.mxu0 %v2569
    %2646 = vmatprep.subr.bf16.mxu0 0
    %2647 = vmatpush1.bf16.msra.mxu0 %v2570
    %2648 = vmatprep.subr.bf16.mxu0 0
    %2649 = vmatpush1.bf16.msra.mxu0 %v2571
    %2650 = vmatprep.subr.bf16.mxu0 0
    %2651 = vmatpush1.bf16.msra.mxu0 %v2572
    %2652 = vmatprep.subr.bf16.mxu0 0
    %2653 = vmatpush1.bf16.msra.mxu0 %v2573
    %2654 = vmatprep.subr.bf16.mxu0 0
    %2655 = vmatpush1.bf16.msra.mxu0 0
    %2656 = vmatprep.subr.bf16.mxu0 0
    %2657 = vmatpush1.bf16.msra.mxu0 0
    %2658 = vmatprep.subr.bf16.mxu0 0
    %2659 = vmatpush1.bf16.msra.mxu0 0
    %2660 = vmatprep.subr.bf16.mxu0 0
    %2661 = vmatpush1.bf16.msra.mxu0 0
    %2662 = vmatprep.subr.bf16.mxu0 0
    %2663 = vmatpush1.bf16.msra.mxu0 0
    %2664 = vmatprep.subr.bf16.mxu0 0
    %2665 = vmatpush1.bf16.msra.mxu0 0
    %2666 = vmatprep.subr.bf16.mxu0 0
    %2667 = vmatpush1.bf16.msra.mxu0 0
    %2668 = vmatprep.subr.bf16.mxu0 0
    %2669 = vmatpush1.bf16.msra.mxu0 0
    %2670 = vmatprep.mubr.bf16.mxu0 0
    %2671 = vmatmul.mubr.bf16.gmra.mrb[0].mxu0 %v2445
    %v2672 = vpop.f32.mrb[0].mxu0
    %v2673 = vadd.f32 %v2633, %v2672
    %v2674 = vpop.f32.mrb[0].mxu0
    %v2675 = vpop.f32.mrb[0].mxu0
    %v2676 = vpop.f32.mrb[0].mxu0
    %2677 = vdwg.mxu0
    %2678 = vmatprep.subr.bf16.mxu0 0
    %2679 = vmatpush1.bf16.msra.mxu0 %v2550
    %2680 = vmatprep.subr.bf16.mxu0 0
    %2681 = vmatpush1.bf16.msra.mxu0 %v2551
    %2682 = vmatprep.subr.bf16.mxu0 0
    %2683 = vmatpush1.bf16.msra.mxu0 %v2552
    %2684 = vmatprep.subr.bf16.mxu0 0
    %2685 = vmatpush1.bf16.msra.mxu0 %v2553
    %2686 = vmatprep.subr.bf16.mxu0 0
    %2687 = vmatpush1.bf16.msra.mxu0 %v2554
    %2688 = vmatprep.subr.bf16.mxu0 0
    %2689 = vmatpush1.bf16.msra.mxu0 %v2555
    %2690 = vmatprep.subr.bf16.mxu0 0
    %2691 = vmatpush1.bf16.msra.mxu0 %v2556
    %2692 = vmatprep.subr.bf16.mxu0 0
    %2693 = vmatpush1.bf16.msra.mxu0 %v2557
    %2694 = vmatprep.subr.bf16.mxu0 0
    %2695 = vmatpush1.bf16.msra.mxu0 %v2558
    %2696 = vmatprep.subr.bf16.mxu0 0
    %2697 = vmatpush1.bf16.msra.mxu0 %v2559
    %2698 = vmatprep.subr.bf16.mxu0 0
    %2699 = vmatpush1.bf16.msra.mxu0 %v2560
    %2700 = vmatprep.subr.bf16.mxu0 0
    %2701 = vmatpush1.bf16.msra.mxu0 %v2561
    %2702 = vmatprep.subr.bf16.mxu0 0
    %2703 = vmatpush1.bf16.msra.mxu0 %v2562
    %2704 = vmatprep.subr.bf16.mxu0 0
    %2705 = vmatpush1.bf16.msra.mxu0 %v2563
    %2706 = vmatprep.subr.bf16.mxu0 0
    %2707 = vmatpush1.bf16.msra.mxu0 %v2564
    %2708 = vmatprep.subr.bf16.mxu0 0
    %2709 = vmatpush1.bf16.msra.mxu0 %v2565
    %2710 = vmatprep.mubr.bf16.mxu0 %v2447
    %2711 = vmatmul.mubr.bf16.gmra.mrb[0].mxu0 %v2446
    %v2712 = vpop.f32.mrb[0].mxu0
    %v2713 = vadd.f32 %v2453, %v2712
    %v2714 = vpop.f32.mrb[0].mxu0
    %v2715 = vpop.f32.mrb[0].mxu0
    %v2716 = vpop.f32.mrb[0].mxu0
    %2717 = vdwg.mxu0
    %2718 = vmatprep.subr.bf16.mxu0 0
    %2719 = vmatpush1.bf16.msra.mxu0 %v2566
    %2720 = vmatprep.subr.bf16.mxu0 0
    %2721 = vmatpush1.bf16.msra.mxu0 %v2567
    %2722 = vmatprep.subr.bf16.mxu0 0
    %2723 = vmatpush1.bf16.msra.mxu0 %v2568
    %2724 = vmatprep.subr.bf16.mxu0 0
    %2725 = vmatpush1.bf16.msra.mxu0 %v2569
    %2726 = vmatprep.subr.bf16.mxu0 0
    %2727 = vmatpush1.bf16.msra.mxu0 %v2570
    %2728 = vmatprep.subr.bf16.mxu0 0
    %2729 = vmatpush1.bf16.msra.mxu0 %v2571
    %2730 = vmatprep.subr.bf16.mxu0 0
    %2731 = vmatpush1.bf16.msra.mxu0 %v2572
    %2732 = vmatprep.subr.bf16.mxu0 0
    %2733 = vmatpush1.bf16.msra.mxu0 %v2573
    %2734 = vmatprep.subr.bf16.mxu0 0
    %2735 = vmatpush1.bf16.msra.mxu0 0
    %2736 = vmatprep.subr.bf16.mxu0 0
    %2737 = vmatpush1.bf16.msra.mxu0 0
    %2738 = vmatprep.subr.bf16.mxu0 0
    %2739 = vmatpush1.bf16.msra.mxu0 0
    %2740 = vmatprep.subr.bf16.mxu0 0
    %2741 = vmatpush1.bf16.msra.mxu0 0
    %2742 = vmatprep.subr.bf16.mxu0 0
    %2743 = vmatpush1.bf16.msra.mxu0 0
    %2744 = vmatprep.subr.bf16.mxu0 0
    %2745 = vmatpush1.bf16.msra.mxu0 0
    %2746 = vmatprep.subr.bf16.mxu0 0
    %2747 = vmatpush1.bf16.msra.mxu0 0
    %2748 = vmatprep.subr.bf16.mxu0 0
    %2749 = vmatpush1.bf16.msra.mxu0 0
    %2750 = vmatprep.mubr.bf16.mxu0 0
    %2751 = vmatmul.mubr.bf16.gmra.mrb[0].mxu0 %v2448
    %v2752 = vpop.f32.mrb[0].mxu0
    %v2753 = vadd.f32 %v2713, %v2752
    %v2754 = vpop.f32.mrb[0].mxu0
    %v2755 = vpop.f32.mrb[0].mxu0
    %v2756 = vpop.f32.mrb[0].mxu0
    %2757 = vdwg.mxu0
    %v2758 = vsel %vm530, %v2673, 0.0
    %v2759 = vrot.slane %v2758, 4
    %v2760 = vadd.f32 %v2758, %v2759
    %v2761 = vrot.slane %v2760, 2
    %v2762 = vadd.f32 %v2760, %v2761
    %v2763 = vrot.slane %v2762, 1
    %v2764 = vadd.f32 %v2762, %v2763
    %v2765 = vsel %vm530, %v2753, 0.0
    %v2766 = vrot.slane %v2765, 4
    %v2767 = vadd.f32 %v2765, %v2766
    %v2768 = vrot.slane %v2767, 2
    %v2769 = vadd.f32 %v2767, %v2768
    %v2770 = vrot.slane %v2769, 1
    %v2771 = vadd.f32 %v2769, %v2770
    %v2772 = vrcp.pop 2.0
    %v2773 = vmul.f32 %v2764, %v2772
    %v2774 = vmul.f32 %v2771, %v2772
    %vm2777 = vcmask 1041409
    %v2778 = vsel %vm2777, %v2774, %v2773
    %2780 = vst [vmem:[#allocation5] sm:$0x3] %v2778
    // Predicated region
    $region18: #{tpu_custom_call.1} parent=1 // pred_check
      _
    $region19: #{tpu_custom_call.1} parent=1 // pred_check_branch
      %2782 = sbr.rel (0) target = $region21
    $region20: #{tpu_custom_call.1} parent=1 // pred_region
      %s2784 = ssub.s32 32, 32
      %2785 = vsyncadd [#allocation4], %s2784
      %s2787 = sshll.u32 [#allocation5], 4
      %s2788 = int_to_ptr.vmem [resolvable:$true] %s2787
      %2790 = dma.vmem_to_hbm [thread:$0]  %s2788, 32, %s3, [#allocation4]
    $region21: #{tpu_custom_call.1} parent=1 // pred_fallthru
      _
    // Predicated region
    $region22: #{tpu_custom_call.1} parent=1 // pred_check
      _
    $region23: #{tpu_custom_call.1} parent=1 // pred_check_branch
      %2792 = sbr.rel (0) target = $region25
    $region24: #{tpu_custom_call.1} parent=1 // pred_region
      %2793 = dma.done [#allocation4], 32
    $region25: #{tpu_custom_call.1} parent=1 // pred_fallthru
      _
    %2794 = vsyncpa [#allocation3], 1
    %2795 = vsyncpa [#allocation4], 1

</llo_original>
